<compile_context>
chip_gen: v5e
topology: v5e:2x2
jax: 0.10.0
libtpu: 0.0.40
codegen_flags: <defaults>
</compile_context>

<pallas_src>
import math
import functools

import numpy as np
import jax
import jax.numpy as jnp
from jax.experimental import pallas as pl
from jax.experimental.pallas import tpu as pltpu

# ----------------------------- model config --------------------------------
EMBED_DIM = 32          # d_model
VOCAB = 40              # vocab_size
NUM_LAYERS = 2          # num_layer
MAX_SEQ = 16            # max_seq
HEADS = 4               # h
DH = EMBED_DIM // HEADS # per-head dim
PAD_IDX = VOCAB - 1
LN_EPS = 1e-6
BATCH = 2
SEQ = 8
OUT_PAD = 128           # lane-dense padded logits width (sliced to VOCAB outside)
SLAB_LANES = 128        # lane width of the packed parameter slab


# --------------------- packed-parameter slab layout -------------------------
def _build_layout():
    off = {}
    r = 0

    def take(name, rows):
        nonlocal r
        off[name] = r
        r += rows

    take("emb", VOCAB)                              # (VOCAB, D)   embedding * sqrt(D)
    for l in range(NUM_LAYERS):
        take(f"wqkv{l}", EMBED_DIM)                 # (D, 3D)      Q cols pre-scaled
        take(f"wo{l}", EMBED_DIM)                   # (D, D)
        take(f"fpw{l}", EMBED_DIM)                  # (D, D//2)
        take(f"fsw{l}", EMBED_DIM // 2)             # (D//2, D)
        take(f"esel{l}", SEQ * EMBED_DIM)           # (S*D, H*S)   pre-skewed rel. table
    take("fcw", EMBED_DIM)                          # (D, OUT_PAD)
    take("pos", BATCH * SEQ)                        # (B*S, D)     tiled positional enc.
    for l in range(NUM_LAYERS):
        for name in ("bqkv", "bo", "ln1g", "ln1b", "fpb", "fsb", "ln2g", "ln2b"):
            take(f"{name}{l}", 1)                   # one (1, n) vector per row
    take("fcb", 1)
    return off, ((r + 7) // 8) * 8


P_OFF, P_ROWS = _build_layout()                     # P_ROWS == 848


# ----------------------------- fused Pallas kernel --------------------------
def _layernorm(x, g, b):
    mu = jnp.mean(x, axis=-1, keepdims=True)
    var = jnp.mean((x - mu) ** 2, axis=-1, keepdims=True)
    return (x - mu) * jax.lax.rsqrt(var + LN_EPS) * g + b


def fused_forward_kernel(tok_ref, p_ref, out_ref, *, B, S):
    """Entire MusicTransformer forward; tok_ref in SMEM, p_ref/out_ref in VMEM."""
    D = EMBED_DIM
    BS = B * S
    HS = HEADS * S

    def ld(name, rows, cols):
        r0 = P_OFF[name]
        return p_ref[r0:r0 + rows, 0:cols]

    # ---- token-dependent prologue: SMEM scalars -> tiny VPU tensors --------
    toks = [tok_ref[i] for i in range(BS)]                        # int32 scalars
    row_ids = jax.lax.broadcasted_iota(jnp.int32, (BS, 1), 0)
    key_ids = jax.lax.broadcasted_iota(jnp.int32, (1, S), 1)
    vocab_ids = jax.lax.broadcasted_iota(jnp.int32, (BS, VOCAB), 1)

    tok_col = jnp.zeros((BS, 1), jnp.int32)
    for i in range(BS):
        tok_col = tok_col + jnp.where(row_ids == i, toks[i], 0)
    one_hot = (vocab_ids == tok_col).astype(jnp.float32)          # (BS, VOCAB)

    # key-padding bias, one (1, S) row per batch element, reused by all layers.
    # TODO(synk): assumed key-padding-only mask (no causal mask on the content
    #             term), matching utils.build_pad_mask as described in the spec.
    bias_rows = []
    for b in range(B):
        tok_row = jnp.zeros((1, S), jnp.int32)
        for j in range(S):
            tok_row = tok_row + jnp.where(key_ids == j, toks[b * S + j], 0)
        bias_rows.append(jnp.where(tok_row == PAD_IDX, -1e9, 0.0).astype(jnp.float32))

    # ---- embedding (exact gather as one-hot matmul) + positional encoding --
    emb = ld("emb", VOCAB, D)                 # already scaled by sqrt(D)
    pos = ld("pos", BS, D)                    # already tiled to (B*S, D)
    x = jnp.dot(one_hot, emb, preferred_element_type=jnp.float32) + pos      # (BS, D)

    # ---- static selection masks built from iotas (reused across layers) ----
    sel_c = jax.lax.broadcasted_iota(jnp.int32, (S, S * D), 1)
    sel_r = jax.lax.broadcasted_iota(jnp.int32, (S, S * D), 0)
    dsel = sel_c - sel_r * D
    selmask = ((dsel >= 0) & (dsel < D)).astype(jnp.float32)      # (S, S*D) block-diag selector

    lane_d = jax.lax.broadcasted_iota(jnp.int32, (1, D), 1)
    headmask = [((lane_d >= h * DH) & (lane_d < (h + 1) * DH)).astype(jnp.float32)
                for h in range(HEADS)]                            # (1, D) per head

    for l in range(NUM_LAYERS):
        wqkv = ld(f"wqkv{l}", D, 3 * D)
        wo = ld(f"wo{l}", D, D)
        fpw = ld(f"fpw{l}", D, D // 2)
        fsw = ld(f"fsw{l}", D // 2, D)
        esel = ld(f"esel{l}", S * D, HS)
        bqkv = ld(f"bqkv{l}", 1, 3 * D)
        bo = ld(f"bo{l}", 1, D)
        ln1g = ld(f"ln1g{l}", 1, D)
        ln1b = ld(f"ln1b{l}", 1, D)
        fpb = ld(f"fpb{l}", 1, D // 2)
        fsb = ld(f"fsb{l}", 1, D)
        ln2g = ld(f"ln2g{l}", 1, D)
        ln2b = ld(f"ln2b{l}", 1, D)

        # fused Q|K|V projection; Q columns already carry the 1/sqrt(dh) scale.
        qkv = jnp.dot(x, wqkv, preferred_element_type=jnp.float32) + bqkv    # (BS, 3D)

        attn_rows = []
        for b in range(B):
            # TODO(synk): move this statically-unrolled batch loop onto a
            #             "parallel" grid axis once B/S grow beyond toy sizes.
            r = b * S
            qb = qkv[r:r + S, 0:D]                    # (S, D) scaled queries
            kb = qkv[r:r + S, D:2 * D]
            vb = qkv[r:r + S, 2 * D:3 * D]

            # Relative term for ALL heads at once: causal mask + skew are folded
            # into esel[i*D + h*DH + d, h*S + j] = (j<=i) * E[S-1-i+j, d].
            qrep = jnp.concatenate([qb] * S, axis=1)                          # (S, S*D)
            srel = jnp.dot(qrep * selmask, esel,
                           preferred_element_type=jnp.float32)                # (S, H*S)

            attn_b = jnp.zeros((S, D), jnp.float32)
            for h in range(HEADS):
                qh = qb[:, h * DH:(h + 1) * DH]
                kh = kb[:, h * DH:(h + 1) * DH]
                scores = jax.lax.dot_general(
                    qh, kh, (((1,), (1,)), ((), ())),
                    preferred_element_type=jnp.float32)                       # (S, S)
                logits = scores + srel[:, h * S:(h + 1) * S] + bias_rows[b]
                m = jnp.max(logits, axis=-1, keepdims=True)
                e = jnp.exp(logits - m)
                probs = e / jnp.sum(e, axis=-1, keepdims=True)                # exact softmax
                # accumulate head h directly into its output columns (no concat)
                attn_b = attn_b + jnp.dot(probs, vb * headmask[h],
                                          preferred_element_type=jnp.float32)
            attn_rows.append(attn_b)
        attn = jnp.concatenate(attn_rows, axis=0)                              # (BS, D)

        attn = jnp.dot(attn, wo, preferred_element_type=jnp.float32) + bo
        x1 = _layernorm(attn + x, ln1g, ln1b)          # dropout = identity (eval)
        f = jnp.maximum(jnp.dot(x1, fpw, preferred_element_type=jnp.float32) + fpb, 0.0)
        f = jnp.dot(f, fsw, preferred_element_type=jnp.float32) + fsb
        x = _layernorm(x1 + f, ln2g, ln2b)

    # final fc, written as a lane-dense 128-wide slab (sliced to VOCAB outside)
    fcw = ld("fcw", D, OUT_PAD)
    fcb = ld("fcb", 1, OUT_PAD)
    out_ref[...] = (jnp.dot(x, fcw, preferred_element_type=jnp.float32)
                    + fcb).astype(out_ref.dtype)


# ------------------------- one-off parameter packing ------------------------
def dynamic_position_embedding(embedding_dim, max_seq):
    # Exact formula of DynamicPositionEmbedding in MusicTransformer-pytorch.
    pos = np.arange(max_seq)[:, None].astype(np.float64)
    i = np.arange(embedding_dim)[None, :].astype(np.float64)
    angle = (pos * np.exp(-np.log(10000.0) * i / embedding_dim)
             * np.exp(np.log(10000.0) / embedding_dim * (i % 2))
             + 0.5 * np.pi * (i % 2))
    return np.asarray(np.sin(angle), dtype=np.float32)            # (max_seq, d)


def _build_esel(E_param, S):
    """Pre-skewed, causally-masked relative table for all heads.

    esel[i*D + h*DH + d, h*S + j] = (j <= i) * E[max_seq - S + (S-1-i+j), d]
    so that (block_diag(q_i) @ esel)[i, h*S+j] equals the reference Srel.
    """
    E_used = np.asarray(E_param, np.float32)[MAX_SEQ - S:, :]      # (S, DH)
    i = np.arange(S)[:, None]
    j = np.arange(S)[None, :]
    idx = np.clip(S - 1 - i + j, 0, S - 1)
    keep = (j <= i).astype(np.float32)
    tbl = E_used[idx] * keep[:, :, None]                           # (S, S, DH) [i, j, d]
    out = np.zeros((S * EMBED_DIM, HEADS * S), np.float32)
    for h in range(HEADS):
        for ii in range(S):
            out[ii * EMBED_DIM + h * DH: ii * EMBED_DIM + (h + 1) * DH,
                h * S:(h + 1) * S] = tbl[ii].T
    return out


def pack_params(params, pos_emb):
    """Pack every weight into a single lane-dense (P_ROWS, 128) f32 slab.

    Runs ONCE at load time (host numpy), so the jitted per-call path contains
    no weight preprocessing.  The 1/sqrt(dh) attention scale is folded into the
    Q columns of Wqkv / bqkv here.
    """
    slab = np.zeros((P_ROWS, SLAB_LANES), np.float32)

    def put(name, arr):
        arr = np.asarray(arr, np.float32)
        if arr.ndim == 1:
            arr = arr[None, :]
        r0 = P_OFF[name]
        slab[r0:r0 + arr.shape[0], :arr.shape[1]] = arr

    put("emb", np.asarray(params["embedding"]) * math.sqrt(EMBED_DIM))
    put("pos", np.tile(np.asarray(pos_emb)[:SEQ], (BATCH, 1)))

    scale = 1.0 / math.sqrt(DH)
    for l, layer in enumerate(params["layers"]):
        wqkv = np.concatenate([np.asarray(layer["wq"]) * scale,
                               np.asarray(layer["wk"]),
                               np.asarray(layer["wv"])], axis=1)
        bqkv = np.concatenate([np.asarray(layer["bq"]) * scale,
                               np.asarray(layer["bk"]),
                               np.asarray(layer["bv"])])
        put(f"wqkv{l}", wqkv)
        put(f"bqkv{l}", bqkv)
        put(f"wo{l}", layer["wo"])
        put(f"bo{l}", layer["bo"])
        put(f"ln1g{l}", layer["ln1_g"])
        put(f"ln1b{l}", layer["ln1_b"])
        put(f"fpw{l}", layer["ffn_pre_w"])
        put(f"fpb{l}", layer["ffn_pre_b"])
        put(f"fsw{l}", layer["ffn_suf_w"])
        put(f"fsb{l}", layer["ffn_suf_b"])
        put(f"ln2g{l}", layer["ln2_g"])
        put(f"ln2b{l}", layer["ln2_b"])
        put(f"esel{l}", _build_esel(layer["E"], SEQ))

    fcw = np.zeros((EMBED_DIM, OUT_PAD), np.float32)
    fcw[:, :VOCAB] = np.asarray(params["fc_w"])
    fcb = np.zeros((OUT_PAD,), np.float32)
    fcb[:VOCAB] = np.asarray(params["fc_b"])
    put("fcw", fcw)
    put("fcb", fcb)
    return jnp.asarray(slab)


def init_params(key):
    def dense(k, fan_in, fan_out):
        kw, kb = jax.random.split(k)
        w = 0.02 * jax.random.normal(kw, (fan_in, fan_out), jnp.float32)
        b = 0.01 * jax.random.normal(kb, (fan_out,), jnp.float32)
        return w, b

    keys = jax.random.split(key, 2 + NUM_LAYERS)
    params = {
        "embedding": 0.02 * jax.random.normal(keys[0], (VOCAB, EMBED_DIM), jnp.float32),
    }
    params["fc_w"], params["fc_b"] = dense(keys[1], EMBED_DIM, VOCAB)
    layers = []
    for li in range(NUM_LAYERS):
        lk = jax.random.split(keys[2 + li], 8)
        layer = {}
        layer["wq"], layer["bq"] = dense(lk[0], EMBED_DIM, EMBED_DIM)
        layer["wk"], layer["bk"] = dense(lk[1], EMBED_DIM, EMBED_DIM)
        layer["wv"], layer["bv"] = dense(lk[2], EMBED_DIM, EMBED_DIM)
        layer["wo"], layer["bo"] = dense(lk[3], EMBED_DIM, EMBED_DIM)
        layer["E"] = 0.02 * jax.random.normal(lk[4], (MAX_SEQ, DH), jnp.float32)
        layer["ffn_pre_w"], layer["ffn_pre_b"] = dense(lk[5], EMBED_DIM, EMBED_DIM // 2)
        layer["ffn_suf_w"], layer["ffn_suf_b"] = dense(lk[6], EMBED_DIM // 2, EMBED_DIM)
        layer["ln1_g"] = jnp.ones((EMBED_DIM,), jnp.float32)
        layer["ln1_b"] = jnp.zeros((EMBED_DIM,), jnp.float32)
        layer["ln2_g"] = jnp.ones((EMBED_DIM,), jnp.float32)
        layer["ln2_b"] = jnp.zeros((EMBED_DIM,), jnp.float32)
        layers.append(layer)
    params["layers"] = layers
    return params


# ------------------------------ forward wrapper ------------------------------
def music_transformer_forward(param_slab, tokens):
    B, S = tokens.shape
    assert (B, S) == (BATCH, SEQ), "parameter slab was packed for (BATCH, SEQ)"
    tok_flat = jnp.asarray(tokens, jnp.int32).reshape(B * S)

    grid_spec = pltpu.PrefetchScalarGridSpec(
        num_scalar_prefetch=1,                       # token ids -> SMEM
        grid=(1,),
        in_specs=[pl.BlockSpec((P_ROWS, SLAB_LANES), lambda i, tok: (0, 0))],
        out_specs=pl.BlockSpec((B * S, OUT_PAD), lambda i, tok: (0, 0)),
    )
    out = pl.pallas_call(
        functools.partial(fused_forward_kernel, B=B, S=S),
        grid_spec=grid_spec,
        out_shape=jax.ShapeDtypeStruct((B * S, OUT_PAD), jnp.float32),
        compiler_params=pltpu.CompilerParams(dimension_semantics=("arbitrary",)),
        cost_estimate=pl.CostEstimate(
            flops=1_500_000,
            transcendentals=1_200,
            bytes_accessed=int(param_slab.size * 4 + B * S * (OUT_PAD + 1) * 4)),
    )(tok_flat, param_slab)

    return out[:, :VOCAB].reshape(B, S, VOCAB)


# --------------------------------- main -------------------------------------
if __name__ == "__main__":
    key = jax.random.PRNGKey(0)
    kp, kx = jax.random.split(key)

    params = init_params(kp)
    pos_emb = dynamic_position_embedding(EMBED_DIM, MAX_SEQ)
    param_slab = pack_params(params, pos_emb)        # one-off, outside the per-call path

    tokens = jax.random.randint(kx, (BATCH, SEQ), 0, VOCAB - 1, dtype=jnp.int32)
    tokens = tokens.at[1, -1].set(PAD_IDX)           # exercise the pad mask

    fwd = jax.jit(music_transformer_forward)
    out = jax.block_until_ready(fwd(param_slab, tokens))

    assert out.shape == (BATCH, SEQ, VOCAB), out.shape
    assert bool(jnp.all(jnp.isfinite(out)))
    print("KERNEL_OK")
</pallas_src>

<mosaic_0001>
module attributes {stable_mosaic.version = 11 : i64} {
  func.func @fused_forward_kernel(%arg0: i32, %arg1: memref<16xi32, #tpu.memory_space<smem>>, %arg2: memref<848x128xf32, #tpu.memory_space<vmem>>, %arg3: memref<16x128xf32, #tpu.memory_space<vmem>>) attributes {dimension_semantics = [#tpu.dimension_semantics<arbitrary>], iteration_bounds = array<i64: 1>, scalar_prefetch = 1 : i64, scratch_operands = 0 : i64, tpu.core_type = #tpu.core_type<tc>, window_params = [{pipeline_mode = #tpu.pipeline_mode<synchronous>, transform_indices = @transform_0, window_bounds = array<i64: 848, 128>}, {pipeline_mode = #tpu.pipeline_mode<synchronous>, transform_indices = @transform_1, window_bounds = array<i64: 16, 128>}]} {
    %c0 = arith.constant 0 : index
    %0 = memref.load %arg1[%c0] : memref<16xi32, #tpu.memory_space<smem>>
    %c1 = arith.constant 1 : index
    %1 = memref.load %arg1[%c1] : memref<16xi32, #tpu.memory_space<smem>>
    %c2 = arith.constant 2 : index
    %2 = memref.load %arg1[%c2] : memref<16xi32, #tpu.memory_space<smem>>
    %c3 = arith.constant 3 : index
    %3 = memref.load %arg1[%c3] : memref<16xi32, #tpu.memory_space<smem>>
    %c4 = arith.constant 4 : index
    %4 = memref.load %arg1[%c4] : memref<16xi32, #tpu.memory_space<smem>>
    %c5 = arith.constant 5 : index
    %5 = memref.load %arg1[%c5] : memref<16xi32, #tpu.memory_space<smem>>
    %c6 = arith.constant 6 : index
    %6 = memref.load %arg1[%c6] : memref<16xi32, #tpu.memory_space<smem>>
    %c7 = arith.constant 7 : index
    %7 = memref.load %arg1[%c7] : memref<16xi32, #tpu.memory_space<smem>>
    %c8 = arith.constant 8 : index
    %8 = memref.load %arg1[%c8] : memref<16xi32, #tpu.memory_space<smem>>
    %c9 = arith.constant 9 : index
    %9 = memref.load %arg1[%c9] : memref<16xi32, #tpu.memory_space<smem>>
    %c10 = arith.constant 10 : index
    %10 = memref.load %arg1[%c10] : memref<16xi32, #tpu.memory_space<smem>>
    %c11 = arith.constant 11 : index
    %11 = memref.load %arg1[%c11] : memref<16xi32, #tpu.memory_space<smem>>
    %c12 = arith.constant 12 : index
    %12 = memref.load %arg1[%c12] : memref<16xi32, #tpu.memory_space<smem>>
    %c13 = arith.constant 13 : index
    %13 = memref.load %arg1[%c13] : memref<16xi32, #tpu.memory_space<smem>>
    %c14 = arith.constant 14 : index
    %14 = memref.load %arg1[%c14] : memref<16xi32, #tpu.memory_space<smem>>
    %c15 = arith.constant 15 : index
    %15 = memref.load %arg1[%c15] : memref<16xi32, #tpu.memory_space<smem>>
    %16 = tpu.iota {dimensions = array<i32: 0>} : vector<16x1xi32>
    %17 = tpu.iota {dimensions = array<i32: 1>} : vector<1x8xi32>
    %18 = tpu.iota {dimensions = array<i32: 1>} : vector<16x40xi32>
    %c0_i32 = arith.constant 0 : i32
    %19 = vector.broadcast %c0_i32 : i32 to vector<16x1xi32>
    %c0_i32_0 = arith.constant 0 : i32
    %20 = vector.broadcast %c0_i32_0 : i32 to vector<16x1xi32>
    %21 = arith.cmpi eq, %16, %20 : vector<16x1xi32>
    %c0_i32_1 = arith.constant 0 : i32
    %22 = vector.broadcast %0 : i32 to vector<16x1xi32>
    %23 = vector.broadcast %c0_i32_1 : i32 to vector<16x1xi32>
    %24 = arith.select %21, %22, %23 : vector<16x1xi1>, vector<16x1xi32>
    %25 = arith.addi %19, %24 : vector<16x1xi32>
    %c1_i32 = arith.constant 1 : i32
    %26 = vector.broadcast %c1_i32 : i32 to vector<16x1xi32>
    %27 = arith.cmpi eq, %16, %26 : vector<16x1xi32>
    %c0_i32_2 = arith.constant 0 : i32
    %28 = vector.broadcast %1 : i32 to vector<16x1xi32>
    %29 = vector.broadcast %c0_i32_2 : i32 to vector<16x1xi32>
    %30 = arith.select %27, %28, %29 : vector<16x1xi1>, vector<16x1xi32>
    %31 = arith.addi %25, %30 : vector<16x1xi32>
    %c2_i32 = arith.constant 2 : i32
    %32 = vector.broadcast %c2_i32 : i32 to vector<16x1xi32>
    %33 = arith.cmpi eq, %16, %32 : vector<16x1xi32>
    %c0_i32_3 = arith.constant 0 : i32
    %34 = vector.broadcast %2 : i32 to vector<16x1xi32>
    %35 = vector.broadcast %c0_i32_3 : i32 to vector<16x1xi32>
    %36 = arith.select %33, %34, %35 : vector<16x1xi1>, vector<16x1xi32>
    %37 = arith.addi %31, %36 : vector<16x1xi32>
    %c3_i32 = arith.constant 3 : i32
    %38 = vector.broadcast %c3_i32 : i32 to vector<16x1xi32>
    %39 = arith.cmpi eq, %16, %38 : vector<16x1xi32>
    %c0_i32_4 = arith.constant 0 : i32
    %40 = vector.broadcast %3 : i32 to vector<16x1xi32>
    %41 = vector.broadcast %c0_i32_4 : i32 to vector<16x1xi32>
    %42 = arith.select %39, %40, %41 : vector<16x1xi1>, vector<16x1xi32>
    %43 = arith.addi %37, %42 : vector<16x1xi32>
    %c4_i32 = arith.constant 4 : i32
    %44 = vector.broadcast %c4_i32 : i32 to vector<16x1xi32>
    %45 = arith.cmpi eq, %16, %44 : vector<16x1xi32>
    %c0_i32_5 = arith.constant 0 : i32
    %46 = vector.broadcast %4 : i32 to vector<16x1xi32>
    %47 = vector.broadcast %c0_i32_5 : i32 to vector<16x1xi32>
    %48 = arith.select %45, %46, %47 : vector<16x1xi1>, vector<16x1xi32>
    %49 = arith.addi %43, %48 : vector<16x1xi32>
    %c5_i32 = arith.constant 5 : i32
    %50 = vector.broadcast %c5_i32 : i32 to vector<16x1xi32>
    %51 = arith.cmpi eq, %16, %50 : vector<16x1xi32>
    %c0_i32_6 = arith.constant 0 : i32
    %52 = vector.broadcast %5 : i32 to vector<16x1xi32>
    %53 = vector.broadcast %c0_i32_6 : i32 to vector<16x1xi32>
    %54 = arith.select %51, %52, %53 : vector<16x1xi1>, vector<16x1xi32>
    %55 = arith.addi %49, %54 : vector<16x1xi32>
    %c6_i32 = arith.constant 6 : i32
    %56 = vector.broadcast %c6_i32 : i32 to vector<16x1xi32>
    %57 = arith.cmpi eq, %16, %56 : vector<16x1xi32>
    %c0_i32_7 = arith.constant 0 : i32
    %58 = vector.broadcast %6 : i32 to vector<16x1xi32>
    %59 = vector.broadcast %c0_i32_7 : i32 to vector<16x1xi32>
    %60 = arith.select %57, %58, %59 : vector<16x1xi1>, vector<16x1xi32>
    %61 = arith.addi %55, %60 : vector<16x1xi32>
    %c7_i32 = arith.constant 7 : i32
    %62 = vector.broadcast %c7_i32 : i32 to vector<16x1xi32>
    %63 = arith.cmpi eq, %16, %62 : vector<16x1xi32>
    %c0_i32_8 = arith.constant 0 : i32
    %64 = vector.broadcast %7 : i32 to vector<16x1xi32>
    %65 = vector.broadcast %c0_i32_8 : i32 to vector<16x1xi32>
    %66 = arith.select %63, %64, %65 : vector<16x1xi1>, vector<16x1xi32>
    %67 = arith.addi %61, %66 : vector<16x1xi32>
    %c8_i32 = arith.constant 8 : i32
    %68 = vector.broadcast %c8_i32 : i32 to vector<16x1xi32>
    %69 = arith.cmpi eq, %16, %68 : vector<16x1xi32>
    %c0_i32_9 = arith.constant 0 : i32
    %70 = vector.broadcast %8 : i32 to vector<16x1xi32>
    %71 = vector.broadcast %c0_i32_9 : i32 to vector<16x1xi32>
    %72 = arith.select %69, %70, %71 : vector<16x1xi1>, vector<16x1xi32>
    %73 = arith.addi %67, %72 : vector<16x1xi32>
    %c9_i32 = arith.constant 9 : i32
    %74 = vector.broadcast %c9_i32 : i32 to vector<16x1xi32>
    %75 = arith.cmpi eq, %16, %74 : vector<16x1xi32>
    %c0_i32_10 = arith.constant 0 : i32
    %76 = vector.broadcast %9 : i32 to vector<16x1xi32>
    %77 = vector.broadcast %c0_i32_10 : i32 to vector<16x1xi32>
    %78 = arith.select %75, %76, %77 : vector<16x1xi1>, vector<16x1xi32>
    %79 = arith.addi %73, %78 : vector<16x1xi32>
    %c10_i32 = arith.constant 10 : i32
    %80 = vector.broadcast %c10_i32 : i32 to vector<16x1xi32>
    %81 = arith.cmpi eq, %16, %80 : vector<16x1xi32>
    %c0_i32_11 = arith.constant 0 : i32
    %82 = vector.broadcast %10 : i32 to vector<16x1xi32>
    %83 = vector.broadcast %c0_i32_11 : i32 to vector<16x1xi32>
    %84 = arith.select %81, %82, %83 : vector<16x1xi1>, vector<16x1xi32>
    %85 = arith.addi %79, %84 : vector<16x1xi32>
    %c11_i32 = arith.constant 11 : i32
    %86 = vector.broadcast %c11_i32 : i32 to vector<16x1xi32>
    %87 = arith.cmpi eq, %16, %86 : vector<16x1xi32>
    %c0_i32_12 = arith.constant 0 : i32
    %88 = vector.broadcast %11 : i32 to vector<16x1xi32>
    %89 = vector.broadcast %c0_i32_12 : i32 to vector<16x1xi32>
    %90 = arith.select %87, %88, %89 : vector<16x1xi1>, vector<16x1xi32>
    %91 = arith.addi %85, %90 : vector<16x1xi32>
    %c12_i32 = arith.constant 12 : i32
    %92 = vector.broadcast %c12_i32 : i32 to vector<16x1xi32>
    %93 = arith.cmpi eq, %16, %92 : vector<16x1xi32>
    %c0_i32_13 = arith.constant 0 : i32
    %94 = vector.broadcast %12 : i32 to vector<16x1xi32>
    %95 = vector.broadcast %c0_i32_13 : i32 to vector<16x1xi32>
    %96 = arith.select %93, %94, %95 : vector<16x1xi1>, vector<16x1xi32>
    %97 = arith.addi %91, %96 : vector<16x1xi32>
    %c13_i32 = arith.constant 13 : i32
    %98 = vector.broadcast %c13_i32 : i32 to vector<16x1xi32>
    %99 = arith.cmpi eq, %16, %98 : vector<16x1xi32>
    %c0_i32_14 = arith.constant 0 : i32
    %100 = vector.broadcast %13 : i32 to vector<16x1xi32>
    %101 = vector.broadcast %c0_i32_14 : i32 to vector<16x1xi32>
    %102 = arith.select %99, %100, %101 : vector<16x1xi1>, vector<16x1xi32>
    %103 = arith.addi %97, %102 : vector<16x1xi32>
    %c14_i32 = arith.constant 14 : i32
    %104 = vector.broadcast %c14_i32 : i32 to vector<16x1xi32>
    %105 = arith.cmpi eq, %16, %104 : vector<16x1xi32>
    %c0_i32_15 = arith.constant 0 : i32
    %106 = vector.broadcast %14 : i32 to vector<16x1xi32>
    %107 = vector.broadcast %c0_i32_15 : i32 to vector<16x1xi32>
    %108 = arith.select %105, %106, %107 : vector<16x1xi1>, vector<16x1xi32>
    %109 = arith.addi %103, %108 : vector<16x1xi32>
    %c15_i32 = arith.constant 15 : i32
    %110 = vector.broadcast %c15_i32 : i32 to vector<16x1xi32>
    %111 = arith.cmpi eq, %16, %110 : vector<16x1xi32>
    %c0_i32_16 = arith.constant 0 : i32
    %112 = vector.broadcast %15 : i32 to vector<16x1xi32>
    %113 = vector.broadcast %c0_i32_16 : i32 to vector<16x1xi32>
    %114 = arith.select %111, %112, %113 : vector<16x1xi1>, vector<16x1xi32>
    %115 = arith.addi %109, %114 : vector<16x1xi32>
    %116 = vector.broadcast %115 : vector<16x1xi32> to vector<16x40xi32>
    %117 = arith.cmpi eq, %18, %116 : vector<16x40xi32>
    %118 = arith.extui %117 : vector<16x40xi1> to vector<16x40xi32>
    %119 = arith.sitofp %118 : vector<16x40xi32> to vector<16x40xf32>
    %c0_i32_17 = arith.constant 0 : i32
    %120 = vector.broadcast %c0_i32_17 : i32 to vector<1x8xi32>
    %c0_i32_18 = arith.constant 0 : i32
    %121 = vector.broadcast %c0_i32_18 : i32 to vector<1x8xi32>
    %122 = arith.cmpi eq, %17, %121 : vector<1x8xi32>
    %c0_i32_19 = arith.constant 0 : i32
    %123 = vector.broadcast %0 : i32 to vector<1x8xi32>
    %124 = vector.broadcast %c0_i32_19 : i32 to vector<1x8xi32>
    %125 = arith.select %122, %123, %124 : vector<1x8xi1>, vector<1x8xi32>
    %126 = arith.addi %120, %125 : vector<1x8xi32>
    %c1_i32_20 = arith.constant 1 : i32
    %127 = vector.broadcast %c1_i32_20 : i32 to vector<1x8xi32>
    %128 = arith.cmpi eq, %17, %127 : vector<1x8xi32>
    %c0_i32_21 = arith.constant 0 : i32
    %129 = vector.broadcast %1 : i32 to vector<1x8xi32>
    %130 = vector.broadcast %c0_i32_21 : i32 to vector<1x8xi32>
    %131 = arith.select %128, %129, %130 : vector<1x8xi1>, vector<1x8xi32>
    %132 = arith.addi %126, %131 : vector<1x8xi32>
    %c2_i32_22 = arith.constant 2 : i32
    %133 = vector.broadcast %c2_i32_22 : i32 to vector<1x8xi32>
    %134 = arith.cmpi eq, %17, %133 : vector<1x8xi32>
    %c0_i32_23 = arith.constant 0 : i32
    %135 = vector.broadcast %2 : i32 to vector<1x8xi32>
    %136 = vector.broadcast %c0_i32_23 : i32 to vector<1x8xi32>
    %137 = arith.select %134, %135, %136 : vector<1x8xi1>, vector<1x8xi32>
    %138 = arith.addi %132, %137 : vector<1x8xi32>
    %c3_i32_24 = arith.constant 3 : i32
    %139 = vector.broadcast %c3_i32_24 : i32 to vector<1x8xi32>
    %140 = arith.cmpi eq, %17, %139 : vector<1x8xi32>
    %c0_i32_25 = arith.constant 0 : i32
    %141 = vector.broadcast %3 : i32 to vector<1x8xi32>
    %142 = vector.broadcast %c0_i32_25 : i32 to vector<1x8xi32>
    %143 = arith.select %140, %141, %142 : vector<1x8xi1>, vector<1x8xi32>
    %144 = arith.addi %138, %143 : vector<1x8xi32>
    %c4_i32_26 = arith.constant 4 : i32
    %145 = vector.broadcast %c4_i32_26 : i32 to vector<1x8xi32>
    %146 = arith.cmpi eq, %17, %145 : vector<1x8xi32>
    %c0_i32_27 = arith.constant 0 : i32
    %147 = vector.broadcast %4 : i32 to vector<1x8xi32>
    %148 = vector.broadcast %c0_i32_27 : i32 to vector<1x8xi32>
    %149 = arith.select %146, %147, %148 : vector<1x8xi1>, vector<1x8xi32>
    %150 = arith.addi %144, %149 : vector<1x8xi32>
    %c5_i32_28 = arith.constant 5 : i32
    %151 = vector.broadcast %c5_i32_28 : i32 to vector<1x8xi32>
    %152 = arith.cmpi eq, %17, %151 : vector<1x8xi32>
    %c0_i32_29 = arith.constant 0 : i32
    %153 = vector.broadcast %5 : i32 to vector<1x8xi32>
    %154 = vector.broadcast %c0_i32_29 : i32 to vector<1x8xi32>
    %155 = arith.select %152, %153, %154 : vector<1x8xi1>, vector<1x8xi32>
    %156 = arith.addi %150, %155 : vector<1x8xi32>
    %c6_i32_30 = arith.constant 6 : i32
    %157 = vector.broadcast %c6_i32_30 : i32 to vector<1x8xi32>
    %158 = arith.cmpi eq, %17, %157 : vector<1x8xi32>
    %c0_i32_31 = arith.constant 0 : i32
    %159 = vector.broadcast %6 : i32 to vector<1x8xi32>
    %160 = vector.broadcast %c0_i32_31 : i32 to vector<1x8xi32>
    %161 = arith.select %158, %159, %160 : vector<1x8xi1>, vector<1x8xi32>
    %162 = arith.addi %156, %161 : vector<1x8xi32>
    %c7_i32_32 = arith.constant 7 : i32
    %163 = vector.broadcast %c7_i32_32 : i32 to vector<1x8xi32>
    %164 = arith.cmpi eq, %17, %163 : vector<1x8xi32>
    %c0_i32_33 = arith.constant 0 : i32
    %165 = vector.broadcast %7 : i32 to vector<1x8xi32>
    %166 = vector.broadcast %c0_i32_33 : i32 to vector<1x8xi32>
    %167 = arith.select %164, %165, %166 : vector<1x8xi1>, vector<1x8xi32>
    %168 = arith.addi %162, %167 : vector<1x8xi32>
    %c39_i32 = arith.constant 39 : i32
    %169 = vector.broadcast %c39_i32 : i32 to vector<1x8xi32>
    %170 = arith.cmpi eq, %168, %169 : vector<1x8xi32>
    %cst = arith.constant -1.000000e+09 : f32
    %cst_34 = arith.constant 0.000000e+00 : f32
    %171 = vector.broadcast %cst : f32 to vector<1x8xf32>
    %172 = vector.broadcast %cst_34 : f32 to vector<1x8xf32>
    %173 = arith.select %170, %171, %172 : vector<1x8xi1>, vector<1x8xf32>
    %c0_i32_35 = arith.constant 0 : i32
    %174 = vector.broadcast %c0_i32_35 : i32 to vector<1x8xi32>
    %c0_i32_36 = arith.constant 0 : i32
    %175 = vector.broadcast %c0_i32_36 : i32 to vector<1x8xi32>
    %176 = arith.cmpi eq, %17, %175 : vector<1x8xi32>
    %c0_i32_37 = arith.constant 0 : i32
    %177 = vector.broadcast %8 : i32 to vector<1x8xi32>
    %178 = vector.broadcast %c0_i32_37 : i32 to vector<1x8xi32>
    %179 = arith.select %176, %177, %178 : vector<1x8xi1>, vector<1x8xi32>
    %180 = arith.addi %174, %179 : vector<1x8xi32>
    %c1_i32_38 = arith.constant 1 : i32
    %181 = vector.broadcast %c1_i32_38 : i32 to vector<1x8xi32>
    %182 = arith.cmpi eq, %17, %181 : vector<1x8xi32>
    %c0_i32_39 = arith.constant 0 : i32
    %183 = vector.broadcast %9 : i32 to vector<1x8xi32>
    %184 = vector.broadcast %c0_i32_39 : i32 to vector<1x8xi32>
    %185 = arith.select %182, %183, %184 : vector<1x8xi1>, vector<1x8xi32>
    %186 = arith.addi %180, %185 : vector<1x8xi32>
    %c2_i32_40 = arith.constant 2 : i32
    %187 = vector.broadcast %c2_i32_40 : i32 to vector<1x8xi32>
    %188 = arith.cmpi eq, %17, %187 : vector<1x8xi32>
    %c0_i32_41 = arith.constant 0 : i32
    %189 = vector.broadcast %10 : i32 to vector<1x8xi32>
    %190 = vector.broadcast %c0_i32_41 : i32 to vector<1x8xi32>
    %191 = arith.select %188, %189, %190 : vector<1x8xi1>, vector<1x8xi32>
    %192 = arith.addi %186, %191 : vector<1x8xi32>
    %c3_i32_42 = arith.constant 3 : i32
    %193 = vector.broadcast %c3_i32_42 : i32 to vector<1x8xi32>
    %194 = arith.cmpi eq, %17, %193 : vector<1x8xi32>
    %c0_i32_43 = arith.constant 0 : i32
    %195 = vector.broadcast %11 : i32 to vector<1x8xi32>
    %196 = vector.broadcast %c0_i32_43 : i32 to vector<1x8xi32>
    %197 = arith.select %194, %195, %196 : vector<1x8xi1>, vector<1x8xi32>
    %198 = arith.addi %192, %197 : vector<1x8xi32>
    %c4_i32_44 = arith.constant 4 : i32
    %199 = vector.broadcast %c4_i32_44 : i32 to vector<1x8xi32>
    %200 = arith.cmpi eq, %17, %199 : vector<1x8xi32>
    %c0_i32_45 = arith.constant 0 : i32
    %201 = vector.broadcast %12 : i32 to vector<1x8xi32>
    %202 = vector.broadcast %c0_i32_45 : i32 to vector<1x8xi32>
    %203 = arith.select %200, %201, %202 : vector<1x8xi1>, vector<1x8xi32>
    %204 = arith.addi %198, %203 : vector<1x8xi32>
    %c5_i32_46 = arith.constant 5 : i32
    %205 = vector.broadcast %c5_i32_46 : i32 to vector<1x8xi32>
    %206 = arith.cmpi eq, %17, %205 : vector<1x8xi32>
    %c0_i32_47 = arith.constant 0 : i32
    %207 = vector.broadcast %13 : i32 to vector<1x8xi32>
    %208 = vector.broadcast %c0_i32_47 : i32 to vector<1x8xi32>
    %209 = arith.select %206, %207, %208 : vector<1x8xi1>, vector<1x8xi32>
    %210 = arith.addi %204, %209 : vector<1x8xi32>
    %c6_i32_48 = arith.constant 6 : i32
    %211 = vector.broadcast %c6_i32_48 : i32 to vector<1x8xi32>
    %212 = arith.cmpi eq, %17, %211 : vector<1x8xi32>
    %c0_i32_49 = arith.constant 0 : i32
    %213 = vector.broadcast %14 : i32 to vector<1x8xi32>
    %214 = vector.broadcast %c0_i32_49 : i32 to vector<1x8xi32>
    %215 = arith.select %212, %213, %214 : vector<1x8xi1>, vector<1x8xi32>
    %216 = arith.addi %210, %215 : vector<1x8xi32>
    %c7_i32_50 = arith.constant 7 : i32
    %217 = vector.broadcast %c7_i32_50 : i32 to vector<1x8xi32>
    %218 = arith.cmpi eq, %17, %217 : vector<1x8xi32>
    %c0_i32_51 = arith.constant 0 : i32
    %219 = vector.broadcast %15 : i32 to vector<1x8xi32>
    %220 = vector.broadcast %c0_i32_51 : i32 to vector<1x8xi32>
    %221 = arith.select %218, %219, %220 : vector<1x8xi1>, vector<1x8xi32>
    %222 = arith.addi %216, %221 : vector<1x8xi32>
    %c39_i32_52 = arith.constant 39 : i32
    %223 = vector.broadcast %c39_i32_52 : i32 to vector<1x8xi32>
    %224 = arith.cmpi eq, %222, %223 : vector<1x8xi32>
    %cst_53 = arith.constant -1.000000e+09 : f32
    %cst_54 = arith.constant 0.000000e+00 : f32
    %225 = vector.broadcast %cst_53 : f32 to vector<1x8xf32>
    %226 = vector.broadcast %cst_54 : f32 to vector<1x8xf32>
    %227 = arith.select %224, %225, %226 : vector<1x8xi1>, vector<1x8xf32>
    %c0_55 = arith.constant 0 : index
    %c0_56 = arith.constant 0 : index
    %228 = vector.load %arg2[%c0_55, %c0_56] : memref<848x128xf32, #tpu.memory_space<vmem>>, vector<40x32xf32>
    %c808 = arith.constant 808 : index
    %c0_57 = arith.constant 0 : index
    %229 = vector.load %arg2[%c808, %c0_57] : memref<848x128xf32, #tpu.memory_space<vmem>>, vector<16x32xf32>
    %cst_58 = arith.constant dense<0.000000e+00> : vector<16x32xf32>
    %230 = tpu.matmul %119, %228, %cst_58 {dimension_numbers = #tpu.dot_dimension_numbers<[1], [0], [0], [1], [0, 0, 1, 1], [], []>} : vector<16x40xf32>, vector<40x32xf32>, vector<16x32xf32> -> vector<16x32xf32>
    %231 = arith.addf %230, %229 : vector<16x32xf32>
    %232 = tpu.iota {dimensions = array<i32: 1>} : vector<8x256xi32>
    %233 = tpu.iota {dimensions = array<i32: 0>} : vector<8x256xi32>
    %c32_i32 = arith.constant 32 : i32
    %234 = vector.broadcast %c32_i32 : i32 to vector<8x256xi32>
    %235 = arith.muli %233, %234 : vector<8x256xi32>
    %236 = arith.subi %232, %235 : vector<8x256xi32>
    %c0_i32_59 = arith.constant 0 : i32
    %237 = vector.broadcast %c0_i32_59 : i32 to vector<8x256xi32>
    %238 = arith.cmpi sge, %236, %237 : vector<8x256xi32>
    %c32_i32_60 = arith.constant 32 : i32
    %239 = vector.broadcast %c32_i32_60 : i32 to vector<8x256xi32>
    %240 = arith.cmpi slt, %236, %239 : vector<8x256xi32>
    %241 = arith.andi %238, %240 : vector<8x256xi1>
    %242 = arith.extui %241 : vector<8x256xi1> to vector<8x256xi32>
    %243 = arith.sitofp %242 : vector<8x256xi32> to vector<8x256xf32>
    %244 = tpu.iota {dimensions = array<i32: 1>} : vector<1x32xi32>
    %c0_i32_61 = arith.constant 0 : i32
    %245 = vector.broadcast %c0_i32_61 : i32 to vector<1x32xi32>
    %246 = arith.cmpi sge, %244, %245 : vector<1x32xi32>
    %c8_i32_62 = arith.constant 8 : i32
    %247 = vector.broadcast %c8_i32_62 : i32 to vector<1x32xi32>
    %248 = arith.cmpi slt, %244, %247 : vector<1x32xi32>
    %249 = arith.andi %246, %248 : vector<1x32xi1>
    %250 = arith.extui %249 : vector<1x32xi1> to vector<1x32xi32>
    %251 = arith.sitofp %250 : vector<1x32xi32> to vector<1x32xf32>
    %c8_i32_63 = arith.constant 8 : i32
    %252 = vector.broadcast %c8_i32_63 : i32 to vector<1x32xi32>
    %253 = arith.cmpi sge, %244, %252 : vector<1x32xi32>
    %c16_i32 = arith.constant 16 : i32
    %254 = vector.broadcast %c16_i32 : i32 to vector<1x32xi32>
    %255 = arith.cmpi slt, %244, %254 : vector<1x32xi32>
    %256 = arith.andi %253, %255 : vector<1x32xi1>
    %257 = arith.extui %256 : vector<1x32xi1> to vector<1x32xi32>
    %258 = arith.sitofp %257 : vector<1x32xi32> to vector<1x32xf32>
    %c16_i32_64 = arith.constant 16 : i32
    %259 = vector.broadcast %c16_i32_64 : i32 to vector<1x32xi32>
    %260 = arith.cmpi sge, %244, %259 : vector<1x32xi32>
    %c24_i32 = arith.constant 24 : i32
    %261 = vector.broadcast %c24_i32 : i32 to vector<1x32xi32>
    %262 = arith.cmpi slt, %244, %261 : vector<1x32xi32>
    %263 = arith.andi %260, %262 : vector<1x32xi1>
    %264 = arith.extui %263 : vector<1x32xi1> to vector<1x32xi32>
    %265 = arith.sitofp %264 : vector<1x32xi32> to vector<1x32xf32>
    %c24_i32_65 = arith.constant 24 : i32
    %266 = vector.broadcast %c24_i32_65 : i32 to vector<1x32xi32>
    %267 = arith.cmpi sge, %244, %266 : vector<1x32xi32>
    %c32_i32_66 = arith.constant 32 : i32
    %268 = vector.broadcast %c32_i32_66 : i32 to vector<1x32xi32>
    %269 = arith.cmpi slt, %244, %268 : vector<1x32xi32>
    %270 = arith.andi %267, %269 : vector<1x32xi1>
    %271 = arith.extui %270 : vector<1x32xi1> to vector<1x32xi32>
    %272 = arith.sitofp %271 : vector<1x32xi32> to vector<1x32xf32>
    %c40 = arith.constant 40 : index
    %c0_67 = arith.constant 0 : index
    %273 = vector.load %arg2[%c40, %c0_67] : memref<848x128xf32, #tpu.memory_space<vmem>>, vector<32x96xf32>
    %c72 = arith.constant 72 : index
    %c0_68 = arith.constant 0 : index
    %274 = vector.load %arg2[%c72, %c0_68] : memref<848x128xf32, #tpu.memory_space<vmem>>, vector<32x32xf32>
    %c104 = arith.constant 104 : index
    %c0_69 = arith.constant 0 : index
    %275 = vector.load %arg2[%c104, %c0_69] : memref<848x128xf32, #tpu.memory_space<vmem>>, vector<32x16xf32>
    %c136 = arith.constant 136 : index
    %c0_70 = arith.constant 0 : index
    %276 = vector.load %arg2[%c136, %c0_70] : memref<848x128xf32, #tpu.memory_space<vmem>>, vector<16x32xf32>
    %c152 = arith.constant 152 : index
    %c0_71 = arith.constant 0 : index
    %277 = vector.load %arg2[%c152, %c0_71] : memref<848x128xf32, #tpu.memory_space<vmem>>, vector<256x32xf32>
    %c824 = arith.constant 824 : index
    %c0_72 = arith.constant 0 : index
    %278 = vector.load %arg2[%c824, %c0_72] : memref<848x128xf32, #tpu.memory_space<vmem>>, vector<1x96xf32>
    %c825 = arith.constant 825 : index
    %c0_73 = arith.constant 0 : index
    %279 = vector.load %arg2[%c825, %c0_73] : memref<848x128xf32, #tpu.memory_space<vmem>>, vector<1x32xf32>
    %c826 = arith.constant 826 : index
    %c0_74 = arith.constant 0 : index
    %280 = vector.load %arg2[%c826, %c0_74] : memref<848x128xf32, #tpu.memory_space<vmem>>, vector<1x32xf32>
    %c827 = arith.constant 827 : index
    %c0_75 = arith.constant 0 : index
    %281 = vector.load %arg2[%c827, %c0_75] : memref<848x128xf32, #tpu.memory_space<vmem>>, vector<1x32xf32>
    %c828 = arith.constant 828 : index
    %c0_76 = arith.constant 0 : index
    %282 = vector.load %arg2[%c828, %c0_76] : memref<848x128xf32, #tpu.memory_space<vmem>>, vector<1x16xf32>
    %c829 = arith.constant 829 : index
    %c0_77 = arith.constant 0 : index
    %283 = vector.load %arg2[%c829, %c0_77] : memref<848x128xf32, #tpu.memory_space<vmem>>, vector<1x32xf32>
    %c830 = arith.constant 830 : index
    %c0_78 = arith.constant 0 : index
    %284 = vector.load %arg2[%c830, %c0_78] : memref<848x128xf32, #tpu.memory_space<vmem>>, vector<1x32xf32>
    %c831 = arith.constant 831 : index
    %c0_79 = arith.constant 0 : index
    %285 = vector.load %arg2[%c831, %c0_79] : memref<848x128xf32, #tpu.memory_space<vmem>>, vector<1x32xf32>
    %cst_80 = arith.constant dense<0.000000e+00> : vector<16x96xf32>
    %286 = tpu.matmul %231, %273, %cst_80 {dimension_numbers = #tpu.dot_dimension_numbers<[1], [0], [0], [1], [0, 0, 1, 1], [], []>} : vector<16x32xf32>, vector<32x96xf32>, vector<16x96xf32> -> vector<16x96xf32>
    %287 = vector.broadcast %278 : vector<1x96xf32> to vector<16x96xf32>
    %288 = arith.addf %286, %287 : vector<16x96xf32>
    %289 = vector.extract_strided_slice %288 {offsets = [0, 0], sizes = [8, 32], strides = [1, 1]} : vector<16x96xf32> to vector<8x32xf32>
    %290 = vector.extract_strided_slice %288 {offsets = [0, 32], sizes = [8, 32], strides = [1, 1]} : vector<16x96xf32> to vector<8x32xf32>
    %291 = vector.extract_strided_slice %288 {offsets = [0, 64], sizes = [8, 32], strides = [1, 1]} : vector<16x96xf32> to vector<8x32xf32>
    %292 = tpu.concatenate %289, %289, %289, %289, %289, %289, %289, %289 in 1 : vector<8x32xf32>, vector<8x32xf32>, vector<8x32xf32>, vector<8x32xf32>, vector<8x32xf32>, vector<8x32xf32>, vector<8x32xf32>, vector<8x32xf32> -> vector<8x256xf32>
    %293 = arith.mulf %292, %243 : vector<8x256xf32>
    %cst_81 = arith.constant dense<0.000000e+00> : vector<8x32xf32>
    %294 = tpu.matmul %293, %277, %cst_81 {dimension_numbers = #tpu.dot_dimension_numbers<[1], [0], [0], [1], [0, 0, 1, 1], [], []>} : vector<8x256xf32>, vector<256x32xf32>, vector<8x32xf32> -> vector<8x32xf32>
    %cst_82 = arith.constant 0.000000e+00 : f32
    %295 = vector.broadcast %cst_82 : f32 to vector<8x32xf32>
    %296 = vector.extract_strided_slice %289 {offsets = [0, 0], sizes = [8, 8], strides = [1, 1]} : vector<8x32xf32> to vector<8x8xf32>
    %297 = vector.extract_strided_slice %290 {offsets = [0, 0], sizes = [8, 8], strides = [1, 1]} : vector<8x32xf32> to vector<8x8xf32>
    %cst_83 = arith.constant dense<0.000000e+00> : vector<8x8xf32>
    %298 = tpu.matmul %296, %297, %cst_83 {dimension_numbers = #tpu.dot_dimension_numbers<[1], [1], [0], [0], [0, 0, 1, 0], [], []>} : vector<8x8xf32>, vector<8x8xf32>, vector<8x8xf32> -> vector<8x8xf32>
    %299 = vector.extract_strided_slice %294 {offsets = [0, 0], sizes = [8, 8], strides = [1, 1]} : vector<8x32xf32> to vector<8x8xf32>
    %300 = arith.addf %298, %299 : vector<8x8xf32>
    %301 = vector.broadcast %173 : vector<1x8xf32> to vector<8x8xf32>
    %302 = arith.addf %300, %301 : vector<8x8xf32>
    %cst_84 = arith.constant dense<0xFF800000> : vector<8xf32>
    %303 = vector.multi_reduction <maximumf>, %302, %cst_84 [1] : vector<8x8xf32> to vector<8xf32>
    %304 = vector.shape_cast %303 : vector<8xf32> to vector<8x1xf32>
    %305 = vector.broadcast %304 : vector<8x1xf32> to vector<8x8xf32>
    %306 = arith.subf %302, %305 : vector<8x8xf32>
    %307 = math.exp %306 : vector<8x8xf32>
    %cst_85 = arith.constant dense<0.000000e+00> : vector<8xf32>
    %308 = vector.multi_reduction <add>, %307, %cst_85 [1] : vector<8x8xf32> to vector<8xf32>
    %309 = vector.shape_cast %308 : vector<8xf32> to vector<8x1xf32>
    %310 = vector.broadcast %309 : vector<8x1xf32> to vector<8x8xf32>
    %311 = arith.divf %307, %310 : vector<8x8xf32>
    %312 = vector.broadcast %251 : vector<1x32xf32> to vector<8x32xf32>
    %313 = arith.mulf %291, %312 : vector<8x32xf32>
    %cst_86 = arith.constant dense<0.000000e+00> : vector<8x32xf32>
    %314 = tpu.matmul %311, %313, %cst_86 {dimension_numbers = #tpu.dot_dimension_numbers<[1], [0], [0], [1], [0, 0, 1, 1], [], []>} : vector<8x8xf32>, vector<8x32xf32>, vector<8x32xf32> -> vector<8x32xf32>
    %315 = arith.addf %295, %314 : vector<8x32xf32>
    %316 = vector.extract_strided_slice %289 {offsets = [0, 8], sizes = [8, 8], strides = [1, 1]} : vector<8x32xf32> to vector<8x8xf32>
    %317 = vector.extract_strided_slice %290 {offsets = [0, 8], sizes = [8, 8], strides = [1, 1]} : vector<8x32xf32> to vector<8x8xf32>
    %cst_87 = arith.constant dense<0.000000e+00> : vector<8x8xf32>
    %318 = tpu.matmul %316, %317, %cst_87 {dimension_numbers = #tpu.dot_dimension_numbers<[1], [1], [0], [0], [0, 0, 1, 0], [], []>} : vector<8x8xf32>, vector<8x8xf32>, vector<8x8xf32> -> vector<8x8xf32>
    %319 = vector.extract_strided_slice %294 {offsets = [0, 8], sizes = [8, 8], strides = [1, 1]} : vector<8x32xf32> to vector<8x8xf32>
    %320 = arith.addf %318, %319 : vector<8x8xf32>
    %321 = vector.broadcast %173 : vector<1x8xf32> to vector<8x8xf32>
    %322 = arith.addf %320, %321 : vector<8x8xf32>
    %cst_88 = arith.constant dense<0xFF800000> : vector<8xf32>
    %323 = vector.multi_reduction <maximumf>, %322, %cst_88 [1] : vector<8x8xf32> to vector<8xf32>
    %324 = vector.shape_cast %323 : vector<8xf32> to vector<8x1xf32>
    %325 = vector.broadcast %324 : vector<8x1xf32> to vector<8x8xf32>
    %326 = arith.subf %322, %325 : vector<8x8xf32>
    %327 = math.exp %326 : vector<8x8xf32>
    %cst_89 = arith.constant dense<0.000000e+00> : vector<8xf32>
    %328 = vector.multi_reduction <add>, %327, %cst_89 [1] : vector<8x8xf32> to vector<8xf32>
    %329 = vector.shape_cast %328 : vector<8xf32> to vector<8x1xf32>
    %330 = vector.broadcast %329 : vector<8x1xf32> to vector<8x8xf32>
    %331 = arith.divf %327, %330 : vector<8x8xf32>
    %332 = vector.broadcast %258 : vector<1x32xf32> to vector<8x32xf32>
    %333 = arith.mulf %291, %332 : vector<8x32xf32>
    %cst_90 = arith.constant dense<0.000000e+00> : vector<8x32xf32>
    %334 = tpu.matmul %331, %333, %cst_90 {dimension_numbers = #tpu.dot_dimension_numbers<[1], [0], [0], [1], [0, 0, 1, 1], [], []>} : vector<8x8xf32>, vector<8x32xf32>, vector<8x32xf32> -> vector<8x32xf32>
    %335 = arith.addf %315, %334 : vector<8x32xf32>
    %336 = vector.extract_strided_slice %289 {offsets = [0, 16], sizes = [8, 8], strides = [1, 1]} : vector<8x32xf32> to vector<8x8xf32>
    %337 = vector.extract_strided_slice %290 {offsets = [0, 16], sizes = [8, 8], strides = [1, 1]} : vector<8x32xf32> to vector<8x8xf32>
    %cst_91 = arith.constant dense<0.000000e+00> : vector<8x8xf32>
    %338 = tpu.matmul %336, %337, %cst_91 {dimension_numbers = #tpu.dot_dimension_numbers<[1], [1], [0], [0], [0, 0, 1, 0], [], []>} : vector<8x8xf32>, vector<8x8xf32>, vector<8x8xf32> -> vector<8x8xf32>
    %339 = vector.extract_strided_slice %294 {offsets = [0, 16], sizes = [8, 8], strides = [1, 1]} : vector<8x32xf32> to vector<8x8xf32>
    %340 = arith.addf %338, %339 : vector<8x8xf32>
    %341 = vector.broadcast %173 : vector<1x8xf32> to vector<8x8xf32>
    %342 = arith.addf %340, %341 : vector<8x8xf32>
    %cst_92 = arith.constant dense<0xFF800000> : vector<8xf32>
    %343 = vector.multi_reduction <maximumf>, %342, %cst_92 [1] : vector<8x8xf32> to vector<8xf32>
    %344 = vector.shape_cast %343 : vector<8xf32> to vector<8x1xf32>
    %345 = vector.broadcast %344 : vector<8x1xf32> to vector<8x8xf32>
    %346 = arith.subf %342, %345 : vector<8x8xf32>
    %347 = math.exp %346 : vector<8x8xf32>
    %cst_93 = arith.constant dense<0.000000e+00> : vector<8xf32>
    %348 = vector.multi_reduction <add>, %347, %cst_93 [1] : vector<8x8xf32> to vector<8xf32>
    %349 = vector.shape_cast %348 : vector<8xf32> to vector<8x1xf32>
    %350 = vector.broadcast %349 : vector<8x1xf32> to vector<8x8xf32>
    %351 = arith.divf %347, %350 : vector<8x8xf32>
    %352 = vector.broadcast %265 : vector<1x32xf32> to vector<8x32xf32>
    %353 = arith.mulf %291, %352 : vector<8x32xf32>
    %cst_94 = arith.constant dense<0.000000e+00> : vector<8x32xf32>
    %354 = tpu.matmul %351, %353, %cst_94 {dimension_numbers = #tpu.dot_dimension_numbers<[1], [0], [0], [1], [0, 0, 1, 1], [], []>} : vector<8x8xf32>, vector<8x32xf32>, vector<8x32xf32> -> vector<8x32xf32>
    %355 = arith.addf %335, %354 : vector<8x32xf32>
    %356 = vector.extract_strided_slice %289 {offsets = [0, 24], sizes = [8, 8], strides = [1, 1]} : vector<8x32xf32> to vector<8x8xf32>
    %357 = vector.extract_strided_slice %290 {offsets = [0, 24], sizes = [8, 8], strides = [1, 1]} : vector<8x32xf32> to vector<8x8xf32>
    %cst_95 = arith.constant dense<0.000000e+00> : vector<8x8xf32>
    %358 = tpu.matmul %356, %357, %cst_95 {dimension_numbers = #tpu.dot_dimension_numbers<[1], [1], [0], [0], [0, 0, 1, 0], [], []>} : vector<8x8xf32>, vector<8x8xf32>, vector<8x8xf32> -> vector<8x8xf32>
    %359 = vector.extract_strided_slice %294 {offsets = [0, 24], sizes = [8, 8], strides = [1, 1]} : vector<8x32xf32> to vector<8x8xf32>
    %360 = arith.addf %358, %359 : vector<8x8xf32>
    %361 = vector.broadcast %173 : vector<1x8xf32> to vector<8x8xf32>
    %362 = arith.addf %360, %361 : vector<8x8xf32>
    %cst_96 = arith.constant dense<0xFF800000> : vector<8xf32>
    %363 = vector.multi_reduction <maximumf>, %362, %cst_96 [1] : vector<8x8xf32> to vector<8xf32>
    %364 = vector.shape_cast %363 : vector<8xf32> to vector<8x1xf32>
    %365 = vector.broadcast %364 : vector<8x1xf32> to vector<8x8xf32>
    %366 = arith.subf %362, %365 : vector<8x8xf32>
    %367 = math.exp %366 : vector<8x8xf32>
    %cst_97 = arith.constant dense<0.000000e+00> : vector<8xf32>
    %368 = vector.multi_reduction <add>, %367, %cst_97 [1] : vector<8x8xf32> to vector<8xf32>
    %369 = vector.shape_cast %368 : vector<8xf32> to vector<8x1xf32>
    %370 = vector.broadcast %369 : vector<8x1xf32> to vector<8x8xf32>
    %371 = arith.divf %367, %370 : vector<8x8xf32>
    %372 = vector.broadcast %272 : vector<1x32xf32> to vector<8x32xf32>
    %373 = arith.mulf %291, %372 : vector<8x32xf32>
    %cst_98 = arith.constant dense<0.000000e+00> : vector<8x32xf32>
    %374 = tpu.matmul %371, %373, %cst_98 {dimension_numbers = #tpu.dot_dimension_numbers<[1], [0], [0], [1], [0, 0, 1, 1], [], []>} : vector<8x8xf32>, vector<8x32xf32>, vector<8x32xf32> -> vector<8x32xf32>
    %375 = arith.addf %355, %374 : vector<8x32xf32>
    %376 = vector.extract_strided_slice %288 {offsets = [8, 0], sizes = [8, 32], strides = [1, 1]} : vector<16x96xf32> to vector<8x32xf32>
    %377 = vector.extract_strided_slice %288 {offsets = [8, 32], sizes = [8, 32], strides = [1, 1]} : vector<16x96xf32> to vector<8x32xf32>
    %378 = vector.extract_strided_slice %288 {offsets = [8, 64], sizes = [8, 32], strides = [1, 1]} : vector<16x96xf32> to vector<8x32xf32>
    %379 = tpu.concatenate %376, %376, %376, %376, %376, %376, %376, %376 in 1 : vector<8x32xf32>, vector<8x32xf32>, vector<8x32xf32>, vector<8x32xf32>, vector<8x32xf32>, vector<8x32xf32>, vector<8x32xf32>, vector<8x32xf32> -> vector<8x256xf32>
    %380 = arith.mulf %379, %243 : vector<8x256xf32>
    %cst_99 = arith.constant dense<0.000000e+00> : vector<8x32xf32>
    %381 = tpu.matmul %380, %277, %cst_99 {dimension_numbers = #tpu.dot_dimension_numbers<[1], [0], [0], [1], [0, 0, 1, 1], [], []>} : vector<8x256xf32>, vector<256x32xf32>, vector<8x32xf32> -> vector<8x32xf32>
    %cst_100 = arith.constant 0.000000e+00 : f32
    %382 = vector.broadcast %cst_100 : f32 to vector<8x32xf32>
    %383 = vector.extract_strided_slice %376 {offsets = [0, 0], sizes = [8, 8], strides = [1, 1]} : vector<8x32xf32> to vector<8x8xf32>
    %384 = vector.extract_strided_slice %377 {offsets = [0, 0], sizes = [8, 8], strides = [1, 1]} : vector<8x32xf32> to vector<8x8xf32>
    %cst_101 = arith.constant dense<0.000000e+00> : vector<8x8xf32>
    %385 = tpu.matmul %383, %384, %cst_101 {dimension_numbers = #tpu.dot_dimension_numbers<[1], [1], [0], [0], [0, 0, 1, 0], [], []>} : vector<8x8xf32>, vector<8x8xf32>, vector<8x8xf32> -> vector<8x8xf32>
    %386 = vector.extract_strided_slice %381 {offsets = [0, 0], sizes = [8, 8], strides = [1, 1]} : vector<8x32xf32> to vector<8x8xf32>
    %387 = arith.addf %385, %386 : vector<8x8xf32>
    %388 = vector.broadcast %227 : vector<1x8xf32> to vector<8x8xf32>
    %389 = arith.addf %387, %388 : vector<8x8xf32>
    %cst_102 = arith.constant dense<0xFF800000> : vector<8xf32>
    %390 = vector.multi_reduction <maximumf>, %389, %cst_102 [1] : vector<8x8xf32> to vector<8xf32>
    %391 = vector.shape_cast %390 : vector<8xf32> to vector<8x1xf32>
    %392 = vector.broadcast %391 : vector<8x1xf32> to vector<8x8xf32>
    %393 = arith.subf %389, %392 : vector<8x8xf32>
    %394 = math.exp %393 : vector<8x8xf32>
    %cst_103 = arith.constant dense<0.000000e+00> : vector<8xf32>
    %395 = vector.multi_reduction <add>, %394, %cst_103 [1] : vector<8x8xf32> to vector<8xf32>
    %396 = vector.shape_cast %395 : vector<8xf32> to vector<8x1xf32>
    %397 = vector.broadcast %396 : vector<8x1xf32> to vector<8x8xf32>
    %398 = arith.divf %394, %397 : vector<8x8xf32>
    %399 = vector.broadcast %251 : vector<1x32xf32> to vector<8x32xf32>
    %400 = arith.mulf %378, %399 : vector<8x32xf32>
    %cst_104 = arith.constant dense<0.000000e+00> : vector<8x32xf32>
    %401 = tpu.matmul %398, %400, %cst_104 {dimension_numbers = #tpu.dot_dimension_numbers<[1], [0], [0], [1], [0, 0, 1, 1], [], []>} : vector<8x8xf32>, vector<8x32xf32>, vector<8x32xf32> -> vector<8x32xf32>
    %402 = arith.addf %382, %401 : vector<8x32xf32>
    %403 = vector.extract_strided_slice %376 {offsets = [0, 8], sizes = [8, 8], strides = [1, 1]} : vector<8x32xf32> to vector<8x8xf32>
    %404 = vector.extract_strided_slice %377 {offsets = [0, 8], sizes = [8, 8], strides = [1, 1]} : vector<8x32xf32> to vector<8x8xf32>
    %cst_105 = arith.constant dense<0.000000e+00> : vector<8x8xf32>
    %405 = tpu.matmul %403, %404, %cst_105 {dimension_numbers = #tpu.dot_dimension_numbers<[1], [1], [0], [0], [0, 0, 1, 0], [], []>} : vector<8x8xf32>, vector<8x8xf32>, vector<8x8xf32> -> vector<8x8xf32>
    %406 = vector.extract_strided_slice %381 {offsets = [0, 8], sizes = [8, 8], strides = [1, 1]} : vector<8x32xf32> to vector<8x8xf32>
    %407 = arith.addf %405, %406 : vector<8x8xf32>
    %408 = vector.broadcast %227 : vector<1x8xf32> to vector<8x8xf32>
    %409 = arith.addf %407, %408 : vector<8x8xf32>
    %cst_106 = arith.constant dense<0xFF800000> : vector<8xf32>
    %410 = vector.multi_reduction <maximumf>, %409, %cst_106 [1] : vector<8x8xf32> to vector<8xf32>
    %411 = vector.shape_cast %410 : vector<8xf32> to vector<8x1xf32>
    %412 = vector.broadcast %411 : vector<8x1xf32> to vector<8x8xf32>
    %413 = arith.subf %409, %412 : vector<8x8xf32>
    %414 = math.exp %413 : vector<8x8xf32>
    %cst_107 = arith.constant dense<0.000000e+00> : vector<8xf32>
    %415 = vector.multi_reduction <add>, %414, %cst_107 [1] : vector<8x8xf32> to vector<8xf32>
    %416 = vector.shape_cast %415 : vector<8xf32> to vector<8x1xf32>
    %417 = vector.broadcast %416 : vector<8x1xf32> to vector<8x8xf32>
    %418 = arith.divf %414, %417 : vector<8x8xf32>
    %419 = vector.broadcast %258 : vector<1x32xf32> to vector<8x32xf32>
    %420 = arith.mulf %378, %419 : vector<8x32xf32>
    %cst_108 = arith.constant dense<0.000000e+00> : vector<8x32xf32>
    %421 = tpu.matmul %418, %420, %cst_108 {dimension_numbers = #tpu.dot_dimension_numbers<[1], [0], [0], [1], [0, 0, 1, 1], [], []>} : vector<8x8xf32>, vector<8x32xf32>, vector<8x32xf32> -> vector<8x32xf32>
    %422 = arith.addf %402, %421 : vector<8x32xf32>
    %423 = vector.extract_strided_slice %376 {offsets = [0, 16], sizes = [8, 8], strides = [1, 1]} : vector<8x32xf32> to vector<8x8xf32>
    %424 = vector.extract_strided_slice %377 {offsets = [0, 16], sizes = [8, 8], strides = [1, 1]} : vector<8x32xf32> to vector<8x8xf32>
    %cst_109 = arith.constant dense<0.000000e+00> : vector<8x8xf32>
    %425 = tpu.matmul %423, %424, %cst_109 {dimension_numbers = #tpu.dot_dimension_numbers<[1], [1], [0], [0], [0, 0, 1, 0], [], []>} : vector<8x8xf32>, vector<8x8xf32>, vector<8x8xf32> -> vector<8x8xf32>
    %426 = vector.extract_strided_slice %381 {offsets = [0, 16], sizes = [8, 8], strides = [1, 1]} : vector<8x32xf32> to vector<8x8xf32>
    %427 = arith.addf %425, %426 : vector<8x8xf32>
    %428 = vector.broadcast %227 : vector<1x8xf32> to vector<8x8xf32>
    %429 = arith.addf %427, %428 : vector<8x8xf32>
    %cst_110 = arith.constant dense<0xFF800000> : vector<8xf32>
    %430 = vector.multi_reduction <maximumf>, %429, %cst_110 [1] : vector<8x8xf32> to vector<8xf32>
    %431 = vector.shape_cast %430 : vector<8xf32> to vector<8x1xf32>
    %432 = vector.broadcast %431 : vector<8x1xf32> to vector<8x8xf32>
    %433 = arith.subf %429, %432 : vector<8x8xf32>
    %434 = math.exp %433 : vector<8x8xf32>
    %cst_111 = arith.constant dense<0.000000e+00> : vector<8xf32>
    %435 = vector.multi_reduction <add>, %434, %cst_111 [1] : vector<8x8xf32> to vector<8xf32>
    %436 = vector.shape_cast %435 : vector<8xf32> to vector<8x1xf32>
    %437 = vector.broadcast %436 : vector<8x1xf32> to vector<8x8xf32>
    %438 = arith.divf %434, %437 : vector<8x8xf32>
    %439 = vector.broadcast %265 : vector<1x32xf32> to vector<8x32xf32>
    %440 = arith.mulf %378, %439 : vector<8x32xf32>
    %cst_112 = arith.constant dense<0.000000e+00> : vector<8x32xf32>
    %441 = tpu.matmul %438, %440, %cst_112 {dimension_numbers = #tpu.dot_dimension_numbers<[1], [0], [0], [1], [0, 0, 1, 1], [], []>} : vector<8x8xf32>, vector<8x32xf32>, vector<8x32xf32> -> vector<8x32xf32>
    %442 = arith.addf %422, %441 : vector<8x32xf32>
    %443 = vector.extract_strided_slice %376 {offsets = [0, 24], sizes = [8, 8], strides = [1, 1]} : vector<8x32xf32> to vector<8x8xf32>
    %444 = vector.extract_strided_slice %377 {offsets = [0, 24], sizes = [8, 8], strides = [1, 1]} : vector<8x32xf32> to vector<8x8xf32>
    %cst_113 = arith.constant dense<0.000000e+00> : vector<8x8xf32>
    %445 = tpu.matmul %443, %444, %cst_113 {dimension_numbers = #tpu.dot_dimension_numbers<[1], [1], [0], [0], [0, 0, 1, 0], [], []>} : vector<8x8xf32>, vector<8x8xf32>, vector<8x8xf32> -> vector<8x8xf32>
    %446 = vector.extract_strided_slice %381 {offsets = [0, 24], sizes = [8, 8], strides = [1, 1]} : vector<8x32xf32> to vector<8x8xf32>
    %447 = arith.addf %445, %446 : vector<8x8xf32>
    %448 = vector.broadcast %227 : vector<1x8xf32> to vector<8x8xf32>
    %449 = arith.addf %447, %448 : vector<8x8xf32>
    %cst_114 = arith.constant dense<0xFF800000> : vector<8xf32>
    %450 = vector.multi_reduction <maximumf>, %449, %cst_114 [1] : vector<8x8xf32> to vector<8xf32>
    %451 = vector.shape_cast %450 : vector<8xf32> to vector<8x1xf32>
    %452 = vector.broadcast %451 : vector<8x1xf32> to vector<8x8xf32>
    %453 = arith.subf %449, %452 : vector<8x8xf32>
    %454 = math.exp %453 : vector<8x8xf32>
    %cst_115 = arith.constant dense<0.000000e+00> : vector<8xf32>
    %455 = vector.multi_reduction <add>, %454, %cst_115 [1] : vector<8x8xf32> to vector<8xf32>
    %456 = vector.shape_cast %455 : vector<8xf32> to vector<8x1xf32>
    %457 = vector.broadcast %456 : vector<8x1xf32> to vector<8x8xf32>
    %458 = arith.divf %454, %457 : vector<8x8xf32>
    %459 = vector.broadcast %272 : vector<1x32xf32> to vector<8x32xf32>
    %460 = arith.mulf %378, %459 : vector<8x32xf32>
    %cst_116 = arith.constant dense<0.000000e+00> : vector<8x32xf32>
    %461 = tpu.matmul %458, %460, %cst_116 {dimension_numbers = #tpu.dot_dimension_numbers<[1], [0], [0], [1], [0, 0, 1, 1], [], []>} : vector<8x8xf32>, vector<8x32xf32>, vector<8x32xf32> -> vector<8x32xf32>
    %462 = arith.addf %442, %461 : vector<8x32xf32>
    %463 = tpu.concatenate %375, %462 in 0 : vector<8x32xf32>, vector<8x32xf32> -> vector<16x32xf32>
    %cst_117 = arith.constant dense<0.000000e+00> : vector<16x32xf32>
    %464 = tpu.matmul %463, %274, %cst_117 {dimension_numbers = #tpu.dot_dimension_numbers<[1], [0], [0], [1], [0, 0, 1, 1], [], []>} : vector<16x32xf32>, vector<32x32xf32>, vector<16x32xf32> -> vector<16x32xf32>
    %465 = vector.broadcast %279 : vector<1x32xf32> to vector<16x32xf32>
    %466 = arith.addf %464, %465 : vector<16x32xf32>
    %467 = arith.addf %466, %231 : vector<16x32xf32>
    %cst_118 = arith.constant dense<0.000000e+00> : vector<16xf32>
    %468 = vector.multi_reduction <add>, %467, %cst_118 [1] : vector<16x32xf32> to vector<16xf32>
    %469 = vector.shape_cast %468 : vector<16xf32> to vector<16x1xf32>
    %cst_119 = arith.constant 3.200000e+01 : f32
    %470 = vector.broadcast %cst_119 : f32 to vector<16x1xf32>
    %471 = arith.divf %469, %470 : vector<16x1xf32>
    %472 = vector.broadcast %471 : vector<16x1xf32> to vector<16x32xf32>
    %473 = arith.subf %467, %472 : vector<16x32xf32>
    %474 = arith.mulf %473, %473 : vector<16x32xf32>
    %cst_120 = arith.constant dense<0.000000e+00> : vector<16xf32>
    %475 = vector.multi_reduction <add>, %474, %cst_120 [1] : vector<16x32xf32> to vector<16xf32>
    %476 = vector.shape_cast %475 : vector<16xf32> to vector<16x1xf32>
    %cst_121 = arith.constant 3.200000e+01 : f32
    %477 = vector.broadcast %cst_121 : f32 to vector<16x1xf32>
    %478 = arith.divf %476, %477 : vector<16x1xf32>
    %479 = vector.broadcast %471 : vector<16x1xf32> to vector<16x32xf32>
    %480 = arith.subf %467, %479 : vector<16x32xf32>
    %cst_122 = arith.constant 9.99999997E-7 : f32
    %481 = vector.broadcast %cst_122 : f32 to vector<16x1xf32>
    %482 = arith.addf %478, %481 : vector<16x1xf32>
    %483 = math.rsqrt %482 : vector<16x1xf32>
    %484 = vector.broadcast %483 : vector<16x1xf32> to vector<16x32xf32>
    %485 = arith.mulf %480, %484 : vector<16x32xf32>
    %486 = vector.broadcast %280 : vector<1x32xf32> to vector<16x32xf32>
    %487 = arith.mulf %485, %486 : vector<16x32xf32>
    %488 = vector.broadcast %281 : vector<1x32xf32> to vector<16x32xf32>
    %489 = arith.addf %487, %488 : vector<16x32xf32>
    %cst_123 = arith.constant dense<0.000000e+00> : vector<16x16xf32>
    %490 = tpu.matmul %489, %275, %cst_123 {dimension_numbers = #tpu.dot_dimension_numbers<[1], [0], [0], [1], [0, 0, 1, 1], [], []>} : vector<16x32xf32>, vector<32x16xf32>, vector<16x16xf32> -> vector<16x16xf32>
    %491 = vector.broadcast %282 : vector<1x16xf32> to vector<16x16xf32>
    %492 = arith.addf %490, %491 : vector<16x16xf32>
    %cst_124 = arith.constant 0.000000e+00 : f32
    %493 = vector.broadcast %cst_124 : f32 to vector<16x16xf32>
    %494 = arith.maximumf %492, %493 : vector<16x16xf32>
    %cst_125 = arith.constant dense<0.000000e+00> : vector<16x32xf32>
    %495 = tpu.matmul %494, %276, %cst_125 {dimension_numbers = #tpu.dot_dimension_numbers<[1], [0], [0], [1], [0, 0, 1, 1], [], []>} : vector<16x16xf32>, vector<16x32xf32>, vector<16x32xf32> -> vector<16x32xf32>
    %496 = vector.broadcast %283 : vector<1x32xf32> to vector<16x32xf32>
    %497 = arith.addf %495, %496 : vector<16x32xf32>
    %498 = arith.addf %489, %497 : vector<16x32xf32>
    %cst_126 = arith.constant dense<0.000000e+00> : vector<16xf32>
    %499 = vector.multi_reduction <add>, %498, %cst_126 [1] : vector<16x32xf32> to vector<16xf32>
    %500 = vector.shape_cast %499 : vector<16xf32> to vector<16x1xf32>
    %cst_127 = arith.constant 3.200000e+01 : f32
    %501 = vector.broadcast %cst_127 : f32 to vector<16x1xf32>
    %502 = arith.divf %500, %501 : vector<16x1xf32>
    %503 = vector.broadcast %502 : vector<16x1xf32> to vector<16x32xf32>
    %504 = arith.subf %498, %503 : vector<16x32xf32>
    %505 = arith.mulf %504, %504 : vector<16x32xf32>
    %cst_128 = arith.constant dense<0.000000e+00> : vector<16xf32>
    %506 = vector.multi_reduction <add>, %505, %cst_128 [1] : vector<16x32xf32> to vector<16xf32>
    %507 = vector.shape_cast %506 : vector<16xf32> to vector<16x1xf32>
    %cst_129 = arith.constant 3.200000e+01 : f32
    %508 = vector.broadcast %cst_129 : f32 to vector<16x1xf32>
    %509 = arith.divf %507, %508 : vector<16x1xf32>
    %510 = vector.broadcast %502 : vector<16x1xf32> to vector<16x32xf32>
    %511 = arith.subf %498, %510 : vector<16x32xf32>
    %cst_130 = arith.constant 9.99999997E-7 : f32
    %512 = vector.broadcast %cst_130 : f32 to vector<16x1xf32>
    %513 = arith.addf %509, %512 : vector<16x1xf32>
    %514 = math.rsqrt %513 : vector<16x1xf32>
    %515 = vector.broadcast %514 : vector<16x1xf32> to vector<16x32xf32>
    %516 = arith.mulf %511, %515 : vector<16x32xf32>
    %517 = vector.broadcast %284 : vector<1x32xf32> to vector<16x32xf32>
    %518 = arith.mulf %516, %517 : vector<16x32xf32>
    %519 = vector.broadcast %285 : vector<1x32xf32> to vector<16x32xf32>
    %520 = arith.addf %518, %519 : vector<16x32xf32>
    %c408 = arith.constant 408 : index
    %c0_131 = arith.constant 0 : index
    %521 = vector.load %arg2[%c408, %c0_131] : memref<848x128xf32, #tpu.memory_space<vmem>>, vector<32x96xf32>
    %c440 = arith.constant 440 : index
    %c0_132 = arith.constant 0 : index
    %522 = vector.load %arg2[%c440, %c0_132] : memref<848x128xf32, #tpu.memory_space<vmem>>, vector<32x32xf32>
    %c472 = arith.constant 472 : index
    %c0_133 = arith.constant 0 : index
    %523 = vector.load %arg2[%c472, %c0_133] : memref<848x128xf32, #tpu.memory_space<vmem>>, vector<32x16xf32>
    %c504 = arith.constant 504 : index
    %c0_134 = arith.constant 0 : index
    %524 = vector.load %arg2[%c504, %c0_134] : memref<848x128xf32, #tpu.memory_space<vmem>>, vector<16x32xf32>
    %c520 = arith.constant 520 : index
    %c0_135 = arith.constant 0 : index
    %525 = vector.load %arg2[%c520, %c0_135] : memref<848x128xf32, #tpu.memory_space<vmem>>, vector<256x32xf32>
    %c832 = arith.constant 832 : index
    %c0_136 = arith.constant 0 : index
    %526 = vector.load %arg2[%c832, %c0_136] : memref<848x128xf32, #tpu.memory_space<vmem>>, vector<1x96xf32>
    %c833 = arith.constant 833 : index
    %c0_137 = arith.constant 0 : index
    %527 = vector.load %arg2[%c833, %c0_137] : memref<848x128xf32, #tpu.memory_space<vmem>>, vector<1x32xf32>
    %c834 = arith.constant 834 : index
    %c0_138 = arith.constant 0 : index
    %528 = vector.load %arg2[%c834, %c0_138] : memref<848x128xf32, #tpu.memory_space<vmem>>, vector<1x32xf32>
    %c835 = arith.constant 835 : index
    %c0_139 = arith.constant 0 : index
    %529 = vector.load %arg2[%c835, %c0_139] : memref<848x128xf32, #tpu.memory_space<vmem>>, vector<1x32xf32>
    %c836 = arith.constant 836 : index
    %c0_140 = arith.constant 0 : index
    %530 = vector.load %arg2[%c836, %c0_140] : memref<848x128xf32, #tpu.memory_space<vmem>>, vector<1x16xf32>
    %c837 = arith.constant 837 : index
    %c0_141 = arith.constant 0 : index
    %531 = vector.load %arg2[%c837, %c0_141] : memref<848x128xf32, #tpu.memory_space<vmem>>, vector<1x32xf32>
    %c838 = arith.constant 838 : index
    %c0_142 = arith.constant 0 : index
    %532 = vector.load %arg2[%c838, %c0_142] : memref<848x128xf32, #tpu.memory_space<vmem>>, vector<1x32xf32>
    %c839 = arith.constant 839 : index
    %c0_143 = arith.constant 0 : index
    %533 = vector.load %arg2[%c839, %c0_143] : memref<848x128xf32, #tpu.memory_space<vmem>>, vector<1x32xf32>
    %cst_144 = arith.constant dense<0.000000e+00> : vector<16x96xf32>
    %534 = tpu.matmul %520, %521, %cst_144 {dimension_numbers = #tpu.dot_dimension_numbers<[1], [0], [0], [1], [0, 0, 1, 1], [], []>} : vector<16x32xf32>, vector<32x96xf32>, vector<16x96xf32> -> vector<16x96xf32>
    %535 = vector.broadcast %526 : vector<1x96xf32> to vector<16x96xf32>
    %536 = arith.addf %534, %535 : vector<16x96xf32>
    %537 = vector.extract_strided_slice %536 {offsets = [0, 0], sizes = [8, 32], strides = [1, 1]} : vector<16x96xf32> to vector<8x32xf32>
    %538 = vector.extract_strided_slice %536 {offsets = [0, 32], sizes = [8, 32], strides = [1, 1]} : vector<16x96xf32> to vector<8x32xf32>
    %539 = vector.extract_strided_slice %536 {offsets = [0, 64], sizes = [8, 32], strides = [1, 1]} : vector<16x96xf32> to vector<8x32xf32>
    %540 = tpu.concatenate %537, %537, %537, %537, %537, %537, %537, %537 in 1 : vector<8x32xf32>, vector<8x32xf32>, vector<8x32xf32>, vector<8x32xf32>, vector<8x32xf32>, vector<8x32xf32>, vector<8x32xf32>, vector<8x32xf32> -> vector<8x256xf32>
    %541 = arith.mulf %540, %243 : vector<8x256xf32>
    %cst_145 = arith.constant dense<0.000000e+00> : vector<8x32xf32>
    %542 = tpu.matmul %541, %525, %cst_145 {dimension_numbers = #tpu.dot_dimension_numbers<[1], [0], [0], [1], [0, 0, 1, 1], [], []>} : vector<8x256xf32>, vector<256x32xf32>, vector<8x32xf32> -> vector<8x32xf32>
    %cst_146 = arith.constant 0.000000e+00 : f32
    %543 = vector.broadcast %cst_146 : f32 to vector<8x32xf32>
    %544 = vector.extract_strided_slice %537 {offsets = [0, 0], sizes = [8, 8], strides = [1, 1]} : vector<8x32xf32> to vector<8x8xf32>
    %545 = vector.extract_strided_slice %538 {offsets = [0, 0], sizes = [8, 8], strides = [1, 1]} : vector<8x32xf32> to vector<8x8xf32>
    %cst_147 = arith.constant dense<0.000000e+00> : vector<8x8xf32>
    %546 = tpu.matmul %544, %545, %cst_147 {dimension_numbers = #tpu.dot_dimension_numbers<[1], [1], [0], [0], [0, 0, 1, 0], [], []>} : vector<8x8xf32>, vector<8x8xf32>, vector<8x8xf32> -> vector<8x8xf32>
    %547 = vector.extract_strided_slice %542 {offsets = [0, 0], sizes = [8, 8], strides = [1, 1]} : vector<8x32xf32> to vector<8x8xf32>
    %548 = arith.addf %546, %547 : vector<8x8xf32>
    %549 = vector.broadcast %173 : vector<1x8xf32> to vector<8x8xf32>
    %550 = arith.addf %548, %549 : vector<8x8xf32>
    %cst_148 = arith.constant dense<0xFF800000> : vector<8xf32>
    %551 = vector.multi_reduction <maximumf>, %550, %cst_148 [1] : vector<8x8xf32> to vector<8xf32>
    %552 = vector.shape_cast %551 : vector<8xf32> to vector<8x1xf32>
    %553 = vector.broadcast %552 : vector<8x1xf32> to vector<8x8xf32>
    %554 = arith.subf %550, %553 : vector<8x8xf32>
    %555 = math.exp %554 : vector<8x8xf32>
    %cst_149 = arith.constant dense<0.000000e+00> : vector<8xf32>
    %556 = vector.multi_reduction <add>, %555, %cst_149 [1] : vector<8x8xf32> to vector<8xf32>
    %557 = vector.shape_cast %556 : vector<8xf32> to vector<8x1xf32>
    %558 = vector.broadcast %557 : vector<8x1xf32> to vector<8x8xf32>
    %559 = arith.divf %555, %558 : vector<8x8xf32>
    %560 = vector.broadcast %251 : vector<1x32xf32> to vector<8x32xf32>
    %561 = arith.mulf %539, %560 : vector<8x32xf32>
    %cst_150 = arith.constant dense<0.000000e+00> : vector<8x32xf32>
    %562 = tpu.matmul %559, %561, %cst_150 {dimension_numbers = #tpu.dot_dimension_numbers<[1], [0], [0], [1], [0, 0, 1, 1], [], []>} : vector<8x8xf32>, vector<8x32xf32>, vector<8x32xf32> -> vector<8x32xf32>
    %563 = arith.addf %543, %562 : vector<8x32xf32>
    %564 = vector.extract_strided_slice %537 {offsets = [0, 8], sizes = [8, 8], strides = [1, 1]} : vector<8x32xf32> to vector<8x8xf32>
    %565 = vector.extract_strided_slice %538 {offsets = [0, 8], sizes = [8, 8], strides = [1, 1]} : vector<8x32xf32> to vector<8x8xf32>
    %cst_151 = arith.constant dense<0.000000e+00> : vector<8x8xf32>
    %566 = tpu.matmul %564, %565, %cst_151 {dimension_numbers = #tpu.dot_dimension_numbers<[1], [1], [0], [0], [0, 0, 1, 0], [], []>} : vector<8x8xf32>, vector<8x8xf32>, vector<8x8xf32> -> vector<8x8xf32>
    %567 = vector.extract_strided_slice %542 {offsets = [0, 8], sizes = [8, 8], strides = [1, 1]} : vector<8x32xf32> to vector<8x8xf32>
    %568 = arith.addf %566, %567 : vector<8x8xf32>
    %569 = vector.broadcast %173 : vector<1x8xf32> to vector<8x8xf32>
    %570 = arith.addf %568, %569 : vector<8x8xf32>
    %cst_152 = arith.constant dense<0xFF800000> : vector<8xf32>
    %571 = vector.multi_reduction <maximumf>, %570, %cst_152 [1] : vector<8x8xf32> to vector<8xf32>
    %572 = vector.shape_cast %571 : vector<8xf32> to vector<8x1xf32>
    %573 = vector.broadcast %572 : vector<8x1xf32> to vector<8x8xf32>
    %574 = arith.subf %570, %573 : vector<8x8xf32>
    %575 = math.exp %574 : vector<8x8xf32>
    %cst_153 = arith.constant dense<0.000000e+00> : vector<8xf32>
    %576 = vector.multi_reduction <add>, %575, %cst_153 [1] : vector<8x8xf32> to vector<8xf32>
    %577 = vector.shape_cast %576 : vector<8xf32> to vector<8x1xf32>
    %578 = vector.broadcast %577 : vector<8x1xf32> to vector<8x8xf32>
    %579 = arith.divf %575, %578 : vector<8x8xf32>
    %580 = vector.broadcast %258 : vector<1x32xf32> to vector<8x32xf32>
    %581 = arith.mulf %539, %580 : vector<8x32xf32>
    %cst_154 = arith.constant dense<0.000000e+00> : vector<8x32xf32>
    %582 = tpu.matmul %579, %581, %cst_154 {dimension_numbers = #tpu.dot_dimension_numbers<[1], [0], [0], [1], [0, 0, 1, 1], [], []>} : vector<8x8xf32>, vector<8x32xf32>, vector<8x32xf32> -> vector<8x32xf32>
    %583 = arith.addf %563, %582 : vector<8x32xf32>
    %584 = vector.extract_strided_slice %537 {offsets = [0, 16], sizes = [8, 8], strides = [1, 1]} : vector<8x32xf32> to vector<8x8xf32>
    %585 = vector.extract_strided_slice %538 {offsets = [0, 16], sizes = [8, 8], strides = [1, 1]} : vector<8x32xf32> to vector<8x8xf32>
    %cst_155 = arith.constant dense<0.000000e+00> : vector<8x8xf32>
    %586 = tpu.matmul %584, %585, %cst_155 {dimension_numbers = #tpu.dot_dimension_numbers<[1], [1], [0], [0], [0, 0, 1, 0], [], []>} : vector<8x8xf32>, vector<8x8xf32>, vector<8x8xf32> -> vector<8x8xf32>
    %587 = vector.extract_strided_slice %542 {offsets = [0, 16], sizes = [8, 8], strides = [1, 1]} : vector<8x32xf32> to vector<8x8xf32>
    %588 = arith.addf %586, %587 : vector<8x8xf32>
    %589 = vector.broadcast %173 : vector<1x8xf32> to vector<8x8xf32>
    %590 = arith.addf %588, %589 : vector<8x8xf32>
    %cst_156 = arith.constant dense<0xFF800000> : vector<8xf32>
    %591 = vector.multi_reduction <maximumf>, %590, %cst_156 [1] : vector<8x8xf32> to vector<8xf32>
    %592 = vector.shape_cast %591 : vector<8xf32> to vector<8x1xf32>
    %593 = vector.broadcast %592 : vector<8x1xf32> to vector<8x8xf32>
    %594 = arith.subf %590, %593 : vector<8x8xf32>
    %595 = math.exp %594 : vector<8x8xf32>
    %cst_157 = arith.constant dense<0.000000e+00> : vector<8xf32>
    %596 = vector.multi_reduction <add>, %595, %cst_157 [1] : vector<8x8xf32> to vector<8xf32>
    %597 = vector.shape_cast %596 : vector<8xf32> to vector<8x1xf32>
    %598 = vector.broadcast %597 : vector<8x1xf32> to vector<8x8xf32>
    %599 = arith.divf %595, %598 : vector<8x8xf32>
    %600 = vector.broadcast %265 : vector<1x32xf32> to vector<8x32xf32>
    %601 = arith.mulf %539, %600 : vector<8x32xf32>
    %cst_158 = arith.constant dense<0.000000e+00> : vector<8x32xf32>
    %602 = tpu.matmul %599, %601, %cst_158 {dimension_numbers = #tpu.dot_dimension_numbers<[1], [0], [0], [1], [0, 0, 1, 1], [], []>} : vector<8x8xf32>, vector<8x32xf32>, vector<8x32xf32> -> vector<8x32xf32>
    %603 = arith.addf %583, %602 : vector<8x32xf32>
    %604 = vector.extract_strided_slice %537 {offsets = [0, 24], sizes = [8, 8], strides = [1, 1]} : vector<8x32xf32> to vector<8x8xf32>
    %605 = vector.extract_strided_slice %538 {offsets = [0, 24], sizes = [8, 8], strides = [1, 1]} : vector<8x32xf32> to vector<8x8xf32>
    %cst_159 = arith.constant dense<0.000000e+00> : vector<8x8xf32>
    %606 = tpu.matmul %604, %605, %cst_159 {dimension_numbers = #tpu.dot_dimension_numbers<[1], [1], [0], [0], [0, 0, 1, 0], [], []>} : vector<8x8xf32>, vector<8x8xf32>, vector<8x8xf32> -> vector<8x8xf32>
    %607 = vector.extract_strided_slice %542 {offsets = [0, 24], sizes = [8, 8], strides = [1, 1]} : vector<8x32xf32> to vector<8x8xf32>
    %608 = arith.addf %606, %607 : vector<8x8xf32>
    %609 = vector.broadcast %173 : vector<1x8xf32> to vector<8x8xf32>
    %610 = arith.addf %608, %609 : vector<8x8xf32>
    %cst_160 = arith.constant dense<0xFF800000> : vector<8xf32>
    %611 = vector.multi_reduction <maximumf>, %610, %cst_160 [1] : vector<8x8xf32> to vector<8xf32>
    %612 = vector.shape_cast %611 : vector<8xf32> to vector<8x1xf32>
    %613 = vector.broadcast %612 : vector<8x1xf32> to vector<8x8xf32>
    %614 = arith.subf %610, %613 : vector<8x8xf32>
    %615 = math.exp %614 : vector<8x8xf32>
    %cst_161 = arith.constant dense<0.000000e+00> : vector<8xf32>
    %616 = vector.multi_reduction <add>, %615, %cst_161 [1] : vector<8x8xf32> to vector<8xf32>
    %617 = vector.shape_cast %616 : vector<8xf32> to vector<8x1xf32>
    %618 = vector.broadcast %617 : vector<8x1xf32> to vector<8x8xf32>
    %619 = arith.divf %615, %618 : vector<8x8xf32>
    %620 = vector.broadcast %272 : vector<1x32xf32> to vector<8x32xf32>
    %621 = arith.mulf %539, %620 : vector<8x32xf32>
    %cst_162 = arith.constant dense<0.000000e+00> : vector<8x32xf32>
    %622 = tpu.matmul %619, %621, %cst_162 {dimension_numbers = #tpu.dot_dimension_numbers<[1], [0], [0], [1], [0, 0, 1, 1], [], []>} : vector<8x8xf32>, vector<8x32xf32>, vector<8x32xf32> -> vector<8x32xf32>
    %623 = arith.addf %603, %622 : vector<8x32xf32>
    %624 = vector.extract_strided_slice %536 {offsets = [8, 0], sizes = [8, 32], strides = [1, 1]} : vector<16x96xf32> to vector<8x32xf32>
    %625 = vector.extract_strided_slice %536 {offsets = [8, 32], sizes = [8, 32], strides = [1, 1]} : vector<16x96xf32> to vector<8x32xf32>
    %626 = vector.extract_strided_slice %536 {offsets = [8, 64], sizes = [8, 32], strides = [1, 1]} : vector<16x96xf32> to vector<8x32xf32>
    %627 = tpu.concatenate %624, %624, %624, %624, %624, %624, %624, %624 in 1 : vector<8x32xf32>, vector<8x32xf32>, vector<8x32xf32>, vector<8x32xf32>, vector<8x32xf32>, vector<8x32xf32>, vector<8x32xf32>, vector<8x32xf32> -> vector<8x256xf32>
    %628 = arith.mulf %627, %243 : vector<8x256xf32>
    %cst_163 = arith.constant dense<0.000000e+00> : vector<8x32xf32>
    %629 = tpu.matmul %628, %525, %cst_163 {dimension_numbers = #tpu.dot_dimension_numbers<[1], [0], [0], [1], [0, 0, 1, 1], [], []>} : vector<8x256xf32>, vector<256x32xf32>, vector<8x32xf32> -> vector<8x32xf32>
    %cst_164 = arith.constant 0.000000e+00 : f32
    %630 = vector.broadcast %cst_164 : f32 to vector<8x32xf32>
    %631 = vector.extract_strided_slice %624 {offsets = [0, 0], sizes = [8, 8], strides = [1, 1]} : vector<8x32xf32> to vector<8x8xf32>
    %632 = vector.extract_strided_slice %625 {offsets = [0, 0], sizes = [8, 8], strides = [1, 1]} : vector<8x32xf32> to vector<8x8xf32>
    %cst_165 = arith.constant dense<0.000000e+00> : vector<8x8xf32>
    %633 = tpu.matmul %631, %632, %cst_165 {dimension_numbers = #tpu.dot_dimension_numbers<[1], [1], [0], [0], [0, 0, 1, 0], [], []>} : vector<8x8xf32>, vector<8x8xf32>, vector<8x8xf32> -> vector<8x8xf32>
    %634 = vector.extract_strided_slice %629 {offsets = [0, 0], sizes = [8, 8], strides = [1, 1]} : vector<8x32xf32> to vector<8x8xf32>
    %635 = arith.addf %633, %634 : vector<8x8xf32>
    %636 = vector.broadcast %227 : vector<1x8xf32> to vector<8x8xf32>
    %637 = arith.addf %635, %636 : vector<8x8xf32>
    %cst_166 = arith.constant dense<0xFF800000> : vector<8xf32>
    %638 = vector.multi_reduction <maximumf>, %637, %cst_166 [1] : vector<8x8xf32> to vector<8xf32>
    %639 = vector.shape_cast %638 : vector<8xf32> to vector<8x1xf32>
    %640 = vector.broadcast %639 : vector<8x1xf32> to vector<8x8xf32>
    %641 = arith.subf %637, %640 : vector<8x8xf32>
    %642 = math.exp %641 : vector<8x8xf32>
    %cst_167 = arith.constant dense<0.000000e+00> : vector<8xf32>
    %643 = vector.multi_reduction <add>, %642, %cst_167 [1] : vector<8x8xf32> to vector<8xf32>
    %644 = vector.shape_cast %643 : vector<8xf32> to vector<8x1xf32>
    %645 = vector.broadcast %644 : vector<8x1xf32> to vector<8x8xf32>
    %646 = arith.divf %642, %645 : vector<8x8xf32>
    %647 = vector.broadcast %251 : vector<1x32xf32> to vector<8x32xf32>
    %648 = arith.mulf %626, %647 : vector<8x32xf32>
    %cst_168 = arith.constant dense<0.000000e+00> : vector<8x32xf32>
    %649 = tpu.matmul %646, %648, %cst_168 {dimension_numbers = #tpu.dot_dimension_numbers<[1], [0], [0], [1], [0, 0, 1, 1], [], []>} : vector<8x8xf32>, vector<8x32xf32>, vector<8x32xf32> -> vector<8x32xf32>
    %650 = arith.addf %630, %649 : vector<8x32xf32>
    %651 = vector.extract_strided_slice %624 {offsets = [0, 8], sizes = [8, 8], strides = [1, 1]} : vector<8x32xf32> to vector<8x8xf32>
    %652 = vector.extract_strided_slice %625 {offsets = [0, 8], sizes = [8, 8], strides = [1, 1]} : vector<8x32xf32> to vector<8x8xf32>
    %cst_169 = arith.constant dense<0.000000e+00> : vector<8x8xf32>
    %653 = tpu.matmul %651, %652, %cst_169 {dimension_numbers = #tpu.dot_dimension_numbers<[1], [1], [0], [0], [0, 0, 1, 0], [], []>} : vector<8x8xf32>, vector<8x8xf32>, vector<8x8xf32> -> vector<8x8xf32>
    %654 = vector.extract_strided_slice %629 {offsets = [0, 8], sizes = [8, 8], strides = [1, 1]} : vector<8x32xf32> to vector<8x8xf32>
    %655 = arith.addf %653, %654 : vector<8x8xf32>
    %656 = vector.broadcast %227 : vector<1x8xf32> to vector<8x8xf32>
    %657 = arith.addf %655, %656 : vector<8x8xf32>
    %cst_170 = arith.constant dense<0xFF800000> : vector<8xf32>
    %658 = vector.multi_reduction <maximumf>, %657, %cst_170 [1] : vector<8x8xf32> to vector<8xf32>
    %659 = vector.shape_cast %658 : vector<8xf32> to vector<8x1xf32>
    %660 = vector.broadcast %659 : vector<8x1xf32> to vector<8x8xf32>
    %661 = arith.subf %657, %660 : vector<8x8xf32>
    %662 = math.exp %661 : vector<8x8xf32>
    %cst_171 = arith.constant dense<0.000000e+00> : vector<8xf32>
    %663 = vector.multi_reduction <add>, %662, %cst_171 [1] : vector<8x8xf32> to vector<8xf32>
    %664 = vector.shape_cast %663 : vector<8xf32> to vector<8x1xf32>
    %665 = vector.broadcast %664 : vector<8x1xf32> to vector<8x8xf32>
    %666 = arith.divf %662, %665 : vector<8x8xf32>
    %667 = vector.broadcast %258 : vector<1x32xf32> to vector<8x32xf32>
    %668 = arith.mulf %626, %667 : vector<8x32xf32>
    %cst_172 = arith.constant dense<0.000000e+00> : vector<8x32xf32>
    %669 = tpu.matmul %666, %668, %cst_172 {dimension_numbers = #tpu.dot_dimension_numbers<[1], [0], [0], [1], [0, 0, 1, 1], [], []>} : vector<8x8xf32>, vector<8x32xf32>, vector<8x32xf32> -> vector<8x32xf32>
    %670 = arith.addf %650, %669 : vector<8x32xf32>
    %671 = vector.extract_strided_slice %624 {offsets = [0, 16], sizes = [8, 8], strides = [1, 1]} : vector<8x32xf32> to vector<8x8xf32>
    %672 = vector.extract_strided_slice %625 {offsets = [0, 16], sizes = [8, 8], strides = [1, 1]} : vector<8x32xf32> to vector<8x8xf32>
    %cst_173 = arith.constant dense<0.000000e+00> : vector<8x8xf32>
    %673 = tpu.matmul %671, %672, %cst_173 {dimension_numbers = #tpu.dot_dimension_numbers<[1], [1], [0], [0], [0, 0, 1, 0], [], []>} : vector<8x8xf32>, vector<8x8xf32>, vector<8x8xf32> -> vector<8x8xf32>
    %674 = vector.extract_strided_slice %629 {offsets = [0, 16], sizes = [8, 8], strides = [1, 1]} : vector<8x32xf32> to vector<8x8xf32>
    %675 = arith.addf %673, %674 : vector<8x8xf32>
    %676 = vector.broadcast %227 : vector<1x8xf32> to vector<8x8xf32>
    %677 = arith.addf %675, %676 : vector<8x8xf32>
    %cst_174 = arith.constant dense<0xFF800000> : vector<8xf32>
    %678 = vector.multi_reduction <maximumf>, %677, %cst_174 [1] : vector<8x8xf32> to vector<8xf32>
    %679 = vector.shape_cast %678 : vector<8xf32> to vector<8x1xf32>
    %680 = vector.broadcast %679 : vector<8x1xf32> to vector<8x8xf32>
    %681 = arith.subf %677, %680 : vector<8x8xf32>
    %682 = math.exp %681 : vector<8x8xf32>
    %cst_175 = arith.constant dense<0.000000e+00> : vector<8xf32>
    %683 = vector.multi_reduction <add>, %682, %cst_175 [1] : vector<8x8xf32> to vector<8xf32>
    %684 = vector.shape_cast %683 : vector<8xf32> to vector<8x1xf32>
    %685 = vector.broadcast %684 : vector<8x1xf32> to vector<8x8xf32>
    %686 = arith.divf %682, %685 : vector<8x8xf32>
    %687 = vector.broadcast %265 : vector<1x32xf32> to vector<8x32xf32>
    %688 = arith.mulf %626, %687 : vector<8x32xf32>
    %cst_176 = arith.constant dense<0.000000e+00> : vector<8x32xf32>
    %689 = tpu.matmul %686, %688, %cst_176 {dimension_numbers = #tpu.dot_dimension_numbers<[1], [0], [0], [1], [0, 0, 1, 1], [], []>} : vector<8x8xf32>, vector<8x32xf32>, vector<8x32xf32> -> vector<8x32xf32>
    %690 = arith.addf %670, %689 : vector<8x32xf32>
    %691 = vector.extract_strided_slice %624 {offsets = [0, 24], sizes = [8, 8], strides = [1, 1]} : vector<8x32xf32> to vector<8x8xf32>
    %692 = vector.extract_strided_slice %625 {offsets = [0, 24], sizes = [8, 8], strides = [1, 1]} : vector<8x32xf32> to vector<8x8xf32>
    %cst_177 = arith.constant dense<0.000000e+00> : vector<8x8xf32>
    %693 = tpu.matmul %691, %692, %cst_177 {dimension_numbers = #tpu.dot_dimension_numbers<[1], [1], [0], [0], [0, 0, 1, 0], [], []>} : vector<8x8xf32>, vector<8x8xf32>, vector<8x8xf32> -> vector<8x8xf32>
    %694 = vector.extract_strided_slice %629 {offsets = [0, 24], sizes = [8, 8], strides = [1, 1]} : vector<8x32xf32> to vector<8x8xf32>
    %695 = arith.addf %693, %694 : vector<8x8xf32>
    %696 = vector.broadcast %227 : vector<1x8xf32> to vector<8x8xf32>
    %697 = arith.addf %695, %696 : vector<8x8xf32>
    %cst_178 = arith.constant dense<0xFF800000> : vector<8xf32>
    %698 = vector.multi_reduction <maximumf>, %697, %cst_178 [1] : vector<8x8xf32> to vector<8xf32>
    %699 = vector.shape_cast %698 : vector<8xf32> to vector<8x1xf32>
    %700 = vector.broadcast %699 : vector<8x1xf32> to vector<8x8xf32>
    %701 = arith.subf %697, %700 : vector<8x8xf32>
    %702 = math.exp %701 : vector<8x8xf32>
    %cst_179 = arith.constant dense<0.000000e+00> : vector<8xf32>
    %703 = vector.multi_reduction <add>, %702, %cst_179 [1] : vector<8x8xf32> to vector<8xf32>
    %704 = vector.shape_cast %703 : vector<8xf32> to vector<8x1xf32>
    %705 = vector.broadcast %704 : vector<8x1xf32> to vector<8x8xf32>
    %706 = arith.divf %702, %705 : vector<8x8xf32>
    %707 = vector.broadcast %272 : vector<1x32xf32> to vector<8x32xf32>
    %708 = arith.mulf %626, %707 : vector<8x32xf32>
    %cst_180 = arith.constant dense<0.000000e+00> : vector<8x32xf32>
    %709 = tpu.matmul %706, %708, %cst_180 {dimension_numbers = #tpu.dot_dimension_numbers<[1], [0], [0], [1], [0, 0, 1, 1], [], []>} : vector<8x8xf32>, vector<8x32xf32>, vector<8x32xf32> -> vector<8x32xf32>
    %710 = arith.addf %690, %709 : vector<8x32xf32>
    %711 = tpu.concatenate %623, %710 in 0 : vector<8x32xf32>, vector<8x32xf32> -> vector<16x32xf32>
    %cst_181 = arith.constant dense<0.000000e+00> : vector<16x32xf32>
    %712 = tpu.matmul %711, %522, %cst_181 {dimension_numbers = #tpu.dot_dimension_numbers<[1], [0], [0], [1], [0, 0, 1, 1], [], []>} : vector<16x32xf32>, vector<32x32xf32>, vector<16x32xf32> -> vector<16x32xf32>
    %713 = vector.broadcast %527 : vector<1x32xf32> to vector<16x32xf32>
    %714 = arith.addf %712, %713 : vector<16x32xf32>
    %715 = arith.addf %714, %520 : vector<16x32xf32>
    %cst_182 = arith.constant dense<0.000000e+00> : vector<16xf32>
    %716 = vector.multi_reduction <add>, %715, %cst_182 [1] : vector<16x32xf32> to vector<16xf32>
    %717 = vector.shape_cast %716 : vector<16xf32> to vector<16x1xf32>
    %cst_183 = arith.constant 3.200000e+01 : f32
    %718 = vector.broadcast %cst_183 : f32 to vector<16x1xf32>
    %719 = arith.divf %717, %718 : vector<16x1xf32>
    %720 = vector.broadcast %719 : vector<16x1xf32> to vector<16x32xf32>
    %721 = arith.subf %715, %720 : vector<16x32xf32>
    %722 = arith.mulf %721, %721 : vector<16x32xf32>
    %cst_184 = arith.constant dense<0.000000e+00> : vector<16xf32>
    %723 = vector.multi_reduction <add>, %722, %cst_184 [1] : vector<16x32xf32> to vector<16xf32>
    %724 = vector.shape_cast %723 : vector<16xf32> to vector<16x1xf32>
    %cst_185 = arith.constant 3.200000e+01 : f32
    %725 = vector.broadcast %cst_185 : f32 to vector<16x1xf32>
    %726 = arith.divf %724, %725 : vector<16x1xf32>
    %727 = vector.broadcast %719 : vector<16x1xf32> to vector<16x32xf32>
    %728 = arith.subf %715, %727 : vector<16x32xf32>
    %cst_186 = arith.constant 9.99999997E-7 : f32
    %729 = vector.broadcast %cst_186 : f32 to vector<16x1xf32>
    %730 = arith.addf %726, %729 : vector<16x1xf32>
    %731 = math.rsqrt %730 : vector<16x1xf32>
    %732 = vector.broadcast %731 : vector<16x1xf32> to vector<16x32xf32>
    %733 = arith.mulf %728, %732 : vector<16x32xf32>
    %734 = vector.broadcast %528 : vector<1x32xf32> to vector<16x32xf32>
    %735 = arith.mulf %733, %734 : vector<16x32xf32>
    %736 = vector.broadcast %529 : vector<1x32xf32> to vector<16x32xf32>
    %737 = arith.addf %735, %736 : vector<16x32xf32>
    %cst_187 = arith.constant dense<0.000000e+00> : vector<16x16xf32>
    %738 = tpu.matmul %737, %523, %cst_187 {dimension_numbers = #tpu.dot_dimension_numbers<[1], [0], [0], [1], [0, 0, 1, 1], [], []>} : vector<16x32xf32>, vector<32x16xf32>, vector<16x16xf32> -> vector<16x16xf32>
    %739 = vector.broadcast %530 : vector<1x16xf32> to vector<16x16xf32>
    %740 = arith.addf %738, %739 : vector<16x16xf32>
    %cst_188 = arith.constant 0.000000e+00 : f32
    %741 = vector.broadcast %cst_188 : f32 to vector<16x16xf32>
    %742 = arith.maximumf %740, %741 : vector<16x16xf32>
    %cst_189 = arith.constant dense<0.000000e+00> : vector<16x32xf32>
    %743 = tpu.matmul %742, %524, %cst_189 {dimension_numbers = #tpu.dot_dimension_numbers<[1], [0], [0], [1], [0, 0, 1, 1], [], []>} : vector<16x16xf32>, vector<16x32xf32>, vector<16x32xf32> -> vector<16x32xf32>
    %744 = vector.broadcast %531 : vector<1x32xf32> to vector<16x32xf32>
    %745 = arith.addf %743, %744 : vector<16x32xf32>
    %746 = arith.addf %737, %745 : vector<16x32xf32>
    %cst_190 = arith.constant dense<0.000000e+00> : vector<16xf32>
    %747 = vector.multi_reduction <add>, %746, %cst_190 [1] : vector<16x32xf32> to vector<16xf32>
    %748 = vector.shape_cast %747 : vector<16xf32> to vector<16x1xf32>
    %cst_191 = arith.constant 3.200000e+01 : f32
    %749 = vector.broadcast %cst_191 : f32 to vector<16x1xf32>
    %750 = arith.divf %748, %749 : vector<16x1xf32>
    %751 = vector.broadcast %750 : vector<16x1xf32> to vector<16x32xf32>
    %752 = arith.subf %746, %751 : vector<16x32xf32>
    %753 = arith.mulf %752, %752 : vector<16x32xf32>
    %cst_192 = arith.constant dense<0.000000e+00> : vector<16xf32>
    %754 = vector.multi_reduction <add>, %753, %cst_192 [1] : vector<16x32xf32> to vector<16xf32>
    %755 = vector.shape_cast %754 : vector<16xf32> to vector<16x1xf32>
    %cst_193 = arith.constant 3.200000e+01 : f32
    %756 = vector.broadcast %cst_193 : f32 to vector<16x1xf32>
    %757 = arith.divf %755, %756 : vector<16x1xf32>
    %758 = vector.broadcast %750 : vector<16x1xf32> to vector<16x32xf32>
    %759 = arith.subf %746, %758 : vector<16x32xf32>
    %cst_194 = arith.constant 9.99999997E-7 : f32
    %760 = vector.broadcast %cst_194 : f32 to vector<16x1xf32>
    %761 = arith.addf %757, %760 : vector<16x1xf32>
    %762 = math.rsqrt %761 : vector<16x1xf32>
    %763 = vector.broadcast %762 : vector<16x1xf32> to vector<16x32xf32>
    %764 = arith.mulf %759, %763 : vector<16x32xf32>
    %765 = vector.broadcast %532 : vector<1x32xf32> to vector<16x32xf32>
    %766 = arith.mulf %764, %765 : vector<16x32xf32>
    %767 = vector.broadcast %533 : vector<1x32xf32> to vector<16x32xf32>
    %768 = arith.addf %766, %767 : vector<16x32xf32>
    %c776 = arith.constant 776 : index
    %c0_195 = arith.constant 0 : index
    %769 = vector.load %arg2[%c776, %c0_195] : memref<848x128xf32, #tpu.memory_space<vmem>>, vector<32x128xf32>
    %c840 = arith.constant 840 : index
    %c0_196 = arith.constant 0 : index
    %770 = vector.load %arg2[%c840, %c0_196] : memref<848x128xf32, #tpu.memory_space<vmem>>, vector<1x128xf32>
    %cst_197 = arith.constant dense<0.000000e+00> : vector<16x128xf32>
    %771 = tpu.matmul %768, %769, %cst_197 {dimension_numbers = #tpu.dot_dimension_numbers<[1], [0], [0], [1], [0, 0, 1, 1], [], []>} : vector<16x32xf32>, vector<32x128xf32>, vector<16x128xf32> -> vector<16x128xf32>
    %772 = vector.broadcast %770 : vector<1x128xf32> to vector<16x128xf32>
    %773 = arith.addf %771, %772 : vector<16x128xf32>
    %c0_198 = arith.constant 0 : index
    %c0_199 = arith.constant 0 : index
    %774 = vector.load %arg3[%c0_198, %c0_199] : memref<16x128xf32, #tpu.memory_space<vmem>>, vector<16x128xf32>
    tpu.vector_store %arg3[%c0_198, %c0_199], %773 {strides = array<i32>} : memref<16x128xf32, #tpu.memory_space<vmem>>, vector<16x128xf32>,
    return
  }
  func.func @transform_0(%arg0: i32, %arg1: memref<16xi32, #tpu.memory_space<smem>>) -> (i32, i32) {
    %c0_i32 = arith.constant 0 : i32
    %c0_i32_0 = arith.constant 0 : i32
    %c0_i32_1 = arith.constant 0 : i32
    return %c0_i32, %c0_i32_0 : i32, i32
  }
  func.func @transform_1(%arg0: i32, %arg1: memref<16xi32, #tpu.memory_space<smem>>) -> (i32, i32) {
    %c0_i32 = arith.constant 0 : i32
    %c0_i32_0 = arith.constant 0 : i32
    %c0_i32_1 = arith.constant 0 : i32
    return %c0_i32, %c0_i32_0 : i32, i32
  }
}

</mosaic_0001>

<llo_original>
// kernel: music_transformer_forward.1
$region0: #{music_transformer_forward.1}
  #allocation0 [shape = 'u32[]', space=smem, size = 0x4, offset = 0x4, fixed_abs, tag = 'smem constant byte address 0x4 - core index']
  #allocation1 [shape = 'u32[72,128]{1,0:T(1,128)}', space=vmem, size = 0x9000, scoped, tag = 'internal scratch']
  #allocation2 [shape = 's32[1]{0}', space=sflag, size = 0x4, scoped, tag = 'scoped memory for music_transformer_forward.1']
  #allocation3 [shape = 'u8[512]{0}', space=smem, size = 0x200, scoped, tag = 'prefetched SMEM operand 0']
  %s0 = inlined_call_operand.vmem [shape: s32[16], index: 0, kind: input, shape index: {}]
  %s1 = inlined_call_operand.hbm [shape: f32[848,128], index: 1, kind: input, shape index: {}]
  %s2 = inlined_call_operand.vmem [shape: f32[16,128], index: 2, kind: output, shape index: {}]
  %s3 = sld [smem:[#allocation0]]
  $region18: #{music_transformer_forward.1} parent=0
    _
  %s5 = ssub.s32 1, %s3
  %s6 = scalar_select 0, %s5, %s3
  %s8 = sshll.u32 %s0, 4
  %s9 = int_to_ptr.vmem [resolvable:$true] %s8
  %11 = dma.vmem_to_smem %s9, 16, [#allocation3], [#allocation2]
  %13 = dma.done [#allocation2], 16
  %14 = sfence
  $region1: #{music_transformer_forward.1} parent=0
    #allocation4 [shape = 'u8[434176]{0}', space=vmem, size = 0x6a000, scoped, tag = 'input window, operand 1, single buffered']
    #allocation5 [shape = 's32[1]{0}', space=sflag, size = 0x4, scoped, tag = 'scoped memory for music_transformer_forward.1']
    %15 = vsyncpa [#allocation5], 0
    // Predicated region
    $region2: #{music_transformer_forward.1} parent=1 // pred_check
      _
    $region3: #{music_transformer_forward.1} parent=1 // pred_check_branch
      %17 = sbr.rel (0) target = $region5
    $region4: #{music_transformer_forward.1} parent=1 // pred_region
      %19 = vsyncadd [#allocation5], 0
      %s20 = sshll.u32 %s1, 4
      %s21 = int_to_ptr.hbm [resolvable:$true] %s20
      %s22 = sshll.u32 [#allocation4], 4
      %s23 = int_to_ptr.vmem [resolvable:$true] %s22
      %28 = dma.hbm_to_vmem [thread:$0]  %s21, 13568, %s23, [#allocation5], 128, 128, 8
    $region5: #{music_transformer_forward.1} parent=1 // pred_fallthru
      _
    // Predicated region
    $region6: #{music_transformer_forward.1} parent=1 // pred_check
      _
    $region7: #{music_transformer_forward.1} parent=1 // pred_check_branch
      %30 = sbr.rel (0) target = $region9
    $region8: #{music_transformer_forward.1} parent=1 // pred_region
      %32 = dma.done [#allocation5], 13568
    $region9: #{music_transformer_forward.1} parent=1 // pred_fallthru
      _
    %s33 = sld [smem:[#allocation3]]
    %s34 = sld [smem:[#allocation3 + $0x1]]
    %s35 = sld [smem:[#allocation3 + $0x2]]
    %s36 = sld [smem:[#allocation3 + $0x3]]
    %s37 = sld [smem:[#allocation3 + $0x4]]
    %s38 = sld [smem:[#allocation3 + $0x5]]
    %s39 = sld [smem:[#allocation3 + $0x6]]
    %s40 = sld [smem:[#allocation3 + $0x7]]
    %s41 = sld [smem:[#allocation3 + $0x8]]
    %s42 = sld [smem:[#allocation3 + $0x9]]
    %s43 = sld [smem:[#allocation3 + $0xa]]
    %s44 = sld [smem:[#allocation3 + $0xb]]
    %s45 = sld [smem:[#allocation3 + $0xc]]
    %s46 = sld [smem:[#allocation3 + $0xd]]
    %s47 = sld [smem:[#allocation3 + $0xe]]
    %s48 = sld [smem:[#allocation3 + $0xf]]
    %v49 = vlaneseq
    %v50 = vshrl.u32 %v49, 7
    %v51 = vadd.s32 %v50, 8
    %v52 = vlaneseq
    %v53 = vand.u32 %v52, 127
    %vm54 = vcmp.eq.s32.totalorder %v50, 0
    %vm55 = vcmp.eq.s32.totalorder %v51, 0
    %v56 = vstv %s33
    %v57 = vsel %vm54, %v56, 0
    %v58 = vsel %vm55, %v56, 0
    %vm59 = vcmp.eq.s32.totalorder %v50, 1
    %vm60 = vcmp.eq.s32.totalorder %v51, 1
    %v61 = vstv %s34
    %v62 = vsel %vm59, %v61, 0
    %v63 = vsel %vm60, %v61, 0
    %v64 = vadd.s32 %v57, %v62
    %v65 = vadd.s32 %v58, %v63
    %vm66 = vcmp.eq.s32.totalorder %v50, 2
    %vm67 = vcmp.eq.s32.totalorder %v51, 2
    %v68 = vstv %s35
    %v69 = vsel %vm66, %v68, 0
    %v70 = vsel %vm67, %v68, 0
    %v71 = vadd.s32 %v64, %v69
    %v72 = vadd.s32 %v65, %v70
    %vm73 = vcmp.eq.s32.totalorder %v50, 3
    %vm74 = vcmp.eq.s32.totalorder %v51, 3
    %v75 = vstv %s36
    %v76 = vsel %vm73, %v75, 0
    %v77 = vsel %vm74, %v75, 0
    %v78 = vadd.s32 %v71, %v76
    %v79 = vadd.s32 %v72, %v77
    %vm80 = vcmp.eq.s32.totalorder %v50, 4
    %vm81 = vcmp.eq.s32.totalorder %v51, 4
    %v82 = vstv %s37
    %v83 = vsel %vm80, %v82, 0
    %v84 = vsel %vm81, %v82, 0
    %v85 = vadd.s32 %v78, %v83
    %v86 = vadd.s32 %v79, %v84
    %vm87 = vcmp.eq.s32.totalorder %v50, 5
    %vm88 = vcmp.eq.s32.totalorder %v51, 5
    %v89 = vstv %s38
    %v90 = vsel %vm87, %v89, 0
    %v91 = vsel %vm88, %v89, 0
    %v92 = vadd.s32 %v85, %v90
    %v93 = vadd.s32 %v86, %v91
    %vm94 = vcmp.eq.s32.totalorder %v50, 6
    %vm95 = vcmp.eq.s32.totalorder %v51, 6
    %v96 = vstv %s39
    %v97 = vsel %vm94, %v96, 0
    %v98 = vsel %vm95, %v96, 0
    %v99 = vadd.s32 %v92, %v97
    %v100 = vadd.s32 %v93, %v98
    %vm101 = vcmp.eq.s32.totalorder %v50, 7
    %vm102 = vcmp.eq.s32.totalorder %v51, 7
    %v103 = vstv %s40
    %v104 = vsel %vm101, %v103, 0
    %v105 = vsel %vm102, %v103, 0
    %v106 = vadd.s32 %v99, %v104
    %v107 = vadd.s32 %v100, %v105
    %vm108 = vcmp.eq.s32.totalorder %v50, 8
    %vm109 = vcmp.eq.s32.totalorder %v51, 8
    %v110 = vstv %s41
    %v111 = vsel %vm108, %v110, 0
    %v112 = vsel %vm109, %v110, 0
    %v113 = vadd.s32 %v106, %v111
    %v114 = vadd.s32 %v107, %v112
    %vm115 = vcmp.eq.s32.totalorder %v50, 9
    %vm116 = vcmp.eq.s32.totalorder %v51, 9
    %v117 = vstv %s42
    %v118 = vsel %vm115, %v117, 0
    %v119 = vsel %vm116, %v117, 0
    %v120 = vadd.s32 %v113, %v118
    %v121 = vadd.s32 %v114, %v119
    %vm122 = vcmp.eq.s32.totalorder %v50, 10
    %vm123 = vcmp.eq.s32.totalorder %v51, 10
    %v124 = vstv %s43
    %v125 = vsel %vm122, %v124, 0
    %v126 = vsel %vm123, %v124, 0
    %v127 = vadd.s32 %v120, %v125
    %v128 = vadd.s32 %v121, %v126
    %vm129 = vcmp.eq.s32.totalorder %v50, 11
    %vm130 = vcmp.eq.s32.totalorder %v51, 11
    %v131 = vstv %s44
    %v132 = vsel %vm129, %v131, 0
    %v133 = vsel %vm130, %v131, 0
    %v134 = vadd.s32 %v127, %v132
    %v135 = vadd.s32 %v128, %v133
    %vm136 = vcmp.eq.s32.totalorder %v50, 12
    %vm137 = vcmp.eq.s32.totalorder %v51, 12
    %v138 = vstv %s45
    %v139 = vsel %vm136, %v138, 0
    %v140 = vsel %vm137, %v138, 0
    %v141 = vadd.s32 %v134, %v139
    %v142 = vadd.s32 %v135, %v140
    %vm143 = vcmp.eq.s32.totalorder %v50, 13
    %vm144 = vcmp.eq.s32.totalorder %v51, 13
    %v145 = vstv %s46
    %v146 = vsel %vm143, %v145, 0
    %v147 = vsel %vm144, %v145, 0
    %v148 = vadd.s32 %v141, %v146
    %v149 = vadd.s32 %v142, %v147
    %vm150 = vcmp.eq.s32.totalorder %v50, 14
    %vm151 = vcmp.eq.s32.totalorder %v51, 14
    %v152 = vstv %s47
    %v153 = vsel %vm150, %v152, 0
    %v154 = vsel %vm151, %v152, 0
    %v155 = vadd.s32 %v148, %v153
    %v156 = vadd.s32 %v149, %v154
    %vm157 = vcmp.eq.s32.totalorder %v50, 15
    %vm158 = vcmp.eq.s32.totalorder %v51, 15
    %v159 = vstv %s48
    %v160 = vsel %vm157, %v159, 0
    %v161 = vsel %vm158, %v159, 0
    %v162 = vadd.s32 %v155, %v160
    %v163 = vadd.s32 %v156, %v161
    %vm164 = vcmp.eq.s32.totalorder %v53, %v162
    %vm165 = vcmp.eq.s32.totalorder %v53, %v163
    %v166 = vsel %vm164, 1, 0
    %v167 = vsel %vm165, 1, 0
    %v168 = vcvt.s32.f32 %v166
    %v169 = vcvt.s32.f32 %v167
    %vm170 = vcmp.eq.s32.totalorder %v53, 0
    %v171 = vsel %vm170, %v56, 0
    %vm172 = vcmp.eq.s32.totalorder %v53, 1
    %v173 = vsel %vm172, %v61, 0
    %v174 = vadd.s32 %v171, %v173
    %vm175 = vcmp.eq.s32.totalorder %v53, 2
    %v176 = vsel %vm175, %v68, 0
    %v177 = vadd.s32 %v174, %v176
    %vm178 = vcmp.eq.s32.totalorder %v53, 3
    %v179 = vsel %vm178, %v75, 0
    %v180 = vadd.s32 %v177, %v179
    %vm181 = vcmp.eq.s32.totalorder %v53, 4
    %v182 = vsel %vm181, %v82, 0
    %v183 = vadd.s32 %v180, %v182
    %vm184 = vcmp.eq.s32.totalorder %v53, 5
    %v185 = vsel %vm184, %v89, 0
    %v186 = vadd.s32 %v183, %v185
    %vm187 = vcmp.eq.s32.totalorder %v53, 6
    %v188 = vsel %vm187, %v96, 0
    %v189 = vadd.s32 %v186, %v188
    %vm190 = vcmp.eq.s32.totalorder %v53, 7
    %v191 = vsel %vm190, %v103, 0
    %v192 = vadd.s32 %v189, %v191
    %vm193 = vcmp.eq.s32.totalorder %v192, 39
    %v194 = vsel %vm193, -1e+09, 0.0
    %v195 = vsel %vm170, %v110, 0
    %v196 = vsel %vm172, %v117, 0
    %v197 = vadd.s32 %v195, %v196
    %v198 = vsel %vm175, %v124, 0
    %v199 = vadd.s32 %v197, %v198
    %v200 = vsel %vm178, %v131, 0
    %v201 = vadd.s32 %v199, %v200
    %v202 = vsel %vm181, %v138, 0
    %v203 = vadd.s32 %v201, %v202
    %v204 = vsel %vm184, %v145, 0
    %v205 = vadd.s32 %v203, %v204
    %v206 = vsel %vm187, %v152, 0
    %v207 = vadd.s32 %v205, %v206
    %v208 = vsel %vm190, %v159, 0
    %v209 = vadd.s32 %v207, %v208
    %vm210 = vcmp.eq.s32.totalorder %v209, 39
    %v211 = vsel %vm210, -1e+09, 0.0
    %v212 = vld [vmem:[#allocation4] sm:$0xff]
    %v213 = vld [vmem:[#allocation4 + $0x8] sm:$0xff]
    %v214 = vld [vmem:[#allocation4 + $0x10] sm:$0xff]
    %v215 = vld [vmem:[#allocation4 + $0x18] sm:$0xff]
    %v216 = vld [vmem:[#allocation4 + $0x20] sm:$0xff]
    %v217 = vld [vmem:[#allocation4 + $0x328] sm:$0xff]
    %v218 = vld [vmem:[#allocation4 + $0x330] sm:$0xff]
    %vm219 = vcmask 326656
    %v221 = vsel %vm219, %v168, 0
    %v224 = vsel %vm219, %v169, 0
    %226 = vmatpush.msra.mxu0 0.0
    %227 = vmatpush.msra.mxu0 0.0
    %228 = vmatpush.msra.mxu0 0.0
    %229 = vmatpush.msra.mxu0 0.0
    %230 = vmatpush.msra.mxu0 0.0
    %231 = vmatpush.msra.mxu0 0.0
    %232 = vmatpush.msra.mxu0 0.0
    %233 = vmatpush.msra.mxu0 0.0
    %234 = vmatpush.msra.mxu0 0.0
    %235 = vmatpush.msra.mxu0 0.0
    %236 = vmatpush.msra.mxu0 0.0
    %237 = vmatpush.msra.mxu0 %v216
    %238 = vmatpush.msra.mxu0 %v215
    %239 = vmatpush.msra.mxu0 %v214
    %240 = vmatpush.msra.mxu0 %v213
    %241 = vmatpush.msra.mxu0 %v212
    %242 = vmatmul.f32.gmra.mxu0 %v221
    %v243 = vpop.f32.mrf.mxu0
    %v244 = vadd.f32 %v217, %v243
    %245 = vmatmul.f32.gmra.mxu0 %v224
    %v246 = vpop.f32.mrf.mxu0
    %v247 = vadd.f32 %v218, %v246
    %248 = vdwg.mxu0
    %v249 = vadd.s32 %v53, 128
    %v250 = vmul.u32 %v50, 32
    %v251 = vsub.s32 %v53, %v250
    %v252 = vsub.s32 %v249, %v250
    %vm253 = vcmp.ge.s32.totalorder %v251, 0
    %vm254 = vcmp.ge.s32.totalorder %v252, 0
    %vm255 = vcmp.lt.s32.totalorder %v251, 32
    %vm256 = vcmp.lt.s32.totalorder %v252, 32
    %vm257 = vmand %vm253, %vm255
    %vm258 = vmand %vm254, %vm256
    %v259 = vsel %vm257, 1, 0
    %v260 = vsel %vm258, 1, 0
    %v261 = vcvt.s32.f32 %v259
    %v262 = vcvt.s32.f32 %v260
    %vm263 = vcmp.ge.s32.totalorder %v53, 0
    %vm264 = vcmp.lt.s32.totalorder %v53, 8
    %vm265 = vmand %vm263, %vm264
    %v266 = vsel %vm265, 1, 0
    %v267 = vcvt.s32.f32 %v266
    %vm268 = vcmp.ge.s32.totalorder %v53, 8
    %vm269 = vcmp.lt.s32.totalorder %v53, 16
    %vm270 = vmand %vm268, %vm269
    %v271 = vsel %vm270, 1, 0
    %v272 = vcvt.s32.f32 %v271
    %vm273 = vcmp.ge.s32.totalorder %v53, 16
    %vm274 = vcmp.lt.s32.totalorder %v53, 24
    %vm275 = vmand %vm273, %vm274
    %v276 = vsel %vm275, 1, 0
    %v277 = vcvt.s32.f32 %v276
    %vm278 = vcmp.ge.s32.totalorder %v53, 24
    %vm279 = vcmp.lt.s32.totalorder %v53, 32
    %vm280 = vmand %vm278, %vm279
    %v281 = vsel %vm280, 1, 0
    %v282 = vcvt.s32.f32 %v281
    %v283 = vld [vmem:[#allocation4 + $0x28] sm:$0xff]
    %v284 = vld [vmem:[#allocation4 + $0x30] sm:$0xff]
    %v285 = vld [vmem:[#allocation4 + $0x38] sm:$0xff]
    %v286 = vld [vmem:[#allocation4 + $0x40] sm:$0xff]
    %v287 = vld [vmem:[#allocation4 + $0x48] sm:$0xff]
    %v288 = vld [vmem:[#allocation4 + $0x50] sm:$0xff]
    %v289 = vld [vmem:[#allocation4 + $0x58] sm:$0xff]
    %v290 = vld [vmem:[#allocation4 + $0x60] sm:$0xff]
    %v291 = vld [vmem:[#allocation4 + $0x68] sm:$0xff]
    %v292 = vld [vmem:[#allocation4 + $0x70] sm:$0xff]
    %v293 = vld [vmem:[#allocation4 + $0x78] sm:$0xff]
    %v294 = vld [vmem:[#allocation4 + $0x80] sm:$0xff]
    %v295 = vld [vmem:[#allocation4 + $0x88] sm:$0xff]
    %v296 = vld [vmem:[#allocation4 + $0x90] sm:$0xff]
    %v297 = vld [vmem:[#allocation4 + $0x98] sm:$0xff]
    %v298 = vld [vmem:[#allocation4 + $0xa0] sm:$0xff]
    %v299 = vld [vmem:[#allocation4 + $0xa8] sm:$0xff]
    %v300 = vld [vmem:[#allocation4 + $0xb0] sm:$0xff]
    %v301 = vld [vmem:[#allocation4 + $0xb8] sm:$0xff]
    %v302 = vld [vmem:[#allocation4 + $0xc0] sm:$0xff]
    %v303 = vld [vmem:[#allocation4 + $0xc8] sm:$0xff]
    %v304 = vld [vmem:[#allocation4 + $0xd0] sm:$0xff]
    %v305 = vld [vmem:[#allocation4 + $0xd8] sm:$0xff]
    %v306 = vld [vmem:[#allocation4 + $0xe0] sm:$0xff]
    %v307 = vld [vmem:[#allocation4 + $0xe8] sm:$0xff]
    %v308 = vld [vmem:[#allocation4 + $0xf0] sm:$0xff]
    %v309 = vld [vmem:[#allocation4 + $0xf8] sm:$0xff]
    %v310 = vld [vmem:[#allocation4 + $0x100] sm:$0xff]
    %v311 = vld [vmem:[#allocation4 + $0x108] sm:$0xff]
    %v312 = vld [vmem:[#allocation4 + $0x110] sm:$0xff]
    %v313 = vld [vmem:[#allocation4 + $0x118] sm:$0xff]
    %v314 = vld [vmem:[#allocation4 + $0x120] sm:$0xff]
    %v315 = vld [vmem:[#allocation4 + $0x128] sm:$0xff]
    %v316 = vld [vmem:[#allocation4 + $0x130] sm:$0xff]
    %v317 = vld [vmem:[#allocation4 + $0x138] sm:$0xff]
    %v318 = vld [vmem:[#allocation4 + $0x140] sm:$0xff]
    %v319 = vld [vmem:[#allocation4 + $0x148] sm:$0xff]
    %v320 = vld [vmem:[#allocation4 + $0x150] sm:$0xff]
    %v321 = vld [vmem:[#allocation4 + $0x158] sm:$0xff]
    %v322 = vld [vmem:[#allocation4 + $0x160] sm:$0xff]
    %v323 = vld [vmem:[#allocation4 + $0x168] sm:$0xff]
    %v324 = vld [vmem:[#allocation4 + $0x170] sm:$0xff]
    %v325 = vld [vmem:[#allocation4 + $0x178] sm:$0xff]
    %v326 = vld [vmem:[#allocation4 + $0x180] sm:$0xff]
    %v327 = vld [vmem:[#allocation4 + $0x188] sm:$0xff]
    %v328 = vld [vmem:[#allocation4 + $0x190] sm:$0xff]
    %v329 = vld [vmem:[#allocation4 + $0x338] sm:$0x1]
    %v330 = vld [vmem:[#allocation4 + $0x339] sm:$0x1]
    %v331 = vld [vmem:[#allocation4 + $0x33a] sm:$0x1]
    %v332 = vld [vmem:[#allocation4 + $0x33b] sm:$0x1]
    %v333 = vld [vmem:[#allocation4 + $0x33c] sm:$0x1]
    %v334 = vld [vmem:[#allocation4 + $0x33d] sm:$0x1]
    %v335 = vld [vmem:[#allocation4 + $0x33e] sm:$0x1]
    %v336 = vld [vmem:[#allocation4 + $0x33f] sm:$0x1]
    %v337 = vperm.slane %v329, 0
    %vm338 = vcmask 261120
    %v340 = vsel %vm338, %v244, 0
    %v343 = vsel %vm338, %v247, 0
    %345 = vmatpush.msra.mxu0 0.0
    %346 = vmatpush.msra.mxu0 0.0
    %347 = vmatpush.msra.mxu0 0.0
    %348 = vmatpush.msra.mxu0 0.0
    %349 = vmatpush.msra.mxu0 0.0
    %350 = vmatpush.msra.mxu0 0.0
    %351 = vmatpush.msra.mxu0 0.0
    %352 = vmatpush.msra.mxu0 0.0
    %353 = vmatpush.msra.mxu0 0.0
    %354 = vmatpush.msra.mxu0 0.0
    %355 = vmatpush.msra.mxu0 0.0
    %356 = vmatpush.msra.mxu0 0.0
    %357 = vmatpush.msra.mxu0 %v286
    %358 = vmatpush.msra.mxu0 %v285
    %359 = vmatpush.msra.mxu0 %v284
    %360 = vmatpush.msra.mxu0 %v283
    %361 = vmatmul.f32.gmra.mxu0 %v340
    %v362 = vpop.f32.mrf.mxu0
    %v363 = vadd.f32 %v337, %v362
    %364 = vmatmul.f32.gmra.mxu0 %v343
    %v365 = vpop.f32.mrf.mxu0
    %v366 = vadd.f32 %v337, %v365
    %367 = vdwg.mxu0
    %369 = vrot.lane.b32.xlu0 %v363, 32
    %v370 = vpop.permute.xlu0 %369
    %372 = vrot.lane.b32.xlu0 %v363, 64
    %v373 = vpop.permute.xlu0 %372
    %375 = vrot.lane.b32.xlu0 %v363, 96
    %v376 = vpop.permute.xlu0 %375
    %v378 = vsel %vm338, %v363, %v370
    %vm379 = vcmask 523264
    %v380 = vsel %vm379, %v378, %v373
    %vm381 = vcmask 785408
    %v382 = vsel %vm381, %v380, %v376
    %v383 = vmul.f32 %v382, %v261
    %v384 = vmul.f32 %v382, %v262
    %385 = vmatpush.msra.mxu0 %v312
    %386 = vmatpush.msra.mxu0 %v311
    %387 = vmatpush.msra.mxu0 %v310
    %388 = vmatpush.msra.mxu0 %v309
    %389 = vmatpush.msra.mxu0 %v308
    %390 = vmatpush.msra.mxu0 %v307
    %391 = vmatpush.msra.mxu0 %v306
    %392 = vmatpush.msra.mxu0 %v305
    %393 = vmatpush.msra.mxu0 %v304
    %394 = vmatpush.msra.mxu0 %v303
    %395 = vmatpush.msra.mxu0 %v302
    %396 = vmatpush.msra.mxu0 %v301
    %397 = vmatpush.msra.mxu0 %v300
    %398 = vmatpush.msra.mxu0 %v299
    %399 = vmatpush.msra.mxu0 %v298
    %400 = vmatpush.msra.mxu0 %v297
    %401 = vmatmul.f32.gmra.mxu0 %v383
    %v402 = vpop.f32.mrf.mxu0
    %v403 = vadd.f32 0.0, %v402
    %404 = vdwg.mxu0
    %405 = vmatpush.msra.mxu0 %v328
    %406 = vmatpush.msra.mxu0 %v327
    %407 = vmatpush.msra.mxu0 %v326
    %408 = vmatpush.msra.mxu0 %v325
    %409 = vmatpush.msra.mxu0 %v324
    %410 = vmatpush.msra.mxu0 %v323
    %411 = vmatpush.msra.mxu0 %v322
    %412 = vmatpush.msra.mxu0 %v321
    %413 = vmatpush.msra.mxu0 %v320
    %414 = vmatpush.msra.mxu0 %v319
    %415 = vmatpush.msra.mxu0 %v318
    %416 = vmatpush.msra.mxu0 %v317
    %417 = vmatpush.msra.mxu0 %v316
    %418 = vmatpush.msra.mxu0 %v315
    %419 = vmatpush.msra.mxu0 %v314
    %420 = vmatpush.msra.mxu0 %v313
    %421 = vmatmul.f32.gmra.mxu0 %v384
    %v422 = vpop.f32.mrf.mxu0
    %v423 = vadd.f32 %v403, %v422
    %424 = vdwg.mxu0
    %vm425 = vcmask 64512
    %v426 = vsel %vm425, %v363, 0
    %v428 = vsel %vm425, %v376, 0
    %430 = vmatpush.xpose.msra.mxu0 0.0
    %431 = vmatpush.xpose.msra.mxu0 0.0
    %432 = vmatpush.xpose.msra.mxu0 0.0
    %433 = vmatpush.xpose.msra.mxu0 0.0
    %434 = vmatpush.xpose.msra.mxu0 0.0
    %435 = vmatpush.xpose.msra.mxu0 0.0
    %436 = vmatpush.xpose.msra.mxu0 0.0
    %437 = vmatpush.xpose.msra.mxu0 0.0
    %438 = vmatpush.xpose.msra.mxu0 0.0
    %439 = vmatpush.xpose.msra.mxu0 0.0
    %440 = vmatpush.xpose.msra.mxu0 0.0
    %441 = vmatpush.xpose.msra.mxu0 0.0
    %442 = vmatpush.xpose.msra.mxu0 0.0
    %443 = vmatpush.xpose.msra.mxu0 0.0
    %444 = vmatpush.xpose.msra.mxu0 0.0
    %445 = vmatpush.xpose.msra.mxu0 %v428
    %446 = vmatmul.f32.gmra.mxu0 %v426
    %v447 = vpop.f32.mrf.mxu0
    %v448 = vadd.f32 %v423, %v447
    %449 = vdwg.mxu0
    %v450 = vadd.f32 %v448, %v194
    %v451 = vsel %vm425, %v450, -inf
    %452 = vmax.xlane.f32.xlu0 %v451
    %v453 = vpop.xlane.xlu0 %452
    %v454 = vsub.f32 %v450, %v453
    %v455 = vmul.f32 %v454, 1.442695
    %v456 = vpow.pop %v455
    %v457 = vsel %vm425, %v456, 0.0
    %458 = vadd.xlane.f32.xlu0 %v457
    %v459 = vpop.xlane.xlu0 %458
    %v460 = vrcp.pop %v459
    %v461 = vmul.f32 %v459, %v460
    %v462 = vsub.f32 1.0, %v461
    %v463 = vmul.f32 %v460, %v462
    %v464 = vadd.f32 %v460, %v463
    %vm465 = vweird.f32 %v459
    %vm466 = vweird.f32 %v460
    %vm467 = vmor %vm465, %vm466
    %v468 = vsel %vm467, %v460, %v464
    %v469 = vand.u32 2147483647, %v459
    %vm470 = vcmp.eq.f32.partialorder %v469, 8.507059e+37
    %v471 = vand.u32 %v459, 2147483648
    %v472 = vor.u32 1.1754944e-38, %v471
    %v473 = vsel %vm470, %v472, %v468
    %v474 = vmul.f32 %v456, %v473
    %476 = vrot.lane.b32.xlu0 %v267, 64
    %v477 = vpop.permute.xlu0 %476
    %v479 = vmul.f32 %v363, %v477
    %480 = vrot.lane.b32.xlu0 %v363, 120
    %v481 = vpop.permute.xlu0 %480
    %482 = vrot.lane.b32.xlu0 %v363, 88
    %v483 = vpop.permute.xlu0 %482
    %485 = vrot.lane.b32.xlu0 %v423, 120
    %v486 = vpop.permute.xlu0 %485
    %v488 = vsel %vm425, %v481, 0
    %v490 = vsel %vm425, %v483, 0
    %492 = vmatpush.xpose.msra.mxu0 0.0
    %493 = vmatpush.xpose.msra.mxu0 0.0
    %494 = vmatpush.xpose.msra.mxu0 0.0
    %495 = vmatpush.xpose.msra.mxu0 0.0
    %496 = vmatpush.xpose.msra.mxu0 0.0
    %497 = vmatpush.xpose.msra.mxu0 0.0
    %498 = vmatpush.xpose.msra.mxu0 0.0
    %499 = vmatpush.xpose.msra.mxu0 0.0
    %500 = vmatpush.xpose.msra.mxu0 0.0
    %501 = vmatpush.xpose.msra.mxu0 0.0
    %502 = vmatpush.xpose.msra.mxu0 0.0
    %503 = vmatpush.xpose.msra.mxu0 0.0
    %504 = vmatpush.xpose.msra.mxu0 0.0
    %505 = vmatpush.xpose.msra.mxu0 0.0
    %506 = vmatpush.xpose.msra.mxu0 0.0
    %507 = vmatpush.xpose.msra.mxu0 %v490
    %508 = vmatmul.f32.gmra.mxu0 %v488
    %v509 = vpop.f32.mrf.mxu0
    %v510 = vadd.f32 %v486, %v509
    %511 = vdwg.mxu0
    %v512 = vadd.f32 %v510, %v194
    %v513 = vsel %vm425, %v512, -inf
    %514 = vmax.xlane.f32.xlu0 %v513
    %v515 = vpop.xlane.xlu0 %514
    %v516 = vsub.f32 %v512, %v515
    %v517 = vmul.f32 %v516, 1.442695
    %v518 = vpow.pop %v517
    %v519 = vsel %vm425, %v518, 0.0
    %520 = vadd.xlane.f32.xlu0 %v519
    %v521 = vpop.xlane.xlu0 %520
    %v522 = vrcp.pop %v521
    %v523 = vmul.f32 %v521, %v522
    %v524 = vsub.f32 1.0, %v523
    %v525 = vmul.f32 %v522, %v524
    %v526 = vadd.f32 %v522, %v525
    %vm527 = vweird.f32 %v521
    %vm528 = vweird.f32 %v522
    %vm529 = vmor %vm527, %vm528
    %v530 = vsel %vm529, %v522, %v526
    %v531 = vand.u32 2147483647, %v521
    %vm532 = vcmp.eq.f32.partialorder %v531, 8.507059e+37
    %v533 = vand.u32 %v521, 2147483648
    %v534 = vor.u32 1.1754944e-38, %v533
    %v535 = vsel %vm532, %v534, %v530
    %v536 = vmul.f32 %v518, %v535
    %538 = vrot.lane.b32.xlu0 %v272, 64
    %v539 = vpop.permute.xlu0 %538
    %v541 = vmul.f32 %v363, %v539
    %543 = vrot.lane.b32.xlu0 %v541, 64
    %v544 = vpop.permute.xlu0 %543
    %v547 = vsel %vm425, %v536, 0
    %549 = vmatpush.msra.mxu0 0.0
    %550 = vmatpush.msra.mxu0 0.0
    %551 = vmatpush.msra.mxu0 0.0
    %552 = vmatpush.msra.mxu0 0.0
    %553 = vmatpush.msra.mxu0 0.0
    %554 = vmatpush.msra.mxu0 0.0
    %555 = vmatpush.msra.mxu0 0.0
    %556 = vmatpush.msra.mxu0 0.0
    %557 = vmatpush.msra.mxu0 0.0
    %558 = vmatpush.msra.mxu0 0.0
    %559 = vmatpush.msra.mxu0 0.0
    %560 = vmatpush.msra.mxu0 0.0
    %561 = vmatpush.msra.mxu0 0.0
    %562 = vmatpush.msra.mxu0 0.0
    %563 = vmatpush.msra.mxu0 0.0
    %564 = vmatpush.msra.mxu0 %v544
    %565 = vmatmul.f32.gmra.mxu0 %v547
    %v566 = vpop.f32.mrf.mxu0
    %v567 = vadd.f32 0.0, %v566
    %568 = vdwg.mxu0
    %570 = vrot.lane.b32.xlu0 %v479, 64
    %v571 = vpop.permute.xlu0 %570
    %v574 = vsel %vm425, %v474, 0
    %576 = vmatpush.msra.mxu0 0.0
    %577 = vmatpush.msra.mxu0 0.0
    %578 = vmatpush.msra.mxu0 0.0
    %579 = vmatpush.msra.mxu0 0.0
    %580 = vmatpush.msra.mxu0 0.0
    %581 = vmatpush.msra.mxu0 0.0
    %582 = vmatpush.msra.mxu0 0.0
    %583 = vmatpush.msra.mxu0 0.0
    %584 = vmatpush.msra.mxu0 0.0
    %585 = vmatpush.msra.mxu0 0.0
    %586 = vmatpush.msra.mxu0 0.0
    %587 = vmatpush.msra.mxu0 0.0
    %588 = vmatpush.msra.mxu0 0.0
    %589 = vmatpush.msra.mxu0 0.0
    %590 = vmatpush.msra.mxu0 0.0
    %591 = vmatpush.msra.mxu0 %v571
    %592 = vmatmul.f32.gmra.mxu0 %v574
    %v593 = vpop.f32.mrf.mxu0
    %v594 = vadd.f32 %v567, %v593
    %595 = vdwg.mxu0
    %596 = vrot.lane.b32.xlu0 %v363, 112
    %v597 = vpop.permute.xlu0 %596
    %598 = vrot.lane.b32.xlu0 %v363, 80
    %v599 = vpop.permute.xlu0 %598
    %600 = vrot.lane.b32.xlu0 %v423, 112
    %v601 = vpop.permute.xlu0 %600
    %v603 = vsel %vm425, %v597, 0
    %v605 = vsel %vm425, %v599, 0
    %607 = vmatpush.xpose.msra.mxu0 0.0
    %608 = vmatpush.xpose.msra.mxu0 0.0
    %609 = vmatpush.xpose.msra.mxu0 0.0
    %610 = vmatpush.xpose.msra.mxu0 0.0
    %611 = vmatpush.xpose.msra.mxu0 0.0
    %612 = vmatpush.xpose.msra.mxu0 0.0
    %613 = vmatpush.xpose.msra.mxu0 0.0
    %614 = vmatpush.xpose.msra.mxu0 0.0
    %615 = vmatpush.xpose.msra.mxu0 0.0
    %616 = vmatpush.xpose.msra.mxu0 0.0
    %617 = vmatpush.xpose.msra.mxu0 0.0
    %618 = vmatpush.xpose.msra.mxu0 0.0
    %619 = vmatpush.xpose.msra.mxu0 0.0
    %620 = vmatpush.xpose.msra.mxu0 0.0
    %621 = vmatpush.xpose.msra.mxu0 0.0
    %622 = vmatpush.xpose.msra.mxu0 %v605
    %623 = vmatmul.f32.gmra.mxu0 %v603
    %v624 = vpop.f32.mrf.mxu0
    %v625 = vadd.f32 %v601, %v624
    %626 = vdwg.mxu0
    %v627 = vadd.f32 %v625, %v194
    %v628 = vsel %vm425, %v627, -inf
    %629 = vmax.xlane.f32.xlu0 %v628
    %v630 = vpop.xlane.xlu0 %629
    %v631 = vsub.f32 %v627, %v630
    %v632 = vmul.f32 %v631, 1.442695
    %v633 = vpow.pop %v632
    %v634 = vsel %vm425, %v633, 0.0
    %635 = vadd.xlane.f32.xlu0 %v634
    %v636 = vpop.xlane.xlu0 %635
    %v637 = vrcp.pop %v636
    %v638 = vmul.f32 %v636, %v637
    %v639 = vsub.f32 1.0, %v638
    %v640 = vmul.f32 %v637, %v639
    %v641 = vadd.f32 %v637, %v640
    %vm642 = vweird.f32 %v636
    %vm643 = vweird.f32 %v637
    %vm644 = vmor %vm642, %vm643
    %v645 = vsel %vm644, %v637, %v641
    %v646 = vand.u32 2147483647, %v636
    %vm647 = vcmp.eq.f32.partialorder %v646, 8.507059e+37
    %v648 = vand.u32 %v636, 2147483648
    %v649 = vor.u32 1.1754944e-38, %v648
    %v650 = vsel %vm647, %v649, %v645
    %v651 = vmul.f32 %v633, %v650
    %653 = vrot.lane.b32.xlu0 %v277, 64
    %v654 = vpop.permute.xlu0 %653
    %v656 = vmul.f32 %v363, %v654
    %658 = vrot.lane.b32.xlu0 %v656, 64
    %v659 = vpop.permute.xlu0 %658
    %v662 = vsel %vm425, %v651, 0
    %664 = vmatpush.msra.mxu0 0.0
    %665 = vmatpush.msra.mxu0 0.0
    %666 = vmatpush.msra.mxu0 0.0
    %667 = vmatpush.msra.mxu0 0.0
    %668 = vmatpush.msra.mxu0 0.0
    %669 = vmatpush.msra.mxu0 0.0
    %670 = vmatpush.msra.mxu0 0.0
    %671 = vmatpush.msra.mxu0 0.0
    %672 = vmatpush.msra.mxu0 0.0
    %673 = vmatpush.msra.mxu0 0.0
    %674 = vmatpush.msra.mxu0 0.0
    %675 = vmatpush.msra.mxu0 0.0
    %676 = vmatpush.msra.mxu0 0.0
    %677 = vmatpush.msra.mxu0 0.0
    %678 = vmatpush.msra.mxu0 0.0
    %679 = vmatpush.msra.mxu0 %v659
    %680 = vmatmul.f32.gmra.mxu0 %v662
    %v681 = vpop.f32.mrf.mxu0
    %v682 = vadd.f32 0.0, %v681
    %683 = vdwg.mxu0
    %v684 = vadd.f32 %v594, %v682
    %685 = vrot.lane.b32.xlu0 %v363, 104
    %v686 = vpop.permute.xlu0 %685
    %687 = vrot.lane.b32.xlu0 %v363, 72
    %v688 = vpop.permute.xlu0 %687
    %689 = vrot.lane.b32.xlu0 %v423, 104
    %v690 = vpop.permute.xlu0 %689
    %v692 = vsel %vm425, %v686, 0
    %v694 = vsel %vm425, %v688, 0
    %696 = vmatpush.xpose.msra.mxu0 0.0
    %697 = vmatpush.xpose.msra.mxu0 0.0
    %698 = vmatpush.xpose.msra.mxu0 0.0
    %699 = vmatpush.xpose.msra.mxu0 0.0
    %700 = vmatpush.xpose.msra.mxu0 0.0
    %701 = vmatpush.xpose.msra.mxu0 0.0
    %702 = vmatpush.xpose.msra.mxu0 0.0
    %703 = vmatpush.xpose.msra.mxu0 0.0
    %704 = vmatpush.xpose.msra.mxu0 0.0
    %705 = vmatpush.xpose.msra.mxu0 0.0
    %706 = vmatpush.xpose.msra.mxu0 0.0
    %707 = vmatpush.xpose.msra.mxu0 0.0
    %708 = vmatpush.xpose.msra.mxu0 0.0
    %709 = vmatpush.xpose.msra.mxu0 0.0
    %710 = vmatpush.xpose.msra.mxu0 0.0
    %711 = vmatpush.xpose.msra.mxu0 %v694
    %712 = vmatmul.f32.gmra.mxu0 %v692
    %v713 = vpop.f32.mrf.mxu0
    %v714 = vadd.f32 %v690, %v713
    %715 = vdwg.mxu0
    %v716 = vadd.f32 %v714, %v194
    %v717 = vsel %vm425, %v716, -inf
    %718 = vmax.xlane.f32.xlu0 %v717
    %v719 = vpop.xlane.xlu0 %718
    %v720 = vsub.f32 %v716, %v719
    %v721 = vmul.f32 %v720, 1.442695
    %v722 = vpow.pop %v721
    %v723 = vsel %vm425, %v722, 0.0
    %724 = vadd.xlane.f32.xlu0 %v723
    %v725 = vpop.xlane.xlu0 %724
    %v726 = vrcp.pop %v725
    %v727 = vmul.f32 %v725, %v726
    %v728 = vsub.f32 1.0, %v727
    %v729 = vmul.f32 %v726, %v728
    %v730 = vadd.f32 %v726, %v729
    %vm731 = vweird.f32 %v725
    %vm732 = vweird.f32 %v726
    %vm733 = vmor %vm731, %vm732
    %v734 = vsel %vm733, %v726, %v730
    %v735 = vand.u32 2147483647, %v725
    %vm736 = vcmp.eq.f32.partialorder %v735, 8.507059e+37
    %v737 = vand.u32 %v725, 2147483648
    %v738 = vor.u32 1.1754944e-38, %v737
    %v739 = vsel %vm736, %v738, %v734
    %v740 = vmul.f32 %v722, %v739
    %742 = vrot.lane.b32.xlu0 %v282, 64
    %v743 = vpop.permute.xlu0 %742
    %v745 = vmul.f32 %v363, %v743
    %747 = vrot.lane.b32.xlu0 %v745, 64
    %v748 = vpop.permute.xlu0 %747
    %v751 = vsel %vm425, %v740, 0
    %753 = vmatpush.msra.mxu0 0.0
    %754 = vmatpush.msra.mxu0 0.0
    %755 = vmatpush.msra.mxu0 0.0
    %756 = vmatpush.msra.mxu0 0.0
    %757 = vmatpush.msra.mxu0 0.0
    %758 = vmatpush.msra.mxu0 0.0
    %759 = vmatpush.msra.mxu0 0.0
    %760 = vmatpush.msra.mxu0 0.0
    %761 = vmatpush.msra.mxu0 0.0
    %762 = vmatpush.msra.mxu0 0.0
    %763 = vmatpush.msra.mxu0 0.0
    %764 = vmatpush.msra.mxu0 0.0
    %765 = vmatpush.msra.mxu0 0.0
    %766 = vmatpush.msra.mxu0 0.0
    %767 = vmatpush.msra.mxu0 0.0
    %768 = vmatpush.msra.mxu0 %v748
    %769 = vmatmul.f32.gmra.mxu0 %v751
    %v770 = vpop.f32.mrf.mxu0
    %v771 = vadd.f32 0.0, %v770
    %772 = vdwg.mxu0
    %v773 = vadd.f32 %v684, %v771
    %775 = vrot.lane.b32.xlu0 %v366, 32
    %v776 = vpop.permute.xlu0 %775
    %778 = vrot.lane.b32.xlu0 %v366, 64
    %v779 = vpop.permute.xlu0 %778
    %781 = vrot.lane.b32.xlu0 %v366, 96
    %v782 = vpop.permute.xlu0 %781
    %v784 = vsel %vm338, %v366, %v776
    %v785 = vsel %vm379, %v784, %v779
    %v786 = vsel %vm381, %v785, %v782
    %v787 = vmul.f32 %v786, %v261
    %v788 = vmul.f32 %v786, %v262
    %789 = vmatpush.msra.mxu0 %v312
    %790 = vmatpush.msra.mxu0 %v311
    %791 = vmatpush.msra.mxu0 %v310
    %792 = vmatpush.msra.mxu0 %v309
    %793 = vmatpush.msra.mxu0 %v308
    %794 = vmatpush.msra.mxu0 %v307
    %795 = vmatpush.msra.mxu0 %v306
    %796 = vmatpush.msra.mxu0 %v305
    %797 = vmatpush.msra.mxu0 %v304
    %798 = vmatpush.msra.mxu0 %v303
    %799 = vmatpush.msra.mxu0 %v302
    %800 = vmatpush.msra.mxu0 %v301
    %801 = vmatpush.msra.mxu0 %v300
    %802 = vmatpush.msra.mxu0 %v299
    %803 = vmatpush.msra.mxu0 %v298
    %804 = vmatpush.msra.mxu0 %v297
    %805 = vmatmul.f32.gmra.mxu0 %v787
    %v806 = vpop.f32.mrf.mxu0
    %v807 = vadd.f32 0.0, %v806
    %808 = vdwg.mxu0
    %809 = vmatpush.msra.mxu0 %v328
    %810 = vmatpush.msra.mxu0 %v327
    %811 = vmatpush.msra.mxu0 %v326
    %812 = vmatpush.msra.mxu0 %v325
    %813 = vmatpush.msra.mxu0 %v324
    %814 = vmatpush.msra.mxu0 %v323
    %815 = vmatpush.msra.mxu0 %v322
    %816 = vmatpush.msra.mxu0 %v321
    %817 = vmatpush.msra.mxu0 %v320
    %818 = vmatpush.msra.mxu0 %v319
    %819 = vmatpush.msra.mxu0 %v318
    %820 = vmatpush.msra.mxu0 %v317
    %821 = vmatpush.msra.mxu0 %v316
    %822 = vmatpush.msra.mxu0 %v315
    %823 = vmatpush.msra.mxu0 %v314
    %824 = vmatpush.msra.mxu0 %v313
    %825 = vmatmul.f32.gmra.mxu0 %v788
    %v826 = vpop.f32.mrf.mxu0
    %v827 = vadd.f32 %v807, %v826
    %828 = vdwg.mxu0
    %v829 = vsel %vm425, %v366, 0
    %v831 = vsel %vm425, %v782, 0
    %833 = vmatpush.xpose.msra.mxu0 0.0
    %834 = vmatpush.xpose.msra.mxu0 0.0
    %835 = vmatpush.xpose.msra.mxu0 0.0
    %836 = vmatpush.xpose.msra.mxu0 0.0
    %837 = vmatpush.xpose.msra.mxu0 0.0
    %838 = vmatpush.xpose.msra.mxu0 0.0
    %839 = vmatpush.xpose.msra.mxu0 0.0
    %840 = vmatpush.xpose.msra.mxu0 0.0
    %841 = vmatpush.xpose.msra.mxu0 0.0
    %842 = vmatpush.xpose.msra.mxu0 0.0
    %843 = vmatpush.xpose.msra.mxu0 0.0
    %844 = vmatpush.xpose.msra.mxu0 0.0
    %845 = vmatpush.xpose.msra.mxu0 0.0
    %846 = vmatpush.xpose.msra.mxu0 0.0
    %847 = vmatpush.xpose.msra.mxu0 0.0
    %848 = vmatpush.xpose.msra.mxu0 %v831
    %849 = vmatmul.f32.gmra.mxu0 %v829
    %v850 = vpop.f32.mrf.mxu0
    %v851 = vadd.f32 %v827, %v850
    %852 = vdwg.mxu0
    %v853 = vadd.f32 %v851, %v211
    %v854 = vsel %vm425, %v853, -inf
    %855 = vmax.xlane.f32.xlu0 %v854
    %v856 = vpop.xlane.xlu0 %855
    %v857 = vsub.f32 %v853, %v856
    %v858 = vmul.f32 %v857, 1.442695
    %v859 = vpow.pop %v858
    %v860 = vsel %vm425, %v859, 0.0
    %861 = vadd.xlane.f32.xlu0 %v860
    %v862 = vpop.xlane.xlu0 %861
    %v863 = vrcp.pop %v862
    %v864 = vmul.f32 %v862, %v863
    %v865 = vsub.f32 1.0, %v864
    %v866 = vmul.f32 %v863, %v865
    %v867 = vadd.f32 %v863, %v866
    %vm868 = vweird.f32 %v862
    %vm869 = vweird.f32 %v863
    %vm870 = vmor %vm868, %vm869
    %v871 = vsel %vm870, %v863, %v867
    %v872 = vand.u32 2147483647, %v862
    %vm873 = vcmp.eq.f32.partialorder %v872, 8.507059e+37
    %v874 = vand.u32 %v862, 2147483648
    %v875 = vor.u32 1.1754944e-38, %v874
    %v876 = vsel %vm873, %v875, %v871
    %v877 = vmul.f32 %v859, %v876
    %v878 = vmul.f32 %v366, %v477
    %879 = vrot.lane.b32.xlu0 %v366, 120
    %v880 = vpop.permute.xlu0 %879
    %881 = vrot.lane.b32.xlu0 %v366, 88
    %v882 = vpop.permute.xlu0 %881
    %884 = vrot.lane.b32.xlu0 %v827, 120
    %v885 = vpop.permute.xlu0 %884
    %v887 = vsel %vm425, %v880, 0
    %v889 = vsel %vm425, %v882, 0
    %891 = vmatpush.xpose.msra.mxu0 0.0
    %892 = vmatpush.xpose.msra.mxu0 0.0
    %893 = vmatpush.xpose.msra.mxu0 0.0
    %894 = vmatpush.xpose.msra.mxu0 0.0
    %895 = vmatpush.xpose.msra.mxu0 0.0
    %896 = vmatpush.xpose.msra.mxu0 0.0
    %897 = vmatpush.xpose.msra.mxu0 0.0
    %898 = vmatpush.xpose.msra.mxu0 0.0
    %899 = vmatpush.xpose.msra.mxu0 0.0
    %900 = vmatpush.xpose.msra.mxu0 0.0
    %901 = vmatpush.xpose.msra.mxu0 0.0
    %902 = vmatpush.xpose.msra.mxu0 0.0
    %903 = vmatpush.xpose.msra.mxu0 0.0
    %904 = vmatpush.xpose.msra.mxu0 0.0
    %905 = vmatpush.xpose.msra.mxu0 0.0
    %906 = vmatpush.xpose.msra.mxu0 %v889
    %907 = vmatmul.f32.gmra.mxu0 %v887
    %v908 = vpop.f32.mrf.mxu0
    %v909 = vadd.f32 %v885, %v908
    %910 = vdwg.mxu0
    %v911 = vadd.f32 %v909, %v211
    %v912 = vsel %vm425, %v911, -inf
    %913 = vmax.xlane.f32.xlu0 %v912
    %v914 = vpop.xlane.xlu0 %913
    %v915 = vsub.f32 %v911, %v914
    %v916 = vmul.f32 %v915, 1.442695
    %v917 = vpow.pop %v916
    %v918 = vsel %vm425, %v917, 0.0
    %919 = vadd.xlane.f32.xlu0 %v918
    %v920 = vpop.xlane.xlu0 %919
    %v921 = vrcp.pop %v920
    %v922 = vmul.f32 %v920, %v921
    %v923 = vsub.f32 1.0, %v922
    %v924 = vmul.f32 %v921, %v923
    %v925 = vadd.f32 %v921, %v924
    %vm926 = vweird.f32 %v920
    %vm927 = vweird.f32 %v921
    %vm928 = vmor %vm926, %vm927
    %v929 = vsel %vm928, %v921, %v925
    %v930 = vand.u32 2147483647, %v920
    %vm931 = vcmp.eq.f32.partialorder %v930, 8.507059e+37
    %v932 = vand.u32 %v920, 2147483648
    %v933 = vor.u32 1.1754944e-38, %v932
    %v934 = vsel %vm931, %v933, %v929
    %v935 = vmul.f32 %v917, %v934
    %v936 = vmul.f32 %v366, %v539
    %938 = vrot.lane.b32.xlu0 %v936, 64
    %v939 = vpop.permute.xlu0 %938
    %v942 = vsel %vm425, %v935, 0
    %944 = vmatpush.msra.mxu0 0.0
    %945 = vmatpush.msra.mxu0 0.0
    %946 = vmatpush.msra.mxu0 0.0
    %947 = vmatpush.msra.mxu0 0.0
    %948 = vmatpush.msra.mxu0 0.0
    %949 = vmatpush.msra.mxu0 0.0
    %950 = vmatpush.msra.mxu0 0.0
    %951 = vmatpush.msra.mxu0 0.0
    %952 = vmatpush.msra.mxu0 0.0
    %953 = vmatpush.msra.mxu0 0.0
    %954 = vmatpush.msra.mxu0 0.0
    %955 = vmatpush.msra.mxu0 0.0
    %956 = vmatpush.msra.mxu0 0.0
    %957 = vmatpush.msra.mxu0 0.0
    %958 = vmatpush.msra.mxu0 0.0
    %959 = vmatpush.msra.mxu0 %v939
    %960 = vmatmul.f32.gmra.mxu0 %v942
    %v961 = vpop.f32.mrf.mxu0
    %v962 = vadd.f32 0.0, %v961
    %963 = vdwg.mxu0
    %965 = vrot.lane.b32.xlu0 %v878, 64
    %v966 = vpop.permute.xlu0 %965
    %v969 = vsel %vm425, %v877, 0
    %971 = vmatpush.msra.mxu0 0.0
    %972 = vmatpush.msra.mxu0 0.0
    %973 = vmatpush.msra.mxu0 0.0
    %974 = vmatpush.msra.mxu0 0.0
    %975 = vmatpush.msra.mxu0 0.0
    %976 = vmatpush.msra.mxu0 0.0
    %977 = vmatpush.msra.mxu0 0.0
    %978 = vmatpush.msra.mxu0 0.0
    %979 = vmatpush.msra.mxu0 0.0
    %980 = vmatpush.msra.mxu0 0.0
    %981 = vmatpush.msra.mxu0 0.0
    %982 = vmatpush.msra.mxu0 0.0
    %983 = vmatpush.msra.mxu0 0.0
    %984 = vmatpush.msra.mxu0 0.0
    %985 = vmatpush.msra.mxu0 0.0
    %986 = vmatpush.msra.mxu0 %v966
    %987 = vmatmul.f32.gmra.mxu0 %v969
    %v988 = vpop.f32.mrf.mxu0
    %v989 = vadd.f32 %v962, %v988
    %990 = vdwg.mxu0
    %991 = vrot.lane.b32.xlu0 %v366, 112
    %v992 = vpop.permute.xlu0 %991
    %993 = vrot.lane.b32.xlu0 %v366, 80
    %v994 = vpop.permute.xlu0 %993
    %995 = vrot.lane.b32.xlu0 %v827, 112
    %v996 = vpop.permute.xlu0 %995
    %v998 = vsel %vm425, %v992, 0
    %v1000 = vsel %vm425, %v994, 0
    %1002 = vmatpush.xpose.msra.mxu0 0.0
    %1003 = vmatpush.xpose.msra.mxu0 0.0
    %1004 = vmatpush.xpose.msra.mxu0 0.0
    %1005 = vmatpush.xpose.msra.mxu0 0.0
    %1006 = vmatpush.xpose.msra.mxu0 0.0
    %1007 = vmatpush.xpose.msra.mxu0 0.0
    %1008 = vmatpush.xpose.msra.mxu0 0.0
    %1009 = vmatpush.xpose.msra.mxu0 0.0
    %1010 = vmatpush.xpose.msra.mxu0 0.0
    %1011 = vmatpush.xpose.msra.mxu0 0.0
    %1012 = vmatpush.xpose.msra.mxu0 0.0
    %1013 = vmatpush.xpose.msra.mxu0 0.0
    %1014 = vmatpush.xpose.msra.mxu0 0.0
    %1015 = vmatpush.xpose.msra.mxu0 0.0
    %1016 = vmatpush.xpose.msra.mxu0 0.0
    %1017 = vmatpush.xpose.msra.mxu0 %v1000
    %1018 = vmatmul.f32.gmra.mxu0 %v998
    %v1019 = vpop.f32.mrf.mxu0
    %v1020 = vadd.f32 %v996, %v1019
    %1021 = vdwg.mxu0
    %v1022 = vadd.f32 %v1020, %v211
    %v1023 = vsel %vm425, %v1022, -inf
    %1024 = vmax.xlane.f32.xlu0 %v1023
    %v1025 = vpop.xlane.xlu0 %1024
    %v1026 = vsub.f32 %v1022, %v1025
    %v1027 = vmul.f32 %v1026, 1.442695
    %v1028 = vpow.pop %v1027
    %v1029 = vsel %vm425, %v1028, 0.0
    %1030 = vadd.xlane.f32.xlu0 %v1029
    %v1031 = vpop.xlane.xlu0 %1030
    %v1032 = vrcp.pop %v1031
    %v1033 = vmul.f32 %v1031, %v1032
    %v1034 = vsub.f32 1.0, %v1033
    %v1035 = vmul.f32 %v1032, %v1034
    %v1036 = vadd.f32 %v1032, %v1035
    %vm1037 = vweird.f32 %v1031
    %vm1038 = vweird.f32 %v1032
    %vm1039 = vmor %vm1037, %vm1038
    %v1040 = vsel %vm1039, %v1032, %v1036
    %v1041 = vand.u32 2147483647, %v1031
    %vm1042 = vcmp.eq.f32.partialorder %v1041, 8.507059e+37
    %v1043 = vand.u32 %v1031, 2147483648
    %v1044 = vor.u32 1.1754944e-38, %v1043
    %v1045 = vsel %vm1042, %v1044, %v1040
    %v1046 = vmul.f32 %v1028, %v1045
    %v1047 = vmul.f32 %v366, %v654
    %1049 = vrot.lane.b32.xlu0 %v1047, 64
    %v1050 = vpop.permute.xlu0 %1049
    %v1053 = vsel %vm425, %v1046, 0
    %1055 = vmatpush.msra.mxu0 0.0
    %1056 = vmatpush.msra.mxu0 0.0
    %1057 = vmatpush.msra.mxu0 0.0
    %1058 = vmatpush.msra.mxu0 0.0
    %1059 = vmatpush.msra.mxu0 0.0
    %1060 = vmatpush.msra.mxu0 0.0
    %1061 = vmatpush.msra.mxu0 0.0
    %1062 = vmatpush.msra.mxu0 0.0
    %1063 = vmatpush.msra.mxu0 0.0
    %1064 = vmatpush.msra.mxu0 0.0
    %1065 = vmatpush.msra.mxu0 0.0
    %1066 = vmatpush.msra.mxu0 0.0
    %1067 = vmatpush.msra.mxu0 0.0
    %1068 = vmatpush.msra.mxu0 0.0
    %1069 = vmatpush.msra.mxu0 0.0
    %1070 = vmatpush.msra.mxu0 %v1050
    %1071 = vmatmul.f32.gmra.mxu0 %v1053
    %v1072 = vpop.f32.mrf.mxu0
    %v1073 = vadd.f32 0.0, %v1072
    %1074 = vdwg.mxu0
    %v1075 = vadd.f32 %v989, %v1073
    %1076 = vrot.lane.b32.xlu0 %v366, 104
    %v1077 = vpop.permute.xlu0 %1076
    %1078 = vrot.lane.b32.xlu0 %v366, 72
    %v1079 = vpop.permute.xlu0 %1078
    %1080 = vrot.lane.b32.xlu0 %v827, 104
    %v1081 = vpop.permute.xlu0 %1080
    %v1083 = vsel %vm425, %v1077, 0
    %v1085 = vsel %vm425, %v1079, 0
    %1087 = vmatpush.xpose.msra.mxu0 0.0
    %1088 = vmatpush.xpose.msra.mxu0 0.0
    %1089 = vmatpush.xpose.msra.mxu0 0.0
    %1090 = vmatpush.xpose.msra.mxu0 0.0
    %1091 = vmatpush.xpose.msra.mxu0 0.0
    %1092 = vmatpush.xpose.msra.mxu0 0.0
    %1093 = vmatpush.xpose.msra.mxu0 0.0
    %1094 = vmatpush.xpose.msra.mxu0 0.0
    %1095 = vmatpush.xpose.msra.mxu0 0.0
    %1096 = vmatpush.xpose.msra.mxu0 0.0
    %1097 = vmatpush.xpose.msra.mxu0 0.0
    %1098 = vmatpush.xpose.msra.mxu0 0.0
    %1099 = vmatpush.xpose.msra.mxu0 0.0
    %1100 = vmatpush.xpose.msra.mxu0 0.0
    %1101 = vmatpush.xpose.msra.mxu0 0.0
    %1102 = vmatpush.xpose.msra.mxu0 %v1085
    %1103 = vmatmul.f32.gmra.mxu0 %v1083
    %v1104 = vpop.f32.mrf.mxu0
    %v1105 = vadd.f32 %v1081, %v1104
    %1106 = vdwg.mxu0
    %v1107 = vadd.f32 %v1105, %v211
    %v1108 = vsel %vm425, %v1107, -inf
    %1109 = vmax.xlane.f32.xlu0 %v1108
    %v1110 = vpop.xlane.xlu0 %1109
    %v1111 = vsub.f32 %v1107, %v1110
    %v1112 = vmul.f32 %v1111, 1.442695
    %v1113 = vpow.pop %v1112
    %v1114 = vsel %vm425, %v1113, 0.0
    %1115 = vadd.xlane.f32.xlu0 %v1114
    %v1116 = vpop.xlane.xlu0 %1115
    %v1117 = vrcp.pop %v1116
    %v1118 = vmul.f32 %v1116, %v1117
    %v1119 = vsub.f32 1.0, %v1118
    %v1120 = vmul.f32 %v1117, %v1119
    %v1121 = vadd.f32 %v1117, %v1120
    %vm1122 = vweird.f32 %v1116
    %vm1123 = vweird.f32 %v1117
    %vm1124 = vmor %vm1122, %vm1123
    %v1125 = vsel %vm1124, %v1117, %v1121
    %v1126 = vand.u32 2147483647, %v1116
    %vm1127 = vcmp.eq.f32.partialorder %v1126, 8.507059e+37
    %v1128 = vand.u32 %v1116, 2147483648
    %v1129 = vor.u32 1.1754944e-38, %v1128
    %v1130 = vsel %vm1127, %v1129, %v1125
    %v1131 = vmul.f32 %v1113, %v1130
    %v1132 = vmul.f32 %v366, %v743
    %1134 = vrot.lane.b32.xlu0 %v1132, 64
    %v1135 = vpop.permute.xlu0 %1134
    %v1138 = vsel %vm425, %v1131, 0
    %1140 = vmatpush.msra.mxu0 0.0
    %1141 = vmatpush.msra.mxu0 0.0
    %1142 = vmatpush.msra.mxu0 0.0
    %1143 = vmatpush.msra.mxu0 0.0
    %1144 = vmatpush.msra.mxu0 0.0
    %1145 = vmatpush.msra.mxu0 0.0
    %1146 = vmatpush.msra.mxu0 0.0
    %1147 = vmatpush.msra.mxu0 0.0
    %1148 = vmatpush.msra.mxu0 0.0
    %1149 = vmatpush.msra.mxu0 0.0
    %1150 = vmatpush.msra.mxu0 0.0
    %1151 = vmatpush.msra.mxu0 0.0
    %1152 = vmatpush.msra.mxu0 0.0
    %1153 = vmatpush.msra.mxu0 0.0
    %1154 = vmatpush.msra.mxu0 0.0
    %1155 = vmatpush.msra.mxu0 %v1135
    %1156 = vmatmul.f32.gmra.mxu0 %v1138
    %v1157 = vpop.f32.mrf.mxu0
    %v1158 = vadd.f32 0.0, %v1157
    %1159 = vdwg.mxu0
    %v1160 = vadd.f32 %v1075, %v1158
    %v1161 = vperm.slane %v330, 0
    %v1163 = vsel %vm338, %v773, 0
    %v1166 = vsel %vm338, %v1160, 0
    %1168 = vmatpush.msra.mxu0 0.0
    %1169 = vmatpush.msra.mxu0 0.0
    %1170 = vmatpush.msra.mxu0 0.0
    %1171 = vmatpush.msra.mxu0 0.0
    %1172 = vmatpush.msra.mxu0 0.0
    %1173 = vmatpush.msra.mxu0 0.0
    %1174 = vmatpush.msra.mxu0 0.0
    %1175 = vmatpush.msra.mxu0 0.0
    %1176 = vmatpush.msra.mxu0 0.0
    %1177 = vmatpush.msra.mxu0 0.0
    %1178 = vmatpush.msra.mxu0 0.0
    %1179 = vmatpush.msra.mxu0 0.0
    %1180 = vmatpush.msra.mxu0 %v290
    %1181 = vmatpush.msra.mxu0 %v289
    %1182 = vmatpush.msra.mxu0 %v288
    %1183 = vmatpush.msra.mxu0 %v287
    %1184 = vmatmul.f32.gmra.mxu0 %v1163
    %v1185 = vpop.f32.mrf.mxu0
    %v1186 = vadd.f32 %v1161, %v1185
    %1187 = vmatmul.f32.gmra.mxu0 %v1166
    %v1188 = vpop.f32.mrf.mxu0
    %v1189 = vadd.f32 %v1161, %v1188
    %1190 = vdwg.mxu0
    %v1191 = vadd.f32 %v1186, %v244
    %v1192 = vadd.f32 %v1189, %v247
    %v1193 = vsel %vm338, %v1191, 0.0
    %1194 = vadd.xlane.f32.xlu0 %v1193
    %v1195 = vpop.xlane.xlu0 %1194
    %v1196 = vsel %vm338, %v1192, 0.0
    %1197 = vadd.xlane.f32.xlu0 %v1196
    %v1198 = vpop.xlane.xlu0 %1197
    %v1199 = vrcp.pop 32.0
    %v1200 = vmul.f32 32.0, %v1199
    %v1201 = vsub.f32 1.0, %v1200
    %v1202 = vmul.f32 %v1199, %v1201
    %v1203 = vadd.f32 %v1199, %v1202
    %vm1204 = vweird.f32 %v1199
    %v1205 = vsel %vm1204, %v1199, %v1203
    %v1206 = vmul.f32 %v1195, %v1205
    %v1207 = vmul.f32 %v1198, %v1205
    %v1208 = vsub.f32 %v1191, %v1206
    %v1209 = vsub.f32 %v1192, %v1207
    %v1210 = vmul.f32 %v1208, %v1208
    %v1211 = vmul.f32 %v1209, %v1209
    %v1212 = vsel %vm338, %v1210, 0.0
    %1213 = vadd.xlane.f32.xlu0 %v1212
    %v1214 = vpop.xlane.xlu0 %1213
    %v1215 = vsel %vm338, %v1211, 0.0
    %1216 = vadd.xlane.f32.xlu0 %v1215
    %v1217 = vpop.xlane.xlu0 %1216
    %v1218 = vmul.f32 %v1214, %v1205
    %v1219 = vmul.f32 %v1217, %v1205
    %v1220 = vadd.f32 %v1218, 1e-06
    %v1221 = vadd.f32 %v1219, 1e-06
    %v1222 = vrsqrt.pop %v1220
    %v1223 = vmul.f32 %v1222, %v1220
    %v1224 = vmul.f32 %v1223, %v1222
    %v1225 = vmul.f32 0.5, %v1224
    %v1226 = vsub.f32 1.5, %v1225
    %v1227 = vmul.f32 %v1222, %v1226
    %vm1228 = vweird.f32 %v1220
    %vm1229 = vweird.f32 %v1222
    %vm1230 = vmor %vm1228, %vm1229
    %v1231 = vsel %vm1230, %v1222, %v1227
    %v1232 = vrsqrt.pop %v1221
    %v1233 = vmul.f32 %v1232, %v1221
    %v1234 = vmul.f32 %v1233, %v1232
    %v1235 = vmul.f32 0.5, %v1234
    %v1236 = vsub.f32 1.5, %v1235
    %v1237 = vmul.f32 %v1232, %v1236
    %vm1238 = vweird.f32 %v1221
    %vm1239 = vweird.f32 %v1232
    %vm1240 = vmor %vm1238, %vm1239
    %v1241 = vsel %vm1240, %v1232, %v1237
    %v1242 = vmul.f32 %v1208, %v1231
    %v1243 = vmul.f32 %v1209, %v1241
    %v1244 = vperm.slane %v331, 0
    %v1245 = vmul.f32 %v1242, %v1244
    %v1246 = vmul.f32 %v1243, %v1244
    %v1247 = vperm.slane %v332, 0
    %v1248 = vadd.f32 %v1245, %v1247
    %v1249 = vadd.f32 %v1246, %v1247
    %v1250 = vperm.slane %v333, 0
    %v1252 = vsel %vm338, %v1248, 0
    %v1255 = vsel %vm338, %v1249, 0
    %1257 = vmatpush.msra.mxu0 0.0
    %1258 = vmatpush.msra.mxu0 0.0
    %1259 = vmatpush.msra.mxu0 0.0
    %1260 = vmatpush.msra.mxu0 0.0
    %1261 = vmatpush.msra.mxu0 0.0
    %1262 = vmatpush.msra.mxu0 0.0
    %1263 = vmatpush.msra.mxu0 0.0
    %1264 = vmatpush.msra.mxu0 0.0
    %1265 = vmatpush.msra.mxu0 0.0
    %1266 = vmatpush.msra.mxu0 0.0
    %1267 = vmatpush.msra.mxu0 0.0
    %1268 = vmatpush.msra.mxu0 0.0
    %1269 = vmatpush.msra.mxu0 %v294
    %1270 = vmatpush.msra.mxu0 %v293
    %1271 = vmatpush.msra.mxu0 %v292
    %1272 = vmatpush.msra.mxu0 %v291
    %1273 = vmatmul.f32.gmra.mxu0 %v1252
    %v1274 = vpop.f32.mrf.mxu0
    %v1275 = vadd.f32 %v1250, %v1274
    %1276 = vmatmul.f32.gmra.mxu0 %v1255
    %v1277 = vpop.f32.mrf.mxu0
    %v1278 = vadd.f32 %v1250, %v1277
    %1279 = vdwg.mxu0
    %v1280 = vmax.f32 %v1275, 0.0
    %v1281 = vmax.f32 %v1278, 0.0
    %v1282 = vperm.slane %v334, 0
    %vm1283 = vcmask 130048
    %v1285 = vsel %vm1283, %v1280, 0
    %v1288 = vsel %vm1283, %v1281, 0
    %1290 = vmatpush.msra.mxu0 0.0
    %1291 = vmatpush.msra.mxu0 0.0
    %1292 = vmatpush.msra.mxu0 0.0
    %1293 = vmatpush.msra.mxu0 0.0
    %1294 = vmatpush.msra.mxu0 0.0
    %1295 = vmatpush.msra.mxu0 0.0
    %1296 = vmatpush.msra.mxu0 0.0
    %1297 = vmatpush.msra.mxu0 0.0
    %1298 = vmatpush.msra.mxu0 0.0
    %1299 = vmatpush.msra.mxu0 0.0
    %1300 = vmatpush.msra.mxu0 0.0
    %1301 = vmatpush.msra.mxu0 0.0
    %1302 = vmatpush.msra.mxu0 0.0
    %1303 = vmatpush.msra.mxu0 0.0
    %1304 = vmatpush.msra.mxu0 %v296
    %1305 = vmatpush.msra.mxu0 %v295
    %1306 = vmatmul.f32.gmra.mxu0 %v1285
    %v1307 = vpop.f32.mrf.mxu0
    %v1308 = vadd.f32 %v1282, %v1307
    %1309 = vmatmul.f32.gmra.mxu0 %v1288
    %v1310 = vpop.f32.mrf.mxu0
    %v1311 = vadd.f32 %v1282, %v1310
    %1312 = vdwg.mxu0
    %v1313 = vadd.f32 %v1248, %v1308
    %v1314 = vadd.f32 %v1249, %v1311
    %v1315 = vsel %vm338, %v1313, 0.0
    %1316 = vadd.xlane.f32.xlu0 %v1315
    %v1317 = vpop.xlane.xlu0 %1316
    %v1318 = vsel %vm338, %v1314, 0.0
    %1319 = vadd.xlane.f32.xlu0 %v1318
    %v1320 = vpop.xlane.xlu0 %1319
    %v1321 = vmul.f32 %v1317, %v1205
    %v1322 = vmul.f32 %v1320, %v1205
    %v1323 = vsub.f32 %v1313, %v1321
    %v1324 = vsub.f32 %v1314, %v1322
    %v1325 = vmul.f32 %v1323, %v1323
    %v1326 = vmul.f32 %v1324, %v1324
    %v1327 = vsel %vm338, %v1325, 0.0
    %1328 = vadd.xlane.f32.xlu0 %v1327
    %v1329 = vpop.xlane.xlu0 %1328
    %v1330 = vsel %vm338, %v1326, 0.0
    %1331 = vadd.xlane.f32.xlu0 %v1330
    %v1332 = vpop.xlane.xlu0 %1331
    %v1333 = vmul.f32 %v1329, %v1205
    %v1334 = vmul.f32 %v1332, %v1205
    %v1335 = vadd.f32 %v1333, 1e-06
    %v1336 = vadd.f32 %v1334, 1e-06
    %v1337 = vrsqrt.pop %v1335
    %v1338 = vmul.f32 %v1337, %v1335
    %v1339 = vmul.f32 %v1338, %v1337
    %v1340 = vmul.f32 0.5, %v1339
    %v1341 = vsub.f32 1.5, %v1340
    %v1342 = vmul.f32 %v1337, %v1341
    %vm1343 = vweird.f32 %v1335
    %vm1344 = vweird.f32 %v1337
    %vm1345 = vmor %vm1343, %vm1344
    %v1346 = vsel %vm1345, %v1337, %v1342
    %v1347 = vrsqrt.pop %v1336
    %v1348 = vmul.f32 %v1347, %v1336
    %v1349 = vmul.f32 %v1348, %v1347
    %v1350 = vmul.f32 0.5, %v1349
    %v1351 = vsub.f32 1.5, %v1350
    %v1352 = vmul.f32 %v1347, %v1351
    %vm1353 = vweird.f32 %v1336
    %vm1354 = vweird.f32 %v1347
    %vm1355 = vmor %vm1353, %vm1354
    %v1356 = vsel %vm1355, %v1347, %v1352
    %v1357 = vmul.f32 %v1323, %v1346
    %v1358 = vmul.f32 %v1324, %v1356
    %v1359 = vperm.slane %v335, 0
    %v1360 = vmul.f32 %v1357, %v1359
    %v1361 = vmul.f32 %v1358, %v1359
    %v1362 = vperm.slane %v336, 0
    %v1363 = vadd.f32 %v1360, %v1362
    %v1364 = vadd.f32 %v1361, %v1362
    %v1365 = vld [vmem:[#allocation4 + $0x198] sm:$0xff]
    %v1366 = vld [vmem:[#allocation4 + $0x1a0] sm:$0xff]
    %v1367 = vld [vmem:[#allocation4 + $0x1a8] sm:$0xff]
    %v1368 = vld [vmem:[#allocation4 + $0x1b0] sm:$0xff]
    %v1369 = vld [vmem:[#allocation4 + $0x1b8] sm:$0xff]
    %v1370 = vld [vmem:[#allocation4 + $0x1c0] sm:$0xff]
    %v1371 = vld [vmem:[#allocation4 + $0x1c8] sm:$0xff]
    %v1372 = vld [vmem:[#allocation4 + $0x1d0] sm:$0xff]
    %v1373 = vld [vmem:[#allocation4 + $0x1d8] sm:$0xff]
    %v1374 = vld [vmem:[#allocation4 + $0x1e0] sm:$0xff]
    %v1375 = vld [vmem:[#allocation4 + $0x1e8] sm:$0xff]
    %v1376 = vld [vmem:[#allocation4 + $0x1f0] sm:$0xff]
    %v1377 = vld [vmem:[#allocation4 + $0x1f8] sm:$0xff]
    %v1378 = vld [vmem:[#allocation4 + $0x200] sm:$0xff]
    %v1379 = vld [vmem:[#allocation4 + $0x208] sm:$0xff]
    %v1380 = vld [vmem:[#allocation4 + $0x210] sm:$0xff]
    %v1381 = vld [vmem:[#allocation4 + $0x218] sm:$0xff]
    %v1382 = vld [vmem:[#allocation4 + $0x220] sm:$0xff]
    %v1383 = vld [vmem:[#allocation4 + $0x228] sm:$0xff]
    %v1384 = vld [vmem:[#allocation4 + $0x230] sm:$0xff]
    %v1385 = vld [vmem:[#allocation4 + $0x238] sm:$0xff]
    %v1386 = vld [vmem:[#allocation4 + $0x240] sm:$0xff]
    %v1387 = vld [vmem:[#allocation4 + $0x248] sm:$0xff]
    %v1388 = vld [vmem:[#allocation4 + $0x250] sm:$0xff]
    %v1389 = vld [vmem:[#allocation4 + $0x258] sm:$0xff]
    %v1390 = vld [vmem:[#allocation4 + $0x260] sm:$0xff]
    %v1391 = vld [vmem:[#allocation4 + $0x268] sm:$0xff]
    %v1392 = vld [vmem:[#allocation4 + $0x270] sm:$0xff]
    %v1393 = vld [vmem:[#allocation4 + $0x278] sm:$0xff]
    %v1394 = vld [vmem:[#allocation4 + $0x280] sm:$0xff]
    %v1395 = vld [vmem:[#allocation4 + $0x288] sm:$0xff]
    %v1396 = vld [vmem:[#allocation4 + $0x290] sm:$0xff]
    %v1397 = vld [vmem:[#allocation4 + $0x298] sm:$0xff]
    %v1398 = vld [vmem:[#allocation4 + $0x2a0] sm:$0xff]
    %v1399 = vld [vmem:[#allocation4 + $0x2a8] sm:$0xff]
    %v1400 = vld [vmem:[#allocation4 + $0x2b0] sm:$0xff]
    %v1401 = vld [vmem:[#allocation4 + $0x2b8] sm:$0xff]
    %v1402 = vld [vmem:[#allocation4 + $0x2c0] sm:$0xff]
    %v1403 = vld [vmem:[#allocation4 + $0x2c8] sm:$0xff]
    %v1404 = vld [vmem:[#allocation4 + $0x2d0] sm:$0xff]
    %v1405 = vld [vmem:[#allocation4 + $0x2d8] sm:$0xff]
    %v1406 = vld [vmem:[#allocation4 + $0x2e0] sm:$0xff]
    %v1407 = vld [vmem:[#allocation4 + $0x2e8] sm:$0xff]
    %v1408 = vld [vmem:[#allocation4 + $0x2f0] sm:$0xff]
    %v1409 = vld [vmem:[#allocation4 + $0x2f8] sm:$0xff]
    %v1410 = vld [vmem:[#allocation4 + $0x300] sm:$0xff]
    %v1411 = vld [vmem:[#allocation4 + $0x340] sm:$0x1]
    %v1412 = vld [vmem:[#allocation4 + $0x341] sm:$0x1]
    %v1413 = vld [vmem:[#allocation4 + $0x342] sm:$0x1]
    %v1414 = vld [vmem:[#allocation4 + $0x343] sm:$0x1]
    %v1415 = vld [vmem:[#allocation4 + $0x344] sm:$0x1]
    %v1416 = vld [vmem:[#allocation4 + $0x345] sm:$0x1]
    %v1417 = vld [vmem:[#allocation4 + $0x346] sm:$0x1]
    %v1418 = vld [vmem:[#allocation4 + $0x347] sm:$0x1]
    %v1419 = vperm.slane %v1411, 0
    %v1421 = vsel %vm338, %v1363, 0
    %v1424 = vsel %vm338, %v1364, 0
    %1426 = vmatpush.msra.mxu0 0.0
    %1427 = vmatpush.msra.mxu0 0.0
    %1428 = vmatpush.msra.mxu0 0.0
    %1429 = vmatpush.msra.mxu0 0.0
    %1430 = vmatpush.msra.mxu0 0.0
    %1431 = vmatpush.msra.mxu0 0.0
    %1432 = vmatpush.msra.mxu0 0.0
    %1433 = vmatpush.msra.mxu0 0.0
    %1434 = vmatpush.msra.mxu0 0.0
    %1435 = vmatpush.msra.mxu0 0.0
    %1436 = vmatpush.msra.mxu0 0.0
    %1437 = vmatpush.msra.mxu0 0.0
    %1438 = vmatpush.msra.mxu0 %v1368
    %1439 = vmatpush.msra.mxu0 %v1367
    %1440 = vmatpush.msra.mxu0 %v1366
    %1441 = vmatpush.msra.mxu0 %v1365
    %1442 = vmatmul.f32.gmra.mxu0 %v1421
    %v1443 = vpop.f32.mrf.mxu0
    %v1444 = vadd.f32 %v1419, %v1443
    %1445 = vmatmul.f32.gmra.mxu0 %v1424
    %v1446 = vpop.f32.mrf.mxu0
    %v1447 = vadd.f32 %v1419, %v1446
    %1448 = vdwg.mxu0
    %1450 = vrot.lane.b32.xlu0 %v1444, 32
    %v1451 = vpop.permute.xlu0 %1450
    %1453 = vrot.lane.b32.xlu0 %v1444, 64
    %v1454 = vpop.permute.xlu0 %1453
    %1456 = vrot.lane.b32.xlu0 %v1444, 96
    %v1457 = vpop.permute.xlu0 %1456
    %v1459 = vsel %vm338, %v1444, %v1451
    %v1460 = vsel %vm379, %v1459, %v1454
    %v1461 = vsel %vm381, %v1460, %v1457
    %v1462 = vmul.f32 %v1461, %v261
    %v1463 = vmul.f32 %v1461, %v262
    %1464 = vmatpush.msra.mxu0 %v1394
    %1465 = vmatpush.msra.mxu0 %v1393
    %1466 = vmatpush.msra.mxu0 %v1392
    %1467 = vmatpush.msra.mxu0 %v1391
    %1468 = vmatpush.msra.mxu0 %v1390
    %1469 = vmatpush.msra.mxu0 %v1389
    %1470 = vmatpush.msra.mxu0 %v1388
    %1471 = vmatpush.msra.mxu0 %v1387
    %1472 = vmatpush.msra.mxu0 %v1386
    %1473 = vmatpush.msra.mxu0 %v1385
    %1474 = vmatpush.msra.mxu0 %v1384
    %1475 = vmatpush.msra.mxu0 %v1383
    %1476 = vmatpush.msra.mxu0 %v1382
    %1477 = vmatpush.msra.mxu0 %v1381
    %1478 = vmatpush.msra.mxu0 %v1380
    %1479 = vmatpush.msra.mxu0 %v1379
    %1480 = vmatmul.f32.gmra.mxu0 %v1462
    %v1481 = vpop.f32.mrf.mxu0
    %v1482 = vadd.f32 0.0, %v1481
    %1483 = vdwg.mxu0
    %1484 = vmatpush.msra.mxu0 %v1410
    %1485 = vmatpush.msra.mxu0 %v1409
    %1486 = vmatpush.msra.mxu0 %v1408
    %1487 = vmatpush.msra.mxu0 %v1407
    %1488 = vmatpush.msra.mxu0 %v1406
    %1489 = vmatpush.msra.mxu0 %v1405
    %1490 = vmatpush.msra.mxu0 %v1404
    %1491 = vmatpush.msra.mxu0 %v1403
    %1492 = vmatpush.msra.mxu0 %v1402
    %1493 = vmatpush.msra.mxu0 %v1401
    %1494 = vmatpush.msra.mxu0 %v1400
    %1495 = vmatpush.msra.mxu0 %v1399
    %1496 = vmatpush.msra.mxu0 %v1398
    %1497 = vmatpush.msra.mxu0 %v1397
    %1498 = vmatpush.msra.mxu0 %v1396
    %1499 = vmatpush.msra.mxu0 %v1395
    %1500 = vmatmul.f32.gmra.mxu0 %v1463
    %v1501 = vpop.f32.mrf.mxu0
    %v1502 = vadd.f32 %v1482, %v1501
    %1503 = vdwg.mxu0
    %v1504 = vsel %vm425, %v1444, 0
    %v1506 = vsel %vm425, %v1457, 0
    %1508 = vmatpush.xpose.msra.mxu0 0.0
    %1509 = vmatpush.xpose.msra.mxu0 0.0
    %1510 = vmatpush.xpose.msra.mxu0 0.0
    %1511 = vmatpush.xpose.msra.mxu0 0.0
    %1512 = vmatpush.xpose.msra.mxu0 0.0
    %1513 = vmatpush.xpose.msra.mxu0 0.0
    %1514 = vmatpush.xpose.msra.mxu0 0.0
    %1515 = vmatpush.xpose.msra.mxu0 0.0
    %1516 = vmatpush.xpose.msra.mxu0 0.0
    %1517 = vmatpush.xpose.msra.mxu0 0.0
    %1518 = vmatpush.xpose.msra.mxu0 0.0
    %1519 = vmatpush.xpose.msra.mxu0 0.0
    %1520 = vmatpush.xpose.msra.mxu0 0.0
    %1521 = vmatpush.xpose.msra.mxu0 0.0
    %1522 = vmatpush.xpose.msra.mxu0 0.0
    %1523 = vmatpush.xpose.msra.mxu0 %v1506
    %1524 = vmatmul.f32.gmra.mxu0 %v1504
    %v1525 = vpop.f32.mrf.mxu0
    %v1526 = vadd.f32 %v1502, %v1525
    %1527 = vdwg.mxu0
    %v1528 = vadd.f32 %v1526, %v194
    %v1529 = vsel %vm425, %v1528, -inf
    %1530 = vmax.xlane.f32.xlu0 %v1529
    %v1531 = vpop.xlane.xlu0 %1530
    %v1532 = vsub.f32 %v1528, %v1531
    %v1533 = vmul.f32 %v1532, 1.442695
    %v1534 = vpow.pop %v1533
    %v1535 = vsel %vm425, %v1534, 0.0
    %1536 = vadd.xlane.f32.xlu0 %v1535
    %v1537 = vpop.xlane.xlu0 %1536
    %v1538 = vrcp.pop %v1537
    %v1539 = vmul.f32 %v1537, %v1538
    %v1540 = vsub.f32 1.0, %v1539
    %v1541 = vmul.f32 %v1538, %v1540
    %v1542 = vadd.f32 %v1538, %v1541
    %vm1543 = vweird.f32 %v1537
    %vm1544 = vweird.f32 %v1538
    %vm1545 = vmor %vm1543, %vm1544
    %v1546 = vsel %vm1545, %v1538, %v1542
    %v1547 = vand.u32 2147483647, %v1537
    %vm1548 = vcmp.eq.f32.partialorder %v1547, 8.507059e+37
    %v1549 = vand.u32 %v1537, 2147483648
    %v1550 = vor.u32 1.1754944e-38, %v1549
    %v1551 = vsel %vm1548, %v1550, %v1546
    %v1552 = vmul.f32 %v1534, %v1551
    %v1553 = vmul.f32 %v1444, %v477
    %1554 = vrot.lane.b32.xlu0 %v1444, 120
    %v1555 = vpop.permute.xlu0 %1554
    %1556 = vrot.lane.b32.xlu0 %v1444, 88
    %v1557 = vpop.permute.xlu0 %1556
    %1559 = vrot.lane.b32.xlu0 %v1502, 120
    %v1560 = vpop.permute.xlu0 %1559
    %v1562 = vsel %vm425, %v1555, 0
    %v1564 = vsel %vm425, %v1557, 0
    %1566 = vmatpush.xpose.msra.mxu0 0.0
    %1567 = vmatpush.xpose.msra.mxu0 0.0
    %1568 = vmatpush.xpose.msra.mxu0 0.0
    %1569 = vmatpush.xpose.msra.mxu0 0.0
    %1570 = vmatpush.xpose.msra.mxu0 0.0
    %1571 = vmatpush.xpose.msra.mxu0 0.0
    %1572 = vmatpush.xpose.msra.mxu0 0.0
    %1573 = vmatpush.xpose.msra.mxu0 0.0
    %1574 = vmatpush.xpose.msra.mxu0 0.0
    %1575 = vmatpush.xpose.msra.mxu0 0.0
    %1576 = vmatpush.xpose.msra.mxu0 0.0
    %1577 = vmatpush.xpose.msra.mxu0 0.0
    %1578 = vmatpush.xpose.msra.mxu0 0.0
    %1579 = vmatpush.xpose.msra.mxu0 0.0
    %1580 = vmatpush.xpose.msra.mxu0 0.0
    %1581 = vmatpush.xpose.msra.mxu0 %v1564
    %1582 = vmatmul.f32.gmra.mxu0 %v1562
    %v1583 = vpop.f32.mrf.mxu0
    %v1584 = vadd.f32 %v1560, %v1583
    %1585 = vdwg.mxu0
    %v1586 = vadd.f32 %v1584, %v194
    %v1587 = vsel %vm425, %v1586, -inf
    %1588 = vmax.xlane.f32.xlu0 %v1587
    %v1589 = vpop.xlane.xlu0 %1588
    %v1590 = vsub.f32 %v1586, %v1589
    %v1591 = vmul.f32 %v1590, 1.442695
    %v1592 = vpow.pop %v1591
    %v1593 = vsel %vm425, %v1592, 0.0
    %1594 = vadd.xlane.f32.xlu0 %v1593
    %v1595 = vpop.xlane.xlu0 %1594
    %v1596 = vrcp.pop %v1595
    %v1597 = vmul.f32 %v1595, %v1596
    %v1598 = vsub.f32 1.0, %v1597
    %v1599 = vmul.f32 %v1596, %v1598
    %v1600 = vadd.f32 %v1596, %v1599
    %vm1601 = vweird.f32 %v1595
    %vm1602 = vweird.f32 %v1596
    %vm1603 = vmor %vm1601, %vm1602
    %v1604 = vsel %vm1603, %v1596, %v1600
    %v1605 = vand.u32 2147483647, %v1595
    %vm1606 = vcmp.eq.f32.partialorder %v1605, 8.507059e+37
    %v1607 = vand.u32 %v1595, 2147483648
    %v1608 = vor.u32 1.1754944e-38, %v1607
    %v1609 = vsel %vm1606, %v1608, %v1604
    %v1610 = vmul.f32 %v1592, %v1609
    %v1611 = vmul.f32 %v1444, %v539
    %1613 = vrot.lane.b32.xlu0 %v1611, 64
    %v1614 = vpop.permute.xlu0 %1613
    %v1617 = vsel %vm425, %v1610, 0
    %1619 = vmatpush.msra.mxu0 0.0
    %1620 = vmatpush.msra.mxu0 0.0
    %1621 = vmatpush.msra.mxu0 0.0
    %1622 = vmatpush.msra.mxu0 0.0
    %1623 = vmatpush.msra.mxu0 0.0
    %1624 = vmatpush.msra.mxu0 0.0
    %1625 = vmatpush.msra.mxu0 0.0
    %1626 = vmatpush.msra.mxu0 0.0
    %1627 = vmatpush.msra.mxu0 0.0
    %1628 = vmatpush.msra.mxu0 0.0
    %1629 = vmatpush.msra.mxu0 0.0
    %1630 = vmatpush.msra.mxu0 0.0
    %1631 = vmatpush.msra.mxu0 0.0
    %1632 = vmatpush.msra.mxu0 0.0
    %1633 = vmatpush.msra.mxu0 0.0
    %1634 = vmatpush.msra.mxu0 %v1614
    %1635 = vmatmul.f32.gmra.mxu0 %v1617
    %v1636 = vpop.f32.mrf.mxu0
    %v1637 = vadd.f32 0.0, %v1636
    %1638 = vdwg.mxu0
    %1640 = vrot.lane.b32.xlu0 %v1553, 64
    %v1641 = vpop.permute.xlu0 %1640
    %v1644 = vsel %vm425, %v1552, 0
    %1646 = vmatpush.msra.mxu0 0.0
    %1647 = vmatpush.msra.mxu0 0.0
    %1648 = vmatpush.msra.mxu0 0.0
    %1649 = vmatpush.msra.mxu0 0.0
    %1650 = vmatpush.msra.mxu0 0.0
    %1651 = vmatpush.msra.mxu0 0.0
    %1652 = vmatpush.msra.mxu0 0.0
    %1653 = vmatpush.msra.mxu0 0.0
    %1654 = vmatpush.msra.mxu0 0.0
    %1655 = vmatpush.msra.mxu0 0.0
    %1656 = vmatpush.msra.mxu0 0.0
    %1657 = vmatpush.msra.mxu0 0.0
    %1658 = vmatpush.msra.mxu0 0.0
    %1659 = vmatpush.msra.mxu0 0.0
    %1660 = vmatpush.msra.mxu0 0.0
    %1661 = vmatpush.msra.mxu0 %v1641
    %1662 = vmatmul.f32.gmra.mxu0 %v1644
    %v1663 = vpop.f32.mrf.mxu0
    %v1664 = vadd.f32 %v1637, %v1663
    %1665 = vdwg.mxu0
    %1666 = vrot.lane.b32.xlu0 %v1444, 112
    %v1667 = vpop.permute.xlu0 %1666
    %1668 = vrot.lane.b32.xlu0 %v1444, 80
    %v1669 = vpop.permute.xlu0 %1668
    %1670 = vrot.lane.b32.xlu0 %v1502, 112
    %v1671 = vpop.permute.xlu0 %1670
    %v1673 = vsel %vm425, %v1667, 0
    %v1675 = vsel %vm425, %v1669, 0
    %1677 = vmatpush.xpose.msra.mxu0 0.0
    %1678 = vmatpush.xpose.msra.mxu0 0.0
    %1679 = vmatpush.xpose.msra.mxu0 0.0
    %1680 = vmatpush.xpose.msra.mxu0 0.0
    %1681 = vmatpush.xpose.msra.mxu0 0.0
    %1682 = vmatpush.xpose.msra.mxu0 0.0
    %1683 = vmatpush.xpose.msra.mxu0 0.0
    %1684 = vmatpush.xpose.msra.mxu0 0.0
    %1685 = vmatpush.xpose.msra.mxu0 0.0
    %1686 = vmatpush.xpose.msra.mxu0 0.0
    %1687 = vmatpush.xpose.msra.mxu0 0.0
    %1688 = vmatpush.xpose.msra.mxu0 0.0
    %1689 = vmatpush.xpose.msra.mxu0 0.0
    %1690 = vmatpush.xpose.msra.mxu0 0.0
    %1691 = vmatpush.xpose.msra.mxu0 0.0
    %1692 = vmatpush.xpose.msra.mxu0 %v1675
    %1693 = vmatmul.f32.gmra.mxu0 %v1673
    %v1694 = vpop.f32.mrf.mxu0
    %v1695 = vadd.f32 %v1671, %v1694
    %1696 = vdwg.mxu0
    %v1697 = vadd.f32 %v1695, %v194
    %v1698 = vsel %vm425, %v1697, -inf
    %1699 = vmax.xlane.f32.xlu0 %v1698
    %v1700 = vpop.xlane.xlu0 %1699
    %v1701 = vsub.f32 %v1697, %v1700
    %v1702 = vmul.f32 %v1701, 1.442695
    %v1703 = vpow.pop %v1702
    %v1704 = vsel %vm425, %v1703, 0.0
    %1705 = vadd.xlane.f32.xlu0 %v1704
    %v1706 = vpop.xlane.xlu0 %1705
    %v1707 = vrcp.pop %v1706
    %v1708 = vmul.f32 %v1706, %v1707
    %v1709 = vsub.f32 1.0, %v1708
    %v1710 = vmul.f32 %v1707, %v1709
    %v1711 = vadd.f32 %v1707, %v1710
    %vm1712 = vweird.f32 %v1706
    %vm1713 = vweird.f32 %v1707
    %vm1714 = vmor %vm1712, %vm1713
    %v1715 = vsel %vm1714, %v1707, %v1711
    %v1716 = vand.u32 2147483647, %v1706
    %vm1717 = vcmp.eq.f32.partialorder %v1716, 8.507059e+37
    %v1718 = vand.u32 %v1706, 2147483648
    %v1719 = vor.u32 1.1754944e-38, %v1718
    %v1720 = vsel %vm1717, %v1719, %v1715
    %v1721 = vmul.f32 %v1703, %v1720
    %v1722 = vmul.f32 %v1444, %v654
    %1724 = vrot.lane.b32.xlu0 %v1722, 64
    %v1725 = vpop.permute.xlu0 %1724
    %v1728 = vsel %vm425, %v1721, 0
    %1730 = vmatpush.msra.mxu0 0.0
    %1731 = vmatpush.msra.mxu0 0.0
    %1732 = vmatpush.msra.mxu0 0.0
    %1733 = vmatpush.msra.mxu0 0.0
    %1734 = vmatpush.msra.mxu0 0.0
    %1735 = vmatpush.msra.mxu0 0.0
    %1736 = vmatpush.msra.mxu0 0.0
    %1737 = vmatpush.msra.mxu0 0.0
    %1738 = vmatpush.msra.mxu0 0.0
    %1739 = vmatpush.msra.mxu0 0.0
    %1740 = vmatpush.msra.mxu0 0.0
    %1741 = vmatpush.msra.mxu0 0.0
    %1742 = vmatpush.msra.mxu0 0.0
    %1743 = vmatpush.msra.mxu0 0.0
    %1744 = vmatpush.msra.mxu0 0.0
    %1745 = vmatpush.msra.mxu0 %v1725
    %1746 = vmatmul.f32.gmra.mxu0 %v1728
    %v1747 = vpop.f32.mrf.mxu0
    %v1748 = vadd.f32 0.0, %v1747
    %1749 = vdwg.mxu0
    %v1750 = vadd.f32 %v1664, %v1748
    %1751 = vrot.lane.b32.xlu0 %v1444, 104
    %v1752 = vpop.permute.xlu0 %1751
    %1753 = vrot.lane.b32.xlu0 %v1444, 72
    %v1754 = vpop.permute.xlu0 %1753
    %1755 = vrot.lane.b32.xlu0 %v1502, 104
    %v1756 = vpop.permute.xlu0 %1755
    %v1758 = vsel %vm425, %v1752, 0
    %v1760 = vsel %vm425, %v1754, 0
    %1762 = vmatpush.xpose.msra.mxu0 0.0
    %1763 = vmatpush.xpose.msra.mxu0 0.0
    %1764 = vmatpush.xpose.msra.mxu0 0.0
    %1765 = vmatpush.xpose.msra.mxu0 0.0
    %1766 = vmatpush.xpose.msra.mxu0 0.0
    %1767 = vmatpush.xpose.msra.mxu0 0.0
    %1768 = vmatpush.xpose.msra.mxu0 0.0
    %1769 = vmatpush.xpose.msra.mxu0 0.0
    %1770 = vmatpush.xpose.msra.mxu0 0.0
    %1771 = vmatpush.xpose.msra.mxu0 0.0
    %1772 = vmatpush.xpose.msra.mxu0 0.0
    %1773 = vmatpush.xpose.msra.mxu0 0.0
    %1774 = vmatpush.xpose.msra.mxu0 0.0
    %1775 = vmatpush.xpose.msra.mxu0 0.0
    %1776 = vmatpush.xpose.msra.mxu0 0.0
    %1777 = vmatpush.xpose.msra.mxu0 %v1760
    %1778 = vmatmul.f32.gmra.mxu0 %v1758
    %v1779 = vpop.f32.mrf.mxu0
    %v1780 = vadd.f32 %v1756, %v1779
    %1781 = vdwg.mxu0
    %v1782 = vadd.f32 %v1780, %v194
    %v1783 = vsel %vm425, %v1782, -inf
    %1784 = vmax.xlane.f32.xlu0 %v1783
    %v1785 = vpop.xlane.xlu0 %1784
    %v1786 = vsub.f32 %v1782, %v1785
    %v1787 = vmul.f32 %v1786, 1.442695
    %v1788 = vpow.pop %v1787
    %v1789 = vsel %vm425, %v1788, 0.0
    %1790 = vadd.xlane.f32.xlu0 %v1789
    %v1791 = vpop.xlane.xlu0 %1790
    %v1792 = vrcp.pop %v1791
    %v1793 = vmul.f32 %v1791, %v1792
    %v1794 = vsub.f32 1.0, %v1793
    %v1795 = vmul.f32 %v1792, %v1794
    %v1796 = vadd.f32 %v1792, %v1795
    %vm1797 = vweird.f32 %v1791
    %vm1798 = vweird.f32 %v1792
    %vm1799 = vmor %vm1797, %vm1798
    %v1800 = vsel %vm1799, %v1792, %v1796
    %v1801 = vand.u32 2147483647, %v1791
    %vm1802 = vcmp.eq.f32.partialorder %v1801, 8.507059e+37
    %v1803 = vand.u32 %v1791, 2147483648
    %v1804 = vor.u32 1.1754944e-38, %v1803
    %v1805 = vsel %vm1802, %v1804, %v1800
    %v1806 = vmul.f32 %v1788, %v1805
    %v1807 = vmul.f32 %v1444, %v743
    %1809 = vrot.lane.b32.xlu0 %v1807, 64
    %v1810 = vpop.permute.xlu0 %1809
    %v1813 = vsel %vm425, %v1806, 0
    %1815 = vmatpush.msra.mxu0 0.0
    %1816 = vmatpush.msra.mxu0 0.0
    %1817 = vmatpush.msra.mxu0 0.0
    %1818 = vmatpush.msra.mxu0 0.0
    %1819 = vmatpush.msra.mxu0 0.0
    %1820 = vmatpush.msra.mxu0 0.0
    %1821 = vmatpush.msra.mxu0 0.0
    %1822 = vmatpush.msra.mxu0 0.0
    %1823 = vmatpush.msra.mxu0 0.0
    %1824 = vmatpush.msra.mxu0 0.0
    %1825 = vmatpush.msra.mxu0 0.0
    %1826 = vmatpush.msra.mxu0 0.0
    %1827 = vmatpush.msra.mxu0 0.0
    %1828 = vmatpush.msra.mxu0 0.0
    %1829 = vmatpush.msra.mxu0 0.0
    %1830 = vmatpush.msra.mxu0 %v1810
    %1831 = vmatmul.f32.gmra.mxu0 %v1813
    %v1832 = vpop.f32.mrf.mxu0
    %v1833 = vadd.f32 0.0, %v1832
    %1834 = vdwg.mxu0
    %v1835 = vadd.f32 %v1750, %v1833
    %1837 = vrot.lane.b32.xlu0 %v1447, 32
    %v1838 = vpop.permute.xlu0 %1837
    %1840 = vrot.lane.b32.xlu0 %v1447, 64
    %v1841 = vpop.permute.xlu0 %1840
    %1843 = vrot.lane.b32.xlu0 %v1447, 96
    %v1844 = vpop.permute.xlu0 %1843
    %v1846 = vsel %vm338, %v1447, %v1838
    %v1847 = vsel %vm379, %v1846, %v1841
    %v1848 = vsel %vm381, %v1847, %v1844
    %v1849 = vmul.f32 %v1848, %v261
    %v1850 = vmul.f32 %v1848, %v262
    %1851 = vmatpush.msra.mxu0 %v1394
    %1852 = vmatpush.msra.mxu0 %v1393
    %1853 = vmatpush.msra.mxu0 %v1392
    %1854 = vmatpush.msra.mxu0 %v1391
    %1855 = vmatpush.msra.mxu0 %v1390
    %1856 = vmatpush.msra.mxu0 %v1389
    %1857 = vmatpush.msra.mxu0 %v1388
    %1858 = vmatpush.msra.mxu0 %v1387
    %1859 = vmatpush.msra.mxu0 %v1386
    %1860 = vmatpush.msra.mxu0 %v1385
    %1861 = vmatpush.msra.mxu0 %v1384
    %1862 = vmatpush.msra.mxu0 %v1383
    %1863 = vmatpush.msra.mxu0 %v1382
    %1864 = vmatpush.msra.mxu0 %v1381
    %1865 = vmatpush.msra.mxu0 %v1380
    %1866 = vmatpush.msra.mxu0 %v1379
    %1867 = vmatmul.f32.gmra.mxu0 %v1849
    %v1868 = vpop.f32.mrf.mxu0
    %v1869 = vadd.f32 0.0, %v1868
    %1870 = vdwg.mxu0
    %1871 = vmatpush.msra.mxu0 %v1410
    %1872 = vmatpush.msra.mxu0 %v1409
    %1873 = vmatpush.msra.mxu0 %v1408
    %1874 = vmatpush.msra.mxu0 %v1407
    %1875 = vmatpush.msra.mxu0 %v1406
    %1876 = vmatpush.msra.mxu0 %v1405
    %1877 = vmatpush.msra.mxu0 %v1404
    %1878 = vmatpush.msra.mxu0 %v1403
    %1879 = vmatpush.msra.mxu0 %v1402
    %1880 = vmatpush.msra.mxu0 %v1401
    %1881 = vmatpush.msra.mxu0 %v1400
    %1882 = vmatpush.msra.mxu0 %v1399
    %1883 = vmatpush.msra.mxu0 %v1398
    %1884 = vmatpush.msra.mxu0 %v1397
    %1885 = vmatpush.msra.mxu0 %v1396
    %1886 = vmatpush.msra.mxu0 %v1395
    %1887 = vmatmul.f32.gmra.mxu0 %v1850
    %v1888 = vpop.f32.mrf.mxu0
    %v1889 = vadd.f32 %v1869, %v1888
    %1890 = vdwg.mxu0
    %v1891 = vsel %vm425, %v1447, 0
    %v1893 = vsel %vm425, %v1844, 0
    %1895 = vmatpush.xpose.msra.mxu0 0.0
    %1896 = vmatpush.xpose.msra.mxu0 0.0
    %1897 = vmatpush.xpose.msra.mxu0 0.0
    %1898 = vmatpush.xpose.msra.mxu0 0.0
    %1899 = vmatpush.xpose.msra.mxu0 0.0
    %1900 = vmatpush.xpose.msra.mxu0 0.0
    %1901 = vmatpush.xpose.msra.mxu0 0.0
    %1902 = vmatpush.xpose.msra.mxu0 0.0
    %1903 = vmatpush.xpose.msra.mxu0 0.0
    %1904 = vmatpush.xpose.msra.mxu0 0.0
    %1905 = vmatpush.xpose.msra.mxu0 0.0
    %1906 = vmatpush.xpose.msra.mxu0 0.0
    %1907 = vmatpush.xpose.msra.mxu0 0.0
    %1908 = vmatpush.xpose.msra.mxu0 0.0
    %1909 = vmatpush.xpose.msra.mxu0 0.0
    %1910 = vmatpush.xpose.msra.mxu0 %v1893
    %1911 = vmatmul.f32.gmra.mxu0 %v1891
    %v1912 = vpop.f32.mrf.mxu0
    %v1913 = vadd.f32 %v1889, %v1912
    %1914 = vdwg.mxu0
    %v1915 = vadd.f32 %v1913, %v211
    %v1916 = vsel %vm425, %v1915, -inf
    %1917 = vmax.xlane.f32.xlu0 %v1916
    %v1918 = vpop.xlane.xlu0 %1917
    %v1919 = vsub.f32 %v1915, %v1918
    %v1920 = vmul.f32 %v1919, 1.442695
    %v1921 = vpow.pop %v1920
    %v1922 = vsel %vm425, %v1921, 0.0
    %1923 = vadd.xlane.f32.xlu0 %v1922
    %v1924 = vpop.xlane.xlu0 %1923
    %v1925 = vrcp.pop %v1924
    %v1926 = vmul.f32 %v1924, %v1925
    %v1927 = vsub.f32 1.0, %v1926
    %v1928 = vmul.f32 %v1925, %v1927
    %v1929 = vadd.f32 %v1925, %v1928
    %vm1930 = vweird.f32 %v1924
    %vm1931 = vweird.f32 %v1925
    %vm1932 = vmor %vm1930, %vm1931
    %v1933 = vsel %vm1932, %v1925, %v1929
    %v1934 = vand.u32 2147483647, %v1924
    %vm1935 = vcmp.eq.f32.partialorder %v1934, 8.507059e+37
    %v1936 = vand.u32 %v1924, 2147483648
    %v1937 = vor.u32 1.1754944e-38, %v1936
    %v1938 = vsel %vm1935, %v1937, %v1933
    %v1939 = vmul.f32 %v1921, %v1938
    %v1940 = vmul.f32 %v1447, %v477
    %1941 = vrot.lane.b32.xlu0 %v1447, 120
    %v1942 = vpop.permute.xlu0 %1941
    %1943 = vrot.lane.b32.xlu0 %v1447, 88
    %v1944 = vpop.permute.xlu0 %1943
    %1946 = vrot.lane.b32.xlu0 %v1889, 120
    %v1947 = vpop.permute.xlu0 %1946
    %v1949 = vsel %vm425, %v1942, 0
    %v1951 = vsel %vm425, %v1944, 0
    %1953 = vmatpush.xpose.msra.mxu0 0.0
    %1954 = vmatpush.xpose.msra.mxu0 0.0
    %1955 = vmatpush.xpose.msra.mxu0 0.0
    %1956 = vmatpush.xpose.msra.mxu0 0.0
    %1957 = vmatpush.xpose.msra.mxu0 0.0
    %1958 = vmatpush.xpose.msra.mxu0 0.0
    %1959 = vmatpush.xpose.msra.mxu0 0.0
    %1960 = vmatpush.xpose.msra.mxu0 0.0
    %1961 = vmatpush.xpose.msra.mxu0 0.0
    %1962 = vmatpush.xpose.msra.mxu0 0.0
    %1963 = vmatpush.xpose.msra.mxu0 0.0
    %1964 = vmatpush.xpose.msra.mxu0 0.0
    %1965 = vmatpush.xpose.msra.mxu0 0.0
    %1966 = vmatpush.xpose.msra.mxu0 0.0
    %1967 = vmatpush.xpose.msra.mxu0 0.0
    %1968 = vmatpush.xpose.msra.mxu0 %v1951
    %1969 = vmatmul.f32.gmra.mxu0 %v1949
    %v1970 = vpop.f32.mrf.mxu0
    %v1971 = vadd.f32 %v1947, %v1970
    %1972 = vdwg.mxu0
    %v1973 = vadd.f32 %v1971, %v211
    %v1974 = vsel %vm425, %v1973, -inf
    %1975 = vmax.xlane.f32.xlu0 %v1974
    %v1976 = vpop.xlane.xlu0 %1975
    %v1977 = vsub.f32 %v1973, %v1976
    %v1978 = vmul.f32 %v1977, 1.442695
    %v1979 = vpow.pop %v1978
    %v1980 = vsel %vm425, %v1979, 0.0
    %1981 = vadd.xlane.f32.xlu0 %v1980
    %v1982 = vpop.xlane.xlu0 %1981
    %v1983 = vrcp.pop %v1982
    %v1984 = vmul.f32 %v1982, %v1983
    %v1985 = vsub.f32 1.0, %v1984
    %v1986 = vmul.f32 %v1983, %v1985
    %v1987 = vadd.f32 %v1983, %v1986
    %vm1988 = vweird.f32 %v1982
    %vm1989 = vweird.f32 %v1983
    %vm1990 = vmor %vm1988, %vm1989
    %v1991 = vsel %vm1990, %v1983, %v1987
    %v1992 = vand.u32 2147483647, %v1982
    %vm1993 = vcmp.eq.f32.partialorder %v1992, 8.507059e+37
    %v1994 = vand.u32 %v1982, 2147483648
    %v1995 = vor.u32 1.1754944e-38, %v1994
    %v1996 = vsel %vm1993, %v1995, %v1991
    %v1997 = vmul.f32 %v1979, %v1996
    %v1998 = vmul.f32 %v1447, %v539
    %2000 = vrot.lane.b32.xlu0 %v1998, 64
    %v2001 = vpop.permute.xlu0 %2000
    %v2004 = vsel %vm425, %v1997, 0
    %2006 = vmatpush.msra.mxu0 0.0
    %2007 = vmatpush.msra.mxu0 0.0
    %2008 = vmatpush.msra.mxu0 0.0
    %2009 = vmatpush.msra.mxu0 0.0
    %2010 = vmatpush.msra.mxu0 0.0
    %2011 = vmatpush.msra.mxu0 0.0
    %2012 = vmatpush.msra.mxu0 0.0
    %2013 = vmatpush.msra.mxu0 0.0
    %2014 = vmatpush.msra.mxu0 0.0
    %2015 = vmatpush.msra.mxu0 0.0
    %2016 = vmatpush.msra.mxu0 0.0
    %2017 = vmatpush.msra.mxu0 0.0
    %2018 = vmatpush.msra.mxu0 0.0
    %2019 = vmatpush.msra.mxu0 0.0
    %2020 = vmatpush.msra.mxu0 0.0
    %2021 = vmatpush.msra.mxu0 %v2001
    %2022 = vmatmul.f32.gmra.mxu0 %v2004
    %v2023 = vpop.f32.mrf.mxu0
    %v2024 = vadd.f32 0.0, %v2023
    %2025 = vdwg.mxu0
    %2027 = vrot.lane.b32.xlu0 %v1940, 64
    %v2028 = vpop.permute.xlu0 %2027
    %v2031 = vsel %vm425, %v1939, 0
    %2033 = vmatpush.msra.mxu0 0.0
    %2034 = vmatpush.msra.mxu0 0.0
    %2035 = vmatpush.msra.mxu0 0.0
    %2036 = vmatpush.msra.mxu0 0.0
    %2037 = vmatpush.msra.mxu0 0.0
    %2038 = vmatpush.msra.mxu0 0.0
    %2039 = vmatpush.msra.mxu0 0.0
    %2040 = vmatpush.msra.mxu0 0.0
    %2041 = vmatpush.msra.mxu0 0.0
    %2042 = vmatpush.msra.mxu0 0.0
    %2043 = vmatpush.msra.mxu0 0.0
    %2044 = vmatpush.msra.mxu0 0.0
    %2045 = vmatpush.msra.mxu0 0.0
    %2046 = vmatpush.msra.mxu0 0.0
    %2047 = vmatpush.msra.mxu0 0.0
    %2048 = vmatpush.msra.mxu0 %v2028
    %2049 = vmatmul.f32.gmra.mxu0 %v2031
    %v2050 = vpop.f32.mrf.mxu0
    %v2051 = vadd.f32 %v2024, %v2050
    %2052 = vdwg.mxu0
    %2053 = vrot.lane.b32.xlu0 %v1447, 112
    %v2054 = vpop.permute.xlu0 %2053
    %2055 = vrot.lane.b32.xlu0 %v1447, 80
    %v2056 = vpop.permute.xlu0 %2055
    %2057 = vrot.lane.b32.xlu0 %v1889, 112
    %v2058 = vpop.permute.xlu0 %2057
    %v2060 = vsel %vm425, %v2054, 0
    %v2062 = vsel %vm425, %v2056, 0
    %2064 = vmatpush.xpose.msra.mxu0 0.0
    %2065 = vmatpush.xpose.msra.mxu0 0.0
    %2066 = vmatpush.xpose.msra.mxu0 0.0
    %2067 = vmatpush.xpose.msra.mxu0 0.0
    %2068 = vmatpush.xpose.msra.mxu0 0.0
    %2069 = vmatpush.xpose.msra.mxu0 0.0
    %2070 = vmatpush.xpose.msra.mxu0 0.0
    %2071 = vmatpush.xpose.msra.mxu0 0.0
    %2072 = vmatpush.xpose.msra.mxu0 0.0
    %2073 = vmatpush.xpose.msra.mxu0 0.0
    %2074 = vmatpush.xpose.msra.mxu0 0.0
    %2075 = vmatpush.xpose.msra.mxu0 0.0
    %2076 = vmatpush.xpose.msra.mxu0 0.0
    %2077 = vmatpush.xpose.msra.mxu0 0.0
    %2078 = vmatpush.xpose.msra.mxu0 0.0
    %2079 = vmatpush.xpose.msra.mxu0 %v2062
    %2080 = vmatmul.f32.gmra.mxu0 %v2060
    %v2081 = vpop.f32.mrf.mxu0
    %v2082 = vadd.f32 %v2058, %v2081
    %2083 = vdwg.mxu0
    %v2084 = vadd.f32 %v2082, %v211
    %v2085 = vsel %vm425, %v2084, -inf
    %2086 = vmax.xlane.f32.xlu0 %v2085
    %v2087 = vpop.xlane.xlu0 %2086
    %v2088 = vsub.f32 %v2084, %v2087
    %v2089 = vmul.f32 %v2088, 1.442695
    %v2090 = vpow.pop %v2089
    %v2091 = vsel %vm425, %v2090, 0.0
    %2092 = vadd.xlane.f32.xlu0 %v2091
    %v2093 = vpop.xlane.xlu0 %2092
    %v2094 = vrcp.pop %v2093
    %v2095 = vmul.f32 %v2093, %v2094
    %v2096 = vsub.f32 1.0, %v2095
    %v2097 = vmul.f32 %v2094, %v2096
    %v2098 = vadd.f32 %v2094, %v2097
    %vm2099 = vweird.f32 %v2093
    %vm2100 = vweird.f32 %v2094
    %vm2101 = vmor %vm2099, %vm2100
    %v2102 = vsel %vm2101, %v2094, %v2098
    %v2103 = vand.u32 2147483647, %v2093
    %vm2104 = vcmp.eq.f32.partialorder %v2103, 8.507059e+37
    %v2105 = vand.u32 %v2093, 2147483648
    %v2106 = vor.u32 1.1754944e-38, %v2105
    %v2107 = vsel %vm2104, %v2106, %v2102
    %v2108 = vmul.f32 %v2090, %v2107
    %v2109 = vmul.f32 %v1447, %v654
    %2111 = vrot.lane.b32.xlu0 %v2109, 64
    %v2112 = vpop.permute.xlu0 %2111
    %v2115 = vsel %vm425, %v2108, 0
    %2117 = vmatpush.msra.mxu0 0.0
    %2118 = vmatpush.msra.mxu0 0.0
    %2119 = vmatpush.msra.mxu0 0.0
    %2120 = vmatpush.msra.mxu0 0.0
    %2121 = vmatpush.msra.mxu0 0.0
    %2122 = vmatpush.msra.mxu0 0.0
    %2123 = vmatpush.msra.mxu0 0.0
    %2124 = vmatpush.msra.mxu0 0.0
    %2125 = vmatpush.msra.mxu0 0.0
    %2126 = vmatpush.msra.mxu0 0.0
    %2127 = vmatpush.msra.mxu0 0.0
    %2128 = vmatpush.msra.mxu0 0.0
    %2129 = vmatpush.msra.mxu0 0.0
    %2130 = vmatpush.msra.mxu0 0.0
    %2131 = vmatpush.msra.mxu0 0.0
    %2132 = vmatpush.msra.mxu0 %v2112
    %2133 = vmatmul.f32.gmra.mxu0 %v2115
    %v2134 = vpop.f32.mrf.mxu0
    %v2135 = vadd.f32 0.0, %v2134
    %2136 = vdwg.mxu0
    %v2137 = vadd.f32 %v2051, %v2135
    %2138 = vrot.lane.b32.xlu0 %v1447, 104
    %v2139 = vpop.permute.xlu0 %2138
    %2140 = vrot.lane.b32.xlu0 %v1447, 72
    %v2141 = vpop.permute.xlu0 %2140
    %2142 = vrot.lane.b32.xlu0 %v1889, 104
    %v2143 = vpop.permute.xlu0 %2142
    %v2145 = vsel %vm425, %v2139, 0
    %v2147 = vsel %vm425, %v2141, 0
    %2149 = vmatpush.xpose.msra.mxu0 0.0
    %2150 = vmatpush.xpose.msra.mxu0 0.0
    %2151 = vmatpush.xpose.msra.mxu0 0.0
    %2152 = vmatpush.xpose.msra.mxu0 0.0
    %2153 = vmatpush.xpose.msra.mxu0 0.0
    %2154 = vmatpush.xpose.msra.mxu0 0.0
    %2155 = vmatpush.xpose.msra.mxu0 0.0
    %2156 = vmatpush.xpose.msra.mxu0 0.0
    %2157 = vmatpush.xpose.msra.mxu0 0.0
    %2158 = vmatpush.xpose.msra.mxu0 0.0
    %2159 = vmatpush.xpose.msra.mxu0 0.0
    %2160 = vmatpush.xpose.msra.mxu0 0.0
    %2161 = vmatpush.xpose.msra.mxu0 0.0
    %2162 = vmatpush.xpose.msra.mxu0 0.0
    %2163 = vmatpush.xpose.msra.mxu0 0.0
    %2164 = vmatpush.xpose.msra.mxu0 %v2147
    %2165 = vmatmul.f32.gmra.mxu0 %v2145
    %v2166 = vpop.f32.mrf.mxu0
    %v2167 = vadd.f32 %v2143, %v2166
    %2168 = vdwg.mxu0
    %v2169 = vadd.f32 %v2167, %v211
    %v2170 = vsel %vm425, %v2169, -inf
    %2171 = vmax.xlane.f32.xlu0 %v2170
    %v2172 = vpop.xlane.xlu0 %2171
    %v2173 = vsub.f32 %v2169, %v2172
    %v2174 = vmul.f32 %v2173, 1.442695
    %v2175 = vpow.pop %v2174
    %v2176 = vsel %vm425, %v2175, 0.0
    %2177 = vadd.xlane.f32.xlu0 %v2176
    %v2178 = vpop.xlane.xlu0 %2177
    %v2179 = vrcp.pop %v2178
    %v2180 = vmul.f32 %v2178, %v2179
    %v2181 = vsub.f32 1.0, %v2180
    %v2182 = vmul.f32 %v2179, %v2181
    %v2183 = vadd.f32 %v2179, %v2182
    %vm2184 = vweird.f32 %v2178
    %vm2185 = vweird.f32 %v2179
    %vm2186 = vmor %vm2184, %vm2185
    %v2187 = vsel %vm2186, %v2179, %v2183
    %v2188 = vand.u32 2147483647, %v2178
    %vm2189 = vcmp.eq.f32.partialorder %v2188, 8.507059e+37
    %v2190 = vand.u32 %v2178, 2147483648
    %v2191 = vor.u32 1.1754944e-38, %v2190
    %v2192 = vsel %vm2189, %v2191, %v2187
    %v2193 = vmul.f32 %v2175, %v2192
    %v2194 = vmul.f32 %v1447, %v743
    %2196 = vrot.lane.b32.xlu0 %v2194, 64
    %v2197 = vpop.permute.xlu0 %2196
    %v2200 = vsel %vm425, %v2193, 0
    %2202 = vmatpush.msra.mxu0 0.0
    %2203 = vmatpush.msra.mxu0 0.0
    %2204 = vmatpush.msra.mxu0 0.0
    %2205 = vmatpush.msra.mxu0 0.0
    %2206 = vmatpush.msra.mxu0 0.0
    %2207 = vmatpush.msra.mxu0 0.0
    %2208 = vmatpush.msra.mxu0 0.0
    %2209 = vmatpush.msra.mxu0 0.0
    %2210 = vmatpush.msra.mxu0 0.0
    %2211 = vmatpush.msra.mxu0 0.0
    %2212 = vmatpush.msra.mxu0 0.0
    %2213 = vmatpush.msra.mxu0 0.0
    %2214 = vmatpush.msra.mxu0 0.0
    %2215 = vmatpush.msra.mxu0 0.0
    %2216 = vmatpush.msra.mxu0 0.0
    %2217 = vmatpush.msra.mxu0 %v2197
    %2218 = vmatmul.f32.gmra.mxu0 %v2200
    %v2219 = vpop.f32.mrf.mxu0
    %v2220 = vadd.f32 0.0, %v2219
    %2221 = vdwg.mxu0
    %v2222 = vadd.f32 %v2137, %v2220
    %v2223 = vperm.slane %v1412, 0
    %v2225 = vsel %vm338, %v1835, 0
    %v2228 = vsel %vm338, %v2222, 0
    %2230 = vmatpush.msra.mxu0 0.0
    %2231 = vmatpush.msra.mxu0 0.0
    %2232 = vmatpush.msra.mxu0 0.0
    %2233 = vmatpush.msra.mxu0 0.0
    %2234 = vmatpush.msra.mxu0 0.0
    %2235 = vmatpush.msra.mxu0 0.0
    %2236 = vmatpush.msra.mxu0 0.0
    %2237 = vmatpush.msra.mxu0 0.0
    %2238 = vmatpush.msra.mxu0 0.0
    %2239 = vmatpush.msra.mxu0 0.0
    %2240 = vmatpush.msra.mxu0 0.0
    %2241 = vmatpush.msra.mxu0 0.0
    %2242 = vmatpush.msra.mxu0 %v1372
    %2243 = vmatpush.msra.mxu0 %v1371
    %2244 = vmatpush.msra.mxu0 %v1370
    %2245 = vmatpush.msra.mxu0 %v1369
    %2246 = vmatmul.f32.gmra.mxu0 %v2225
    %v2247 = vpop.f32.mrf.mxu0
    %v2248 = vadd.f32 %v2223, %v2247
    %2249 = vmatmul.f32.gmra.mxu0 %v2228
    %v2250 = vpop.f32.mrf.mxu0
    %v2251 = vadd.f32 %v2223, %v2250
    %2252 = vdwg.mxu0
    %v2253 = vadd.f32 %v2248, %v1363
    %v2254 = vadd.f32 %v2251, %v1364
    %v2255 = vsel %vm338, %v2253, 0.0
    %2256 = vadd.xlane.f32.xlu0 %v2255
    %v2257 = vpop.xlane.xlu0 %2256
    %v2258 = vsel %vm338, %v2254, 0.0
    %2259 = vadd.xlane.f32.xlu0 %v2258
    %v2260 = vpop.xlane.xlu0 %2259
    %v2261 = vmul.f32 %v2257, %v1205
    %v2262 = vmul.f32 %v2260, %v1205
    %v2263 = vsub.f32 %v2253, %v2261
    %v2264 = vsub.f32 %v2254, %v2262
    %v2265 = vmul.f32 %v2263, %v2263
    %v2266 = vmul.f32 %v2264, %v2264
    %v2267 = vsel %vm338, %v2265, 0.0
    %2268 = vadd.xlane.f32.xlu0 %v2267
    %v2269 = vpop.xlane.xlu0 %2268
    %v2270 = vsel %vm338, %v2266, 0.0
    %2271 = vadd.xlane.f32.xlu0 %v2270
    %v2272 = vpop.xlane.xlu0 %2271
    %v2273 = vmul.f32 %v2269, %v1205
    %v2274 = vmul.f32 %v2272, %v1205
    %v2275 = vadd.f32 %v2273, 1e-06
    %v2276 = vadd.f32 %v2274, 1e-06
    %v2277 = vrsqrt.pop %v2275
    %v2278 = vmul.f32 %v2277, %v2275
    %v2279 = vmul.f32 %v2278, %v2277
    %v2280 = vmul.f32 0.5, %v2279
    %v2281 = vsub.f32 1.5, %v2280
    %v2282 = vmul.f32 %v2277, %v2281
    %vm2283 = vweird.f32 %v2275
    %vm2284 = vweird.f32 %v2277
    %vm2285 = vmor %vm2283, %vm2284
    %v2286 = vsel %vm2285, %v2277, %v2282
    %v2287 = vrsqrt.pop %v2276
    %v2288 = vmul.f32 %v2287, %v2276
    %v2289 = vmul.f32 %v2288, %v2287
    %v2290 = vmul.f32 0.5, %v2289
    %v2291 = vsub.f32 1.5, %v2290
    %v2292 = vmul.f32 %v2287, %v2291
    %vm2293 = vweird.f32 %v2276
    %vm2294 = vweird.f32 %v2287
    %vm2295 = vmor %vm2293, %vm2294
    %v2296 = vsel %vm2295, %v2287, %v2292
    %v2297 = vmul.f32 %v2263, %v2286
    %v2298 = vmul.f32 %v2264, %v2296
    %v2299 = vperm.slane %v1413, 0
    %v2300 = vmul.f32 %v2297, %v2299
    %v2301 = vmul.f32 %v2298, %v2299
    %v2302 = vperm.slane %v1414, 0
    %v2303 = vadd.f32 %v2300, %v2302
    %v2304 = vadd.f32 %v2301, %v2302
    %v2305 = vperm.slane %v1415, 0
    %v2307 = vsel %vm338, %v2303, 0
    %v2310 = vsel %vm338, %v2304, 0
    %2312 = vmatpush.msra.mxu0 0.0
    %2313 = vmatpush.msra.mxu0 0.0
    %2314 = vmatpush.msra.mxu0 0.0
    %2315 = vmatpush.msra.mxu0 0.0
    %2316 = vmatpush.msra.mxu0 0.0
    %2317 = vmatpush.msra.mxu0 0.0
    %2318 = vmatpush.msra.mxu0 0.0
    %2319 = vmatpush.msra.mxu0 0.0
    %2320 = vmatpush.msra.mxu0 0.0
    %2321 = vmatpush.msra.mxu0 0.0
    %2322 = vmatpush.msra.mxu0 0.0
    %2323 = vmatpush.msra.mxu0 0.0
    %2324 = vmatpush.msra.mxu0 %v1376
    %2325 = vmatpush.msra.mxu0 %v1375
    %2326 = vmatpush.msra.mxu0 %v1374
    %2327 = vmatpush.msra.mxu0 %v1373
    %2328 = vmatmul.f32.gmra.mxu0 %v2307
    %v2329 = vpop.f32.mrf.mxu0
    %v2330 = vadd.f32 %v2305, %v2329
    %2331 = vmatmul.f32.gmra.mxu0 %v2310
    %v2332 = vpop.f32.mrf.mxu0
    %v2333 = vadd.f32 %v2305, %v2332
    %2334 = vdwg.mxu0
    %v2335 = vmax.f32 %v2330, 0.0
    %v2336 = vmax.f32 %v2333, 0.0
    %v2337 = vperm.slane %v1416, 0
    %v2339 = vsel %vm1283, %v2335, 0
    %v2342 = vsel %vm1283, %v2336, 0
    %2344 = vmatpush.msra.mxu0 0.0
    %2345 = vmatpush.msra.mxu0 0.0
    %2346 = vmatpush.msra.mxu0 0.0
    %2347 = vmatpush.msra.mxu0 0.0
    %2348 = vmatpush.msra.mxu0 0.0
    %2349 = vmatpush.msra.mxu0 0.0
    %2350 = vmatpush.msra.mxu0 0.0
    %2351 = vmatpush.msra.mxu0 0.0
    %2352 = vmatpush.msra.mxu0 0.0
    %2353 = vmatpush.msra.mxu0 0.0
    %2354 = vmatpush.msra.mxu0 0.0
    %2355 = vmatpush.msra.mxu0 0.0
    %2356 = vmatpush.msra.mxu0 0.0
    %2357 = vmatpush.msra.mxu0 0.0
    %2358 = vmatpush.msra.mxu0 %v1378
    %2359 = vmatpush.msra.mxu0 %v1377
    %2360 = vmatmul.f32.gmra.mxu0 %v2339
    %v2361 = vpop.f32.mrf.mxu0
    %v2362 = vadd.f32 %v2337, %v2361
    %2363 = vmatmul.f32.gmra.mxu0 %v2342
    %v2364 = vpop.f32.mrf.mxu0
    %v2365 = vadd.f32 %v2337, %v2364
    %2366 = vdwg.mxu0
    %v2367 = vadd.f32 %v2303, %v2362
    %v2368 = vadd.f32 %v2304, %v2365
    %v2369 = vsel %vm338, %v2367, 0.0
    %2370 = vadd.xlane.f32.xlu0 %v2369
    %v2371 = vpop.xlane.xlu0 %2370
    %v2372 = vsel %vm338, %v2368, 0.0
    %2373 = vadd.xlane.f32.xlu0 %v2372
    %v2374 = vpop.xlane.xlu0 %2373
    %v2375 = vmul.f32 %v2371, %v1205
    %v2376 = vmul.f32 %v2374, %v1205
    %v2377 = vsub.f32 %v2367, %v2375
    %v2378 = vsub.f32 %v2368, %v2376
    %v2379 = vmul.f32 %v2377, %v2377
    %v2380 = vmul.f32 %v2378, %v2378
    %v2381 = vsel %vm338, %v2379, 0.0
    %2382 = vadd.xlane.f32.xlu0 %v2381
    %v2383 = vpop.xlane.xlu0 %2382
    %v2384 = vsel %vm338, %v2380, 0.0
    %2385 = vadd.xlane.f32.xlu0 %v2384
    %v2386 = vpop.xlane.xlu0 %2385
    %v2387 = vmul.f32 %v2383, %v1205
    %v2388 = vmul.f32 %v2386, %v1205
    %v2389 = vadd.f32 %v2387, 1e-06
    %v2390 = vadd.f32 %v2388, 1e-06
    %v2391 = vrsqrt.pop %v2389
    %v2392 = vmul.f32 %v2391, %v2389
    %v2393 = vmul.f32 %v2392, %v2391
    %v2394 = vmul.f32 0.5, %v2393
    %v2395 = vsub.f32 1.5, %v2394
    %v2396 = vmul.f32 %v2391, %v2395
    %vm2397 = vweird.f32 %v2389
    %vm2398 = vweird.f32 %v2391
    %vm2399 = vmor %vm2397, %vm2398
    %v2400 = vsel %vm2399, %v2391, %v2396
    %v2401 = vrsqrt.pop %v2390
    %v2402 = vmul.f32 %v2401, %v2390
    %v2403 = vmul.f32 %v2402, %v2401
    %v2404 = vmul.f32 0.5, %v2403
    %v2405 = vsub.f32 1.5, %v2404
    %v2406 = vmul.f32 %v2401, %v2405
    %vm2407 = vweird.f32 %v2390
    %vm2408 = vweird.f32 %v2401
    %vm2409 = vmor %vm2407, %vm2408
    %v2410 = vsel %vm2409, %v2401, %v2406
    %v2411 = vmul.f32 %v2377, %v2400
    %v2412 = vmul.f32 %v2378, %v2410
    %v2413 = vperm.slane %v1417, 0
    %v2414 = vmul.f32 %v2411, %v2413
    %v2415 = vmul.f32 %v2412, %v2413
    %v2416 = vperm.slane %v1418, 0
    %v2417 = vadd.f32 %v2414, %v2416
    %v2418 = vadd.f32 %v2415, %v2416
    %v2419 = vld [vmem:[#allocation4 + $0x308] sm:$0xff]
    %v2420 = vld [vmem:[#allocation4 + $0x310] sm:$0xff]
    %v2421 = vld [vmem:[#allocation4 + $0x318] sm:$0xff]
    %v2422 = vld [vmem:[#allocation4 + $0x320] sm:$0xff]
    %v2423 = vld [vmem:[#allocation4 + $0x348] sm:$0x1]
    %v2424 = vperm.slane %v2423, 0
    %v2426 = vsel %vm338, %v2417, 0
    %v2429 = vsel %vm338, %v2418, 0
    %2431 = vmatpush.msra.mxu0 0.0
    %2432 = vmatpush.msra.mxu0 0.0
    %2433 = vmatpush.msra.mxu0 0.0
    %2434 = vmatpush.msra.mxu0 0.0
    %2435 = vmatpush.msra.mxu0 0.0
    %2436 = vmatpush.msra.mxu0 0.0
    %2437 = vmatpush.msra.mxu0 0.0
    %2438 = vmatpush.msra.mxu0 0.0
    %2439 = vmatpush.msra.mxu0 0.0
    %2440 = vmatpush.msra.mxu0 0.0
    %2441 = vmatpush.msra.mxu0 0.0
    %2442 = vmatpush.msra.mxu0 0.0
    %2443 = vmatpush.msra.mxu0 %v2422
    %2444 = vmatpush.msra.mxu0 %v2421
    %2445 = vmatpush.msra.mxu0 %v2420
    %2446 = vmatpush.msra.mxu0 %v2419
    %2447 = vmatmul.f32.gmra.mxu0 %v2426
    %v2448 = vpop.f32.mrf.mxu0
    %v2449 = vadd.f32 %v2424, %v2448
    %2450 = vmatmul.f32.gmra.mxu0 %v2429
    %v2451 = vpop.f32.mrf.mxu0
    %v2452 = vadd.f32 %v2424, %v2451
    %2453 = vdwg.mxu0
    %2454 = vst [vmem:[%s2] sm:$0xff] %v2449
    %2455 = vst [vmem:[%s2 + $0x8] sm:$0xff] %v2452
    // Predicated region
    $region10: #{music_transformer_forward.1} parent=1 // pred_check
      _
    $region11: #{music_transformer_forward.1} parent=1 // pred_check_branch
      %2457 = sbr.rel (0) target = $region13
    $region12: #{music_transformer_forward.1} parent=1 // pred_region
      _
    $region13: #{music_transformer_forward.1} parent=1 // pred_fallthru
      _
    // Predicated region
    $region14: #{music_transformer_forward.1} parent=1 // pred_check
      _
    $region15: #{music_transformer_forward.1} parent=1 // pred_check_branch
      %2459 = sbr.rel (0) target = $region17
    $region16: #{music_transformer_forward.1} parent=1 // pred_region
      _
    $region17: #{music_transformer_forward.1} parent=1 // pred_fallthru
      _
    %2460 = vsyncpa [#allocation5], 1

</llo_original>
